<compile_context>
chip_gen: v5e
topology: v5e:2x2
jax: 0.10.0
libtpu: 0.0.40
codegen_flags: <defaults>
</compile_context>

<pallas_src>
import jax
import jax.numpy as jnp
from jax.experimental import pallas as pl
from jax.experimental.pallas import tpu as pltpu


def _round_up(x, m):
    return (x + m - 1) // m * m


def _make_down_block_kernel(H, W, Cin, C2, C1p, C2p):
    """Fused (conv3x3 pad=1 -> ReLU) x2 for ONE image (one grid step)."""
    Hp = H + 2
    use_im2col_conv1 = Cin <= 32          # fold the 9 taps into K for shallow inputs
    # conv2 register-accumulator row chunk: keep the f32 accumulator ~<= 64 KiB.
    rows_budget = max(1, 16384 // C2p)
    RC = max(1, min(H, rows_budget // max(W, 1)))

    def kernel(x_ref, w1_ref, b1_ref, w2_ref, b2_ref, o_ref, hsh_ref):
        cdt = hsh_ref.dtype

        # ---------------- conv1: 3x3 pad=1, bias, ReLU -------------------------
        if use_im2col_conv1:
            # im2col: the 9 taps are gathered along the channel (lane) dim once;
            # each piece is only Cin lanes wide so the shifted reads are cheap,
            # and conv1 becomes ONE (H*W, 9*Cin) @ (9*Cin, C1p) MXU matmul.
            pieces = [x_ref[0, dy:dy + H, dx:dx + W, :]
                      for dy in range(3) for dx in range(3)]
            cols = jnp.concatenate(pieces, axis=-1)               # (H, W, 9*Cin)
            acc1 = jnp.dot(cols.reshape(H * W, 9 * Cin), w1_ref[...],
                           preferred_element_type=jnp.float32)
        else:
            # Deep Cin: K = Cin already fills the MXU depth; per-tap matmuls with
            # register accumulation (written once, no VMEM RMW).
            acc1 = None
            for dy in range(3):
                for dx in range(3):
                    tap = dy * 3 + dx
                    patch = x_ref[0, dy:dy + H, dx:dx + W, :].reshape(H * W, Cin)
                    c = jnp.dot(patch, w1_ref[tap * Cin:(tap + 1) * Cin, :],
                                preferred_element_type=jnp.float32)
                    acc1 = c if acc1 is None else acc1 + c
        c1 = jnp.maximum(acc1 + b1_ref[...], 0.0)                 # f32 epilogue
        c1 = c1.reshape(H, W, C1p).astype(cdt)

        # ------ stage conv1 output as 3 column-shifted, zero-bordered copies ----
        # hsh[dx][r, j] == conv1_padded[r-1, j+dx-1], so every conv2 tap (dy,dx)
        # is the outer-dim slice hsh[dx][dy:dy+H] -> no sublane-offset relayouts
        # in the conv2 inner loop.  Only the edge rows/columns are zeroed (the
        # whole used region is rewritten every step, so this is megacore-safe).
        zrow = jnp.zeros((1, W, C1p), cdt)
        zcol = jnp.zeros((H, 1, C1p), cdt)
        for dx in range(3):
            hsh_ref[dx, 0:1] = zrow                    # conv2 top zero padding
            hsh_ref[dx, Hp - 1:Hp] = zrow              # conv2 bottom zero padding
        hsh_ref[1, 1:H + 1] = c1                                   # aligned copy
        hsh_ref[0, 1:H + 1, 1:W] = c1[:, 0:W - 1, :]               # shifted right
        hsh_ref[0, 1:H + 1, 0:1] = zcol
        hsh_ref[2, 1:H + 1, 0:W - 1] = c1[:, 1:W, :]               # shifted left
        hsh_ref[2, 1:H + 1, W - 1:W] = zcol

        # ---------------- conv2: 3x3 pad=1, bias, ReLU --------------------------
        # Row-chunked so the register-held accumulator stays small (review: keep
        # accumulation out of VMEM RMW; chunk rows if vreg pressure grows).
        for r0 in range(0, H, RC):
            rc = min(RC, H - r0)
            acc2 = None
            for dy in range(3):
                for dx in range(3):
                    patch = hsh_ref[dx, r0 + dy:r0 + dy + rc].reshape(rc * W, C1p)
                    c = jnp.dot(patch, w2_ref[dy * 3 + dx],
                                preferred_element_type=jnp.float32)
                    acc2 = c if acc2 is None else acc2 + c
            out = jnp.maximum(acc2 + b2_ref[...], 0.0)             # f32 epilogue
            out = out.reshape(rc, W, C2p)
            o_ref[0, r0:r0 + rc] = out[..., :C2].astype(o_ref.dtype)

    return kernel


def init_down_block_params(key, in_channels, out_channels):
    """Deterministic init mimicking nn.Conv2d default (uniform +-1/sqrt(fan_in))."""
    k1, k2, k3, k4 = jax.random.split(key, 4)
    lim1 = 1.0 / jnp.sqrt(in_channels * 9)
    lim2 = 1.0 / jnp.sqrt(out_channels * 9)
    # Weights stored as (kh, kw, Cin, Cout) for the NHWC kernel.
    w1 = jax.random.uniform(k1, (3, 3, in_channels, out_channels),
                            jnp.float32, -lim1, lim1)
    b1 = jax.random.uniform(k2, (out_channels,), jnp.float32, -lim1, lim1)
    w2 = jax.random.uniform(k3, (3, 3, out_channels, out_channels),
                            jnp.float32, -lim2, lim2)
    b2 = jax.random.uniform(k4, (out_channels,), jnp.float32, -lim2, lim2)
    return dict(w1=w1, b1=b1, w2=w2, b2=b2)


def down_block_forward(params, x_nchw, *, compute_dtype=jnp.bfloat16):
    """Matches DownBlock.forward: x (N, Cin, H, W) -> (N, Cout, H, W).

    compute_dtype is used for the MXU operands (activations, weights and the
    conv1 intermediate); accumulation and the bias+ReLU epilogues stay f32.
    Pass jnp.float32 for PyTorch-exact numerics.
    """
    w1, b1, w2, b2 = params["w1"], params["b1"], params["w2"], params["b2"]
    N, Cin, H, W = x_nchw.shape
    C1 = w1.shape[-1]
    C2 = w2.shape[-1]
    assert W >= 2, "kernel assumes spatial width >= 2"

    LANE = 128
    C1p = _round_up(C1, LANE)   # lane-dense intermediate channels
    C2p = _round_up(C2, LANE)   # matmul N dim only (output itself is NOT padded)
    Hp, Wx = H + 2, W + 2

    cdt = jnp.dtype(compute_dtype)
    out_dt = x_nchw.dtype

    # Whole-image-per-grid-step VMEM budget (review: re-derive per chip; v7x has
    # only 64 MiB physical VMEM -> keep the working set well under ~48 MiB).
    est = (2 * Hp * Wx * Cin * cdt.itemsize                       # x block (x2 buf)
           + 2 * H * W * C2 * jnp.dtype(out_dt).itemsize          # out block (x2)
           + 2 * (9 * Cin * C1p + 9 * C1p * C2p) * cdt.itemsize   # weights (x2)
           + 2 * (C1p + C2p) * 4                                  # biases (x2)
           + 3 * Hp * W * C1p * cdt.itemsize)                     # staging scratch
    assert est <= 40 * 1024 * 1024, (
        f"per-image working set ~{est / 2**20:.1f} MiB exceeds the VMEM budget")
    # TODO(synk): add row tiling (overlapping-window BlockSpec) for images whose
    # per-image working set does not fit the assert above.

    # ---- one-time host-side parameter packing --------------------------------
    # conv1 weights folded for im2col: (9*Cin, C1p), tap-major / channel-minor.
    w1p = jnp.zeros((3, 3, Cin, C1p), compute_dtype)
    w1p = w1p.at[..., :C1].set(w1.astype(compute_dtype))
    w1r = w1p.reshape(9 * Cin, C1p)
    b1p = jnp.zeros((1, C1p), jnp.float32).at[0, :C1].set(b1.astype(jnp.float32))

    w2p = jnp.zeros((3, 3, C1p, C2p), compute_dtype)
    w2p = w2p.at[:, :, :C1, :C2].set(w2.astype(compute_dtype))
    w2r = w2p.reshape(9, C1p, C2p)
    b2p = jnp.zeros((1, C2p), jnp.float32).at[0, :C2].set(b2.astype(jnp.float32))

    # ---- activations: NCHW -> NHWC, 1-pixel zero border (conv1 SAME padding) --
    # TODO(synk): fold this pad into the kernel with predicated edge handling to
    # save one extra HBM pass over x.
    x_nhwc = jnp.transpose(x_nchw, (0, 2, 3, 1)).astype(compute_dtype)
    xp = jnp.pad(x_nhwc, ((0, 0), (1, 1), (1, 1), (0, 0)))

    kernel = _make_down_block_kernel(H, W, Cin, C2, C1p, C2p)

    out = pl.pallas_call(
        kernel,
        out_shape=jax.ShapeDtypeStruct((N, H, W, C2), out_dt),
        grid_spec=pltpu.PrefetchScalarGridSpec(
            num_scalar_prefetch=0,
            grid=(N,),
            in_specs=[
                pl.BlockSpec((1, Hp, Wx, Cin), lambda n: (n, 0, 0, 0)),
                # TODO(synk): pipeline_mode=pl.Buffered(1) on these grid-invariant
                # weight/bias specs would avoid double-buffering the constants.
                pl.BlockSpec((9 * Cin, C1p), lambda n: (0, 0)),
                pl.BlockSpec((1, C1p), lambda n: (0, 0)),
                pl.BlockSpec((9, C1p, C2p), lambda n: (0, 0, 0)),
                pl.BlockSpec((1, C2p), lambda n: (0, 0)),
            ],
            out_specs=pl.BlockSpec((1, H, W, C2), lambda n: (n, 0, 0, 0)),
            scratch_shapes=[
                # 3 column-shifted copies of the conv1 output (+ zero borders).
                pltpu.VMEM((3, Hp, W, C1p), compute_dtype),
            ],
        ),
        compiler_params=pltpu.CompilerParams(
            dimension_semantics=("parallel",),     # batch across cores (megacore)
            vmem_limit_bytes=48 * 1024 * 1024,     # headroom under v7x's 64 MiB
        ),
    )(xp, w1r, b1p, w2r, b2p)

    # Module contract is NCHW; in a full NHWC pipeline this transpose disappears.
    return jnp.transpose(out, (0, 3, 1, 2))


def _reference_down_block(params, x_nchw):
    """Pure-JAX reference matching the PyTorch DownBlock semantics."""
    w1 = jnp.transpose(params["w1"], (3, 2, 0, 1))   # (kh,kw,Cin,Cout) -> OIHW
    w2 = jnp.transpose(params["w2"], (3, 2, 0, 1))
    dn = ("NCHW", "OIHW", "NCHW")
    y = jax.lax.conv_general_dilated(x_nchw, w1, (1, 1), "SAME",
                                     dimension_numbers=dn,
                                     precision=jax.lax.Precision.HIGHEST)
    y = jnp.maximum(y + params["b1"][None, :, None, None], 0.0)
    y = jax.lax.conv_general_dilated(y, w2, (1, 1), "SAME",
                                     dimension_numbers=dn,
                                     precision=jax.lax.Precision.HIGHEST)
    y = jnp.maximum(y + params["b2"][None, :, None, None], 0.0)
    return y


if __name__ == "__main__":
    key = jax.random.PRNGKey(0)
    k_x, k_p = jax.random.split(key)

    N, Cin, Cout, H, W = 2, 4, 8, 16, 16
    x = jax.random.normal(k_x, (N, Cin, H, W), jnp.float32)   # NCHW like PyTorch
    params = init_down_block_params(k_p, Cin, Cout)

    ref = jax.block_until_ready(_reference_down_block(params, x))

    # f32-compute path: matches the f32 reference tightly (PyTorch-like numerics).
    out_f32 = jax.block_until_ready(
        down_block_forward(params, x, compute_dtype=jnp.float32))
    assert out_f32.shape == (N, Cout, H, W)
    assert bool(jnp.all(out_f32 >= 0.0))          # ReLU output is non-negative
    err_f32 = float(jnp.max(jnp.abs(out_f32 - ref)))
    assert err_f32 < 1e-3, f"f32 mismatch vs reference: {err_f32}"

    # Default bf16-compute path (f32 accumulation): mixed precision -> loose tol.
    out_bf16 = jax.block_until_ready(down_block_forward(params, x))
    assert out_bf16.shape == (N, Cout, H, W)
    err_bf16 = float(jnp.max(jnp.abs(out_bf16 - ref)))
    assert err_bf16 < 1e-1, f"bf16 mismatch vs reference: {err_bf16}"

    print("KERNEL_OK")
</pallas_src>

<mosaic_0001>
module attributes {stable_mosaic.version = 11 : i64} {
  func.func @kernel(%arg0: i32, %arg1: memref<1x18x18x4xf32, #tpu.memory_space<vmem>>, %arg2: memref<36x128xf32, #tpu.memory_space<vmem>>, %arg3: memref<1x128xf32, #tpu.memory_space<vmem>>, %arg4: memref<9x128x128xf32, #tpu.memory_space<vmem>>, %arg5: memref<1x128xf32, #tpu.memory_space<vmem>>, %arg6: memref<1x16x16x8xf32, #tpu.memory_space<vmem>>, %arg7: memref<3x18x16x128xf32, #tpu.memory_space<vmem>>) attributes {dimension_semantics = [#tpu.dimension_semantics<parallel>], iteration_bounds = array<i64: 2>, scalar_prefetch = 0 : i64, scratch_operands = 1 : i64, tpu.core_type = #tpu.core_type<tc>, window_params = [{transform_indices = @transform_0, window_bounds = array<i64: 1, 18, 18, 4>}, {pipeline_mode = #tpu.pipeline_mode<synchronous>, transform_indices = @transform_1, window_bounds = array<i64: 36, 128>}, {pipeline_mode = #tpu.pipeline_mode<synchronous>, transform_indices = @transform_2, window_bounds = array<i64: 1, 128>}, {pipeline_mode = #tpu.pipeline_mode<synchronous>, transform_indices = @transform_3, window_bounds = array<i64: 9, 128, 128>}, {pipeline_mode = #tpu.pipeline_mode<synchronous>, transform_indices = @transform_4, window_bounds = array<i64: 1, 128>}, {transform_indices = @transform_5, window_bounds = array<i64: 1, 16, 16, 8>}]} {
    %c0 = arith.constant 0 : index
    %c0_0 = arith.constant 0 : index
    %c0_1 = arith.constant 0 : index
    %c0_2 = arith.constant 0 : index
    %0 = vector.load %arg1[%c0, %c0_0, %c0_1, %c0_2] : memref<1x18x18x4xf32, #tpu.memory_space<vmem>>, vector<1x16x16x4xf32>
    %1 = vector.shape_cast %0 : vector<1x16x16x4xf32> to vector<16x16x4xf32>
    %c0_3 = arith.constant 0 : index
    %c0_4 = arith.constant 0 : index
    %c1 = arith.constant 1 : index
    %c0_5 = arith.constant 0 : index
    %2 = vector.load %arg1[%c0_3, %c0_4, %c1, %c0_5] : memref<1x18x18x4xf32, #tpu.memory_space<vmem>>, vector<1x16x16x4xf32>
    %3 = vector.shape_cast %2 : vector<1x16x16x4xf32> to vector<16x16x4xf32>
    %c0_6 = arith.constant 0 : index
    %c0_7 = arith.constant 0 : index
    %c2 = arith.constant 2 : index
    %c0_8 = arith.constant 0 : index
    %4 = vector.load %arg1[%c0_6, %c0_7, %c2, %c0_8] : memref<1x18x18x4xf32, #tpu.memory_space<vmem>>, vector<1x16x16x4xf32>
    %5 = vector.shape_cast %4 : vector<1x16x16x4xf32> to vector<16x16x4xf32>
    %c0_9 = arith.constant 0 : index
    %c1_10 = arith.constant 1 : index
    %c0_11 = arith.constant 0 : index
    %c0_12 = arith.constant 0 : index
    %6 = vector.load %arg1[%c0_9, %c1_10, %c0_11, %c0_12] : memref<1x18x18x4xf32, #tpu.memory_space<vmem>>, vector<1x16x16x4xf32>
    %7 = vector.shape_cast %6 : vector<1x16x16x4xf32> to vector<16x16x4xf32>
    %c0_13 = arith.constant 0 : index
    %c1_14 = arith.constant 1 : index
    %c1_15 = arith.constant 1 : index
    %c0_16 = arith.constant 0 : index
    %8 = vector.load %arg1[%c0_13, %c1_14, %c1_15, %c0_16] : memref<1x18x18x4xf32, #tpu.memory_space<vmem>>, vector<1x16x16x4xf32>
    %9 = vector.shape_cast %8 : vector<1x16x16x4xf32> to vector<16x16x4xf32>
    %c0_17 = arith.constant 0 : index
    %c1_18 = arith.constant 1 : index
    %c2_19 = arith.constant 2 : index
    %c0_20 = arith.constant 0 : index
    %10 = vector.load %arg1[%c0_17, %c1_18, %c2_19, %c0_20] : memref<1x18x18x4xf32, #tpu.memory_space<vmem>>, vector<1x16x16x4xf32>
    %11 = vector.shape_cast %10 : vector<1x16x16x4xf32> to vector<16x16x4xf32>
    %c0_21 = arith.constant 0 : index
    %c2_22 = arith.constant 2 : index
    %c0_23 = arith.constant 0 : index
    %c0_24 = arith.constant 0 : index
    %12 = vector.load %arg1[%c0_21, %c2_22, %c0_23, %c0_24] : memref<1x18x18x4xf32, #tpu.memory_space<vmem>>, vector<1x16x16x4xf32>
    %13 = vector.shape_cast %12 : vector<1x16x16x4xf32> to vector<16x16x4xf32>
    %c0_25 = arith.constant 0 : index
    %c2_26 = arith.constant 2 : index
    %c1_27 = arith.constant 1 : index
    %c0_28 = arith.constant 0 : index
    %14 = vector.load %arg1[%c0_25, %c2_26, %c1_27, %c0_28] : memref<1x18x18x4xf32, #tpu.memory_space<vmem>>, vector<1x16x16x4xf32>
    %15 = vector.shape_cast %14 : vector<1x16x16x4xf32> to vector<16x16x4xf32>
    %c0_29 = arith.constant 0 : index
    %c2_30 = arith.constant 2 : index
    %c2_31 = arith.constant 2 : index
    %c0_32 = arith.constant 0 : index
    %16 = vector.load %arg1[%c0_29, %c2_30, %c2_31, %c0_32] : memref<1x18x18x4xf32, #tpu.memory_space<vmem>>, vector<1x16x16x4xf32>
    %17 = vector.shape_cast %16 : vector<1x16x16x4xf32> to vector<16x16x4xf32>
    %18 = tpu.concatenate %1, %3, %5, %7, %9, %11, %13, %15, %17 in 2 : vector<16x16x4xf32>, vector<16x16x4xf32>, vector<16x16x4xf32>, vector<16x16x4xf32>, vector<16x16x4xf32>, vector<16x16x4xf32>, vector<16x16x4xf32>, vector<16x16x4xf32>, vector<16x16x4xf32> -> vector<16x16x36xf32>
    %19 = vector.shape_cast %18 : vector<16x16x36xf32> to vector<256x36xf32>
    %c0_33 = arith.constant 0 : index
    %c0_34 = arith.constant 0 : index
    %20 = vector.load %arg2[%c0_33, %c0_34] : memref<36x128xf32, #tpu.memory_space<vmem>>, vector<36x128xf32>
    %cst = arith.constant dense<0.000000e+00> : vector<256x128xf32>
    %21 = tpu.matmul %19, %20, %cst {dimension_numbers = #tpu.dot_dimension_numbers<[1], [0], [0], [1], [0, 0, 1, 1], [], []>} : vector<256x36xf32>, vector<36x128xf32>, vector<256x128xf32> -> vector<256x128xf32>
    %c0_35 = arith.constant 0 : index
    %c0_36 = arith.constant 0 : index
    %22 = vector.load %arg3[%c0_35, %c0_36] : memref<1x128xf32, #tpu.memory_space<vmem>>, vector<1x128xf32>
    %23 = vector.broadcast %22 : vector<1x128xf32> to vector<256x128xf32>
    %24 = arith.addf %21, %23 : vector<256x128xf32>
    %cst_37 = arith.constant 0.000000e+00 : f32
    %25 = vector.broadcast %cst_37 : f32 to vector<256x128xf32>
    %26 = arith.maximumf %24, %25 : vector<256x128xf32>
    %27 = vector.shape_cast %26 : vector<256x128xf32> to vector<16x16x128xf32>
    %cst_38 = arith.constant 0.000000e+00 : f32
    %28 = vector.broadcast %cst_38 : f32 to vector<1x16x128xf32>
    %cst_39 = arith.constant 0.000000e+00 : f32
    %29 = vector.broadcast %cst_39 : f32 to vector<16x1x128xf32>
    %c0_40 = arith.constant 0 : index
    %c0_41 = arith.constant 0 : index
    %c0_42 = arith.constant 0 : index
    %c0_43 = arith.constant 0 : index
    %30 = vector.load %arg7[%c0_40, %c0_41, %c0_42, %c0_43] : memref<3x18x16x128xf32, #tpu.memory_space<vmem>>, vector<1x1x16x128xf32>
    %31 = vector.shape_cast %30 : vector<1x1x16x128xf32> to vector<1x16x128xf32>
    %32 = vector.shape_cast %28 : vector<1x16x128xf32> to vector<1x1x16x128xf32>
    tpu.vector_store %arg7[%c0_40, %c0_41, %c0_42, %c0_43], %32 {strides = array<i32>} : memref<3x18x16x128xf32, #tpu.memory_space<vmem>>, vector<1x1x16x128xf32>,
    %c0_44 = arith.constant 0 : index
    %c17 = arith.constant 17 : index
    %c0_45 = arith.constant 0 : index
    %c0_46 = arith.constant 0 : index
    %33 = vector.load %arg7[%c0_44, %c17, %c0_45, %c0_46] : memref<3x18x16x128xf32, #tpu.memory_space<vmem>>, vector<1x1x16x128xf32>
    %34 = vector.shape_cast %33 : vector<1x1x16x128xf32> to vector<1x16x128xf32>
    %35 = vector.shape_cast %28 : vector<1x16x128xf32> to vector<1x1x16x128xf32>
    tpu.vector_store %arg7[%c0_44, %c17, %c0_45, %c0_46], %35 {strides = array<i32>} : memref<3x18x16x128xf32, #tpu.memory_space<vmem>>, vector<1x1x16x128xf32>,
    %c1_47 = arith.constant 1 : index
    %c0_48 = arith.constant 0 : index
    %c0_49 = arith.constant 0 : index
    %c0_50 = arith.constant 0 : index
    %36 = vector.load %arg7[%c1_47, %c0_48, %c0_49, %c0_50] : memref<3x18x16x128xf32, #tpu.memory_space<vmem>>, vector<1x1x16x128xf32>
    %37 = vector.shape_cast %36 : vector<1x1x16x128xf32> to vector<1x16x128xf32>
    %38 = vector.shape_cast %28 : vector<1x16x128xf32> to vector<1x1x16x128xf32>
    tpu.vector_store %arg7[%c1_47, %c0_48, %c0_49, %c0_50], %38 {strides = array<i32>} : memref<3x18x16x128xf32, #tpu.memory_space<vmem>>, vector<1x1x16x128xf32>,
    %c1_51 = arith.constant 1 : index
    %c17_52 = arith.constant 17 : index
    %c0_53 = arith.constant 0 : index
    %c0_54 = arith.constant 0 : index
    %39 = vector.load %arg7[%c1_51, %c17_52, %c0_53, %c0_54] : memref<3x18x16x128xf32, #tpu.memory_space<vmem>>, vector<1x1x16x128xf32>
    %40 = vector.shape_cast %39 : vector<1x1x16x128xf32> to vector<1x16x128xf32>
    %41 = vector.shape_cast %28 : vector<1x16x128xf32> to vector<1x1x16x128xf32>
    tpu.vector_store %arg7[%c1_51, %c17_52, %c0_53, %c0_54], %41 {strides = array<i32>} : memref<3x18x16x128xf32, #tpu.memory_space<vmem>>, vector<1x1x16x128xf32>,
    %c2_55 = arith.constant 2 : index
    %c0_56 = arith.constant 0 : index
    %c0_57 = arith.constant 0 : index
    %c0_58 = arith.constant 0 : index
    %42 = vector.load %arg7[%c2_55, %c0_56, %c0_57, %c0_58] : memref<3x18x16x128xf32, #tpu.memory_space<vmem>>, vector<1x1x16x128xf32>
    %43 = vector.shape_cast %42 : vector<1x1x16x128xf32> to vector<1x16x128xf32>
    %44 = vector.shape_cast %28 : vector<1x16x128xf32> to vector<1x1x16x128xf32>
    tpu.vector_store %arg7[%c2_55, %c0_56, %c0_57, %c0_58], %44 {strides = array<i32>} : memref<3x18x16x128xf32, #tpu.memory_space<vmem>>, vector<1x1x16x128xf32>,
    %c2_59 = arith.constant 2 : index
    %c17_60 = arith.constant 17 : index
    %c0_61 = arith.constant 0 : index
    %c0_62 = arith.constant 0 : index
    %45 = vector.load %arg7[%c2_59, %c17_60, %c0_61, %c0_62] : memref<3x18x16x128xf32, #tpu.memory_space<vmem>>, vector<1x1x16x128xf32>
    %46 = vector.shape_cast %45 : vector<1x1x16x128xf32> to vector<1x16x128xf32>
    %47 = vector.shape_cast %28 : vector<1x16x128xf32> to vector<1x1x16x128xf32>
    tpu.vector_store %arg7[%c2_59, %c17_60, %c0_61, %c0_62], %47 {strides = array<i32>} : memref<3x18x16x128xf32, #tpu.memory_space<vmem>>, vector<1x1x16x128xf32>,
    %c1_63 = arith.constant 1 : index
    %c1_64 = arith.constant 1 : index
    %c0_65 = arith.constant 0 : index
    %c0_66 = arith.constant 0 : index
    %48 = vector.load %arg7[%c1_63, %c1_64, %c0_65, %c0_66] : memref<3x18x16x128xf32, #tpu.memory_space<vmem>>, vector<1x16x16x128xf32>
    %49 = vector.shape_cast %48 : vector<1x16x16x128xf32> to vector<16x16x128xf32>
    %50 = vector.shape_cast %27 : vector<16x16x128xf32> to vector<1x16x16x128xf32>
    tpu.vector_store %arg7[%c1_63, %c1_64, %c0_65, %c0_66], %50 {strides = array<i32>} : memref<3x18x16x128xf32, #tpu.memory_space<vmem>>, vector<1x16x16x128xf32>,
    %51 = vector.extract_strided_slice %27 {offsets = [0, 0, 0], sizes = [16, 15, 128], strides = [1, 1, 1]} : vector<16x16x128xf32> to vector<16x15x128xf32>
    %c0_67 = arith.constant 0 : index
    %c1_68 = arith.constant 1 : index
    %c1_69 = arith.constant 1 : index
    %c0_70 = arith.constant 0 : index
    %52 = vector.load %arg7[%c0_67, %c1_68, %c1_69, %c0_70] : memref<3x18x16x128xf32, #tpu.memory_space<vmem>>, vector<1x16x15x128xf32>
    %53 = vector.shape_cast %52 : vector<1x16x15x128xf32> to vector<16x15x128xf32>
    %54 = vector.shape_cast %51 : vector<16x15x128xf32> to vector<1x16x15x128xf32>
    tpu.vector_store %arg7[%c0_67, %c1_68, %c1_69, %c0_70], %54 {strides = array<i32>} : memref<3x18x16x128xf32, #tpu.memory_space<vmem>>, vector<1x16x15x128xf32>,
    %c0_71 = arith.constant 0 : index
    %c1_72 = arith.constant 1 : index
    %c0_73 = arith.constant 0 : index
    %c0_74 = arith.constant 0 : index
    %55 = vector.load %arg7[%c0_71, %c1_72, %c0_73, %c0_74] : memref<3x18x16x128xf32, #tpu.memory_space<vmem>>, vector<1x16x1x128xf32>
    %56 = vector.shape_cast %55 : vector<1x16x1x128xf32> to vector<16x1x128xf32>
    %57 = vector.shape_cast %29 : vector<16x1x128xf32> to vector<1x16x1x128xf32>
    tpu.vector_store %arg7[%c0_71, %c1_72, %c0_73, %c0_74], %57 {strides = array<i32>} : memref<3x18x16x128xf32, #tpu.memory_space<vmem>>, vector<1x16x1x128xf32>,
    %58 = vector.extract_strided_slice %27 {offsets = [0, 1, 0], sizes = [16, 15, 128], strides = [1, 1, 1]} : vector<16x16x128xf32> to vector<16x15x128xf32>
    %c2_75 = arith.constant 2 : index
    %c1_76 = arith.constant 1 : index
    %c0_77 = arith.constant 0 : index
    %c0_78 = arith.constant 0 : index
    %59 = vector.load %arg7[%c2_75, %c1_76, %c0_77, %c0_78] : memref<3x18x16x128xf32, #tpu.memory_space<vmem>>, vector<1x16x15x128xf32>
    %60 = vector.shape_cast %59 : vector<1x16x15x128xf32> to vector<16x15x128xf32>
    %61 = vector.shape_cast %58 : vector<16x15x128xf32> to vector<1x16x15x128xf32>
    tpu.vector_store %arg7[%c2_75, %c1_76, %c0_77, %c0_78], %61 {strides = array<i32>} : memref<3x18x16x128xf32, #tpu.memory_space<vmem>>, vector<1x16x15x128xf32>,
    %c2_79 = arith.constant 2 : index
    %c1_80 = arith.constant 1 : index
    %c15 = arith.constant 15 : index
    %c0_81 = arith.constant 0 : index
    %62 = vector.load %arg7[%c2_79, %c1_80, %c15, %c0_81] : memref<3x18x16x128xf32, #tpu.memory_space<vmem>>, vector<1x16x1x128xf32>
    %63 = vector.shape_cast %62 : vector<1x16x1x128xf32> to vector<16x1x128xf32>
    %64 = vector.shape_cast %29 : vector<16x1x128xf32> to vector<1x16x1x128xf32>
    tpu.vector_store %arg7[%c2_79, %c1_80, %c15, %c0_81], %64 {strides = array<i32>} : memref<3x18x16x128xf32, #tpu.memory_space<vmem>>, vector<1x16x1x128xf32>,
    %c0_82 = arith.constant 0 : index
    %c0_83 = arith.constant 0 : index
    %c0_84 = arith.constant 0 : index
    %c0_85 = arith.constant 0 : index
    %65 = vector.load %arg7[%c0_82, %c0_83, %c0_84, %c0_85] : memref<3x18x16x128xf32, #tpu.memory_space<vmem>>, vector<1x8x16x128xf32>
    %66 = vector.shape_cast %65 : vector<1x8x16x128xf32> to vector<8x16x128xf32>
    %67 = vector.shape_cast %66 : vector<8x16x128xf32> to vector<128x128xf32>
    %c0_86 = arith.constant 0 : index
    %c0_87 = arith.constant 0 : index
    %c0_88 = arith.constant 0 : index
    %68 = vector.load %arg4[%c0_86, %c0_87, %c0_88] : memref<9x128x128xf32, #tpu.memory_space<vmem>>, vector<1x128x128xf32>
    %69 = vector.shape_cast %68 : vector<1x128x128xf32> to vector<128x128xf32>
    %cst_89 = arith.constant dense<0.000000e+00> : vector<128x128xf32>
    %70 = tpu.matmul %67, %69, %cst_89 {dimension_numbers = #tpu.dot_dimension_numbers<[1], [0], [0], [1], [0, 0, 1, 1], [], []>} : vector<128x128xf32>, vector<128x128xf32>, vector<128x128xf32> -> vector<128x128xf32>
    %c1_90 = arith.constant 1 : index
    %c0_91 = arith.constant 0 : index
    %c0_92 = arith.constant 0 : index
    %c0_93 = arith.constant 0 : index
    %71 = vector.load %arg7[%c1_90, %c0_91, %c0_92, %c0_93] : memref<3x18x16x128xf32, #tpu.memory_space<vmem>>, vector<1x8x16x128xf32>
    %72 = vector.shape_cast %71 : vector<1x8x16x128xf32> to vector<8x16x128xf32>
    %73 = vector.shape_cast %72 : vector<8x16x128xf32> to vector<128x128xf32>
    %c1_94 = arith.constant 1 : index
    %c0_95 = arith.constant 0 : index
    %c0_96 = arith.constant 0 : index
    %74 = vector.load %arg4[%c1_94, %c0_95, %c0_96] : memref<9x128x128xf32, #tpu.memory_space<vmem>>, vector<1x128x128xf32>
    %75 = vector.shape_cast %74 : vector<1x128x128xf32> to vector<128x128xf32>
    %cst_97 = arith.constant dense<0.000000e+00> : vector<128x128xf32>
    %76 = tpu.matmul %73, %75, %cst_97 {dimension_numbers = #tpu.dot_dimension_numbers<[1], [0], [0], [1], [0, 0, 1, 1], [], []>} : vector<128x128xf32>, vector<128x128xf32>, vector<128x128xf32> -> vector<128x128xf32>
    %77 = arith.addf %70, %76 : vector<128x128xf32>
    %c2_98 = arith.constant 2 : index
    %c0_99 = arith.constant 0 : index
    %c0_100 = arith.constant 0 : index
    %c0_101 = arith.constant 0 : index
    %78 = vector.load %arg7[%c2_98, %c0_99, %c0_100, %c0_101] : memref<3x18x16x128xf32, #tpu.memory_space<vmem>>, vector<1x8x16x128xf32>
    %79 = vector.shape_cast %78 : vector<1x8x16x128xf32> to vector<8x16x128xf32>
    %80 = vector.shape_cast %79 : vector<8x16x128xf32> to vector<128x128xf32>
    %c2_102 = arith.constant 2 : index
    %c0_103 = arith.constant 0 : index
    %c0_104 = arith.constant 0 : index
    %81 = vector.load %arg4[%c2_102, %c0_103, %c0_104] : memref<9x128x128xf32, #tpu.memory_space<vmem>>, vector<1x128x128xf32>
    %82 = vector.shape_cast %81 : vector<1x128x128xf32> to vector<128x128xf32>
    %cst_105 = arith.constant dense<0.000000e+00> : vector<128x128xf32>
    %83 = tpu.matmul %80, %82, %cst_105 {dimension_numbers = #tpu.dot_dimension_numbers<[1], [0], [0], [1], [0, 0, 1, 1], [], []>} : vector<128x128xf32>, vector<128x128xf32>, vector<128x128xf32> -> vector<128x128xf32>
    %84 = arith.addf %77, %83 : vector<128x128xf32>
    %c0_106 = arith.constant 0 : index
    %c1_107 = arith.constant 1 : index
    %c0_108 = arith.constant 0 : index
    %c0_109 = arith.constant 0 : index
    %85 = vector.load %arg7[%c0_106, %c1_107, %c0_108, %c0_109] : memref<3x18x16x128xf32, #tpu.memory_space<vmem>>, vector<1x8x16x128xf32>
    %86 = vector.shape_cast %85 : vector<1x8x16x128xf32> to vector<8x16x128xf32>
    %87 = vector.shape_cast %86 : vector<8x16x128xf32> to vector<128x128xf32>
    %c3 = arith.constant 3 : index
    %c0_110 = arith.constant 0 : index
    %c0_111 = arith.constant 0 : index
    %88 = vector.load %arg4[%c3, %c0_110, %c0_111] : memref<9x128x128xf32, #tpu.memory_space<vmem>>, vector<1x128x128xf32>
    %89 = vector.shape_cast %88 : vector<1x128x128xf32> to vector<128x128xf32>
    %cst_112 = arith.constant dense<0.000000e+00> : vector<128x128xf32>
    %90 = tpu.matmul %87, %89, %cst_112 {dimension_numbers = #tpu.dot_dimension_numbers<[1], [0], [0], [1], [0, 0, 1, 1], [], []>} : vector<128x128xf32>, vector<128x128xf32>, vector<128x128xf32> -> vector<128x128xf32>
    %91 = arith.addf %84, %90 : vector<128x128xf32>
    %c1_113 = arith.constant 1 : index
    %c1_114 = arith.constant 1 : index
    %c0_115 = arith.constant 0 : index
    %c0_116 = arith.constant 0 : index
    %92 = vector.load %arg7[%c1_113, %c1_114, %c0_115, %c0_116] : memref<3x18x16x128xf32, #tpu.memory_space<vmem>>, vector<1x8x16x128xf32>
    %93 = vector.shape_cast %92 : vector<1x8x16x128xf32> to vector<8x16x128xf32>
    %94 = vector.shape_cast %93 : vector<8x16x128xf32> to vector<128x128xf32>
    %c4 = arith.constant 4 : index
    %c0_117 = arith.constant 0 : index
    %c0_118 = arith.constant 0 : index
    %95 = vector.load %arg4[%c4, %c0_117, %c0_118] : memref<9x128x128xf32, #tpu.memory_space<vmem>>, vector<1x128x128xf32>
    %96 = vector.shape_cast %95 : vector<1x128x128xf32> to vector<128x128xf32>
    %cst_119 = arith.constant dense<0.000000e+00> : vector<128x128xf32>
    %97 = tpu.matmul %94, %96, %cst_119 {dimension_numbers = #tpu.dot_dimension_numbers<[1], [0], [0], [1], [0, 0, 1, 1], [], []>} : vector<128x128xf32>, vector<128x128xf32>, vector<128x128xf32> -> vector<128x128xf32>
    %98 = arith.addf %91, %97 : vector<128x128xf32>
    %c2_120 = arith.constant 2 : index
    %c1_121 = arith.constant 1 : index
    %c0_122 = arith.constant 0 : index
    %c0_123 = arith.constant 0 : index
    %99 = vector.load %arg7[%c2_120, %c1_121, %c0_122, %c0_123] : memref<3x18x16x128xf32, #tpu.memory_space<vmem>>, vector<1x8x16x128xf32>
    %100 = vector.shape_cast %99 : vector<1x8x16x128xf32> to vector<8x16x128xf32>
    %101 = vector.shape_cast %100 : vector<8x16x128xf32> to vector<128x128xf32>
    %c5 = arith.constant 5 : index
    %c0_124 = arith.constant 0 : index
    %c0_125 = arith.constant 0 : index
    %102 = vector.load %arg4[%c5, %c0_124, %c0_125] : memref<9x128x128xf32, #tpu.memory_space<vmem>>, vector<1x128x128xf32>
    %103 = vector.shape_cast %102 : vector<1x128x128xf32> to vector<128x128xf32>
    %cst_126 = arith.constant dense<0.000000e+00> : vector<128x128xf32>
    %104 = tpu.matmul %101, %103, %cst_126 {dimension_numbers = #tpu.dot_dimension_numbers<[1], [0], [0], [1], [0, 0, 1, 1], [], []>} : vector<128x128xf32>, vector<128x128xf32>, vector<128x128xf32> -> vector<128x128xf32>
    %105 = arith.addf %98, %104 : vector<128x128xf32>
    %c0_127 = arith.constant 0 : index
    %c2_128 = arith.constant 2 : index
    %c0_129 = arith.constant 0 : index
    %c0_130 = arith.constant 0 : index
    %106 = vector.load %arg7[%c0_127, %c2_128, %c0_129, %c0_130] : memref<3x18x16x128xf32, #tpu.memory_space<vmem>>, vector<1x8x16x128xf32>
    %107 = vector.shape_cast %106 : vector<1x8x16x128xf32> to vector<8x16x128xf32>
    %108 = vector.shape_cast %107 : vector<8x16x128xf32> to vector<128x128xf32>
    %c6 = arith.constant 6 : index
    %c0_131 = arith.constant 0 : index
    %c0_132 = arith.constant 0 : index
    %109 = vector.load %arg4[%c6, %c0_131, %c0_132] : memref<9x128x128xf32, #tpu.memory_space<vmem>>, vector<1x128x128xf32>
    %110 = vector.shape_cast %109 : vector<1x128x128xf32> to vector<128x128xf32>
    %cst_133 = arith.constant dense<0.000000e+00> : vector<128x128xf32>
    %111 = tpu.matmul %108, %110, %cst_133 {dimension_numbers = #tpu.dot_dimension_numbers<[1], [0], [0], [1], [0, 0, 1, 1], [], []>} : vector<128x128xf32>, vector<128x128xf32>, vector<128x128xf32> -> vector<128x128xf32>
    %112 = arith.addf %105, %111 : vector<128x128xf32>
    %c1_134 = arith.constant 1 : index
    %c2_135 = arith.constant 2 : index
    %c0_136 = arith.constant 0 : index
    %c0_137 = arith.constant 0 : index
    %113 = vector.load %arg7[%c1_134, %c2_135, %c0_136, %c0_137] : memref<3x18x16x128xf32, #tpu.memory_space<vmem>>, vector<1x8x16x128xf32>
    %114 = vector.shape_cast %113 : vector<1x8x16x128xf32> to vector<8x16x128xf32>
    %115 = vector.shape_cast %114 : vector<8x16x128xf32> to vector<128x128xf32>
    %c7 = arith.constant 7 : index
    %c0_138 = arith.constant 0 : index
    %c0_139 = arith.constant 0 : index
    %116 = vector.load %arg4[%c7, %c0_138, %c0_139] : memref<9x128x128xf32, #tpu.memory_space<vmem>>, vector<1x128x128xf32>
    %117 = vector.shape_cast %116 : vector<1x128x128xf32> to vector<128x128xf32>
    %cst_140 = arith.constant dense<0.000000e+00> : vector<128x128xf32>
    %118 = tpu.matmul %115, %117, %cst_140 {dimension_numbers = #tpu.dot_dimension_numbers<[1], [0], [0], [1], [0, 0, 1, 1], [], []>} : vector<128x128xf32>, vector<128x128xf32>, vector<128x128xf32> -> vector<128x128xf32>
    %119 = arith.addf %112, %118 : vector<128x128xf32>
    %c2_141 = arith.constant 2 : index
    %c2_142 = arith.constant 2 : index
    %c0_143 = arith.constant 0 : index
    %c0_144 = arith.constant 0 : index
    %120 = vector.load %arg7[%c2_141, %c2_142, %c0_143, %c0_144] : memref<3x18x16x128xf32, #tpu.memory_space<vmem>>, vector<1x8x16x128xf32>
    %121 = vector.shape_cast %120 : vector<1x8x16x128xf32> to vector<8x16x128xf32>
    %122 = vector.shape_cast %121 : vector<8x16x128xf32> to vector<128x128xf32>
    %c8 = arith.constant 8 : index
    %c0_145 = arith.constant 0 : index
    %c0_146 = arith.constant 0 : index
    %123 = vector.load %arg4[%c8, %c0_145, %c0_146] : memref<9x128x128xf32, #tpu.memory_space<vmem>>, vector<1x128x128xf32>
    %124 = vector.shape_cast %123 : vector<1x128x128xf32> to vector<128x128xf32>
    %cst_147 = arith.constant dense<0.000000e+00> : vector<128x128xf32>
    %125 = tpu.matmul %122, %124, %cst_147 {dimension_numbers = #tpu.dot_dimension_numbers<[1], [0], [0], [1], [0, 0, 1, 1], [], []>} : vector<128x128xf32>, vector<128x128xf32>, vector<128x128xf32> -> vector<128x128xf32>
    %126 = arith.addf %119, %125 : vector<128x128xf32>
    %c0_148 = arith.constant 0 : index
    %c0_149 = arith.constant 0 : index
    %127 = vector.load %arg5[%c0_148, %c0_149] : memref<1x128xf32, #tpu.memory_space<vmem>>, vector<1x128xf32>
    %128 = vector.broadcast %127 : vector<1x128xf32> to vector<128x128xf32>
    %129 = arith.addf %126, %128 : vector<128x128xf32>
    %cst_150 = arith.constant 0.000000e+00 : f32
    %130 = vector.broadcast %cst_150 : f32 to vector<128x128xf32>
    %131 = arith.maximumf %129, %130 : vector<128x128xf32>
    %132 = vector.shape_cast %131 : vector<128x128xf32> to vector<8x16x128xf32>
    %133 = vector.extract_strided_slice %132 {offsets = [0, 0, 0], sizes = [8, 16, 8], strides = [1, 1, 1]} : vector<8x16x128xf32> to vector<8x16x8xf32>
    %c0_151 = arith.constant 0 : index
    %c0_152 = arith.constant 0 : index
    %c0_153 = arith.constant 0 : index
    %c0_154 = arith.constant 0 : index
    %134 = vector.load %arg6[%c0_151, %c0_152, %c0_153, %c0_154] : memref<1x16x16x8xf32, #tpu.memory_space<vmem>>, vector<1x8x16x8xf32>
    %135 = vector.shape_cast %134 : vector<1x8x16x8xf32> to vector<8x16x8xf32>
    %136 = vector.shape_cast %133 : vector<8x16x8xf32> to vector<1x8x16x8xf32>
    tpu.vector_store %arg6[%c0_151, %c0_152, %c0_153, %c0_154], %136 {strides = array<i32>} : memref<1x16x16x8xf32, #tpu.memory_space<vmem>>, vector<1x8x16x8xf32>,
    %c0_155 = arith.constant 0 : index
    %c8_156 = arith.constant 8 : index
    %c0_157 = arith.constant 0 : index
    %c0_158 = arith.constant 0 : index
    %137 = vector.load %arg7[%c0_155, %c8_156, %c0_157, %c0_158] : memref<3x18x16x128xf32, #tpu.memory_space<vmem>>, vector<1x8x16x128xf32>
    %138 = vector.shape_cast %137 : vector<1x8x16x128xf32> to vector<8x16x128xf32>
    %139 = vector.shape_cast %138 : vector<8x16x128xf32> to vector<128x128xf32>
    %c0_159 = arith.constant 0 : index
    %c0_160 = arith.constant 0 : index
    %c0_161 = arith.constant 0 : index
    %140 = vector.load %arg4[%c0_159, %c0_160, %c0_161] : memref<9x128x128xf32, #tpu.memory_space<vmem>>, vector<1x128x128xf32>
    %141 = vector.shape_cast %140 : vector<1x128x128xf32> to vector<128x128xf32>
    %cst_162 = arith.constant dense<0.000000e+00> : vector<128x128xf32>
    %142 = tpu.matmul %139, %141, %cst_162 {dimension_numbers = #tpu.dot_dimension_numbers<[1], [0], [0], [1], [0, 0, 1, 1], [], []>} : vector<128x128xf32>, vector<128x128xf32>, vector<128x128xf32> -> vector<128x128xf32>
    %c1_163 = arith.constant 1 : index
    %c8_164 = arith.constant 8 : index
    %c0_165 = arith.constant 0 : index
    %c0_166 = arith.constant 0 : index
    %143 = vector.load %arg7[%c1_163, %c8_164, %c0_165, %c0_166] : memref<3x18x16x128xf32, #tpu.memory_space<vmem>>, vector<1x8x16x128xf32>
    %144 = vector.shape_cast %143 : vector<1x8x16x128xf32> to vector<8x16x128xf32>
    %145 = vector.shape_cast %144 : vector<8x16x128xf32> to vector<128x128xf32>
    %c1_167 = arith.constant 1 : index
    %c0_168 = arith.constant 0 : index
    %c0_169 = arith.constant 0 : index
    %146 = vector.load %arg4[%c1_167, %c0_168, %c0_169] : memref<9x128x128xf32, #tpu.memory_space<vmem>>, vector<1x128x128xf32>
    %147 = vector.shape_cast %146 : vector<1x128x128xf32> to vector<128x128xf32>
    %cst_170 = arith.constant dense<0.000000e+00> : vector<128x128xf32>
    %148 = tpu.matmul %145, %147, %cst_170 {dimension_numbers = #tpu.dot_dimension_numbers<[1], [0], [0], [1], [0, 0, 1, 1], [], []>} : vector<128x128xf32>, vector<128x128xf32>, vector<128x128xf32> -> vector<128x128xf32>
    %149 = arith.addf %142, %148 : vector<128x128xf32>
    %c2_171 = arith.constant 2 : index
    %c8_172 = arith.constant 8 : index
    %c0_173 = arith.constant 0 : index
    %c0_174 = arith.constant 0 : index
    %150 = vector.load %arg7[%c2_171, %c8_172, %c0_173, %c0_174] : memref<3x18x16x128xf32, #tpu.memory_space<vmem>>, vector<1x8x16x128xf32>
    %151 = vector.shape_cast %150 : vector<1x8x16x128xf32> to vector<8x16x128xf32>
    %152 = vector.shape_cast %151 : vector<8x16x128xf32> to vector<128x128xf32>
    %c2_175 = arith.constant 2 : index
    %c0_176 = arith.constant 0 : index
    %c0_177 = arith.constant 0 : index
    %153 = vector.load %arg4[%c2_175, %c0_176, %c0_177] : memref<9x128x128xf32, #tpu.memory_space<vmem>>, vector<1x128x128xf32>
    %154 = vector.shape_cast %153 : vector<1x128x128xf32> to vector<128x128xf32>
    %cst_178 = arith.constant dense<0.000000e+00> : vector<128x128xf32>
    %155 = tpu.matmul %152, %154, %cst_178 {dimension_numbers = #tpu.dot_dimension_numbers<[1], [0], [0], [1], [0, 0, 1, 1], [], []>} : vector<128x128xf32>, vector<128x128xf32>, vector<128x128xf32> -> vector<128x128xf32>
    %156 = arith.addf %149, %155 : vector<128x128xf32>
    %c0_179 = arith.constant 0 : index
    %c9 = arith.constant 9 : index
    %c0_180 = arith.constant 0 : index
    %c0_181 = arith.constant 0 : index
    %157 = vector.load %arg7[%c0_179, %c9, %c0_180, %c0_181] : memref<3x18x16x128xf32, #tpu.memory_space<vmem>>, vector<1x8x16x128xf32>
    %158 = vector.shape_cast %157 : vector<1x8x16x128xf32> to vector<8x16x128xf32>
    %159 = vector.shape_cast %158 : vector<8x16x128xf32> to vector<128x128xf32>
    %c3_182 = arith.constant 3 : index
    %c0_183 = arith.constant 0 : index
    %c0_184 = arith.constant 0 : index
    %160 = vector.load %arg4[%c3_182, %c0_183, %c0_184] : memref<9x128x128xf32, #tpu.memory_space<vmem>>, vector<1x128x128xf32>
    %161 = vector.shape_cast %160 : vector<1x128x128xf32> to vector<128x128xf32>
    %cst_185 = arith.constant dense<0.000000e+00> : vector<128x128xf32>
    %162 = tpu.matmul %159, %161, %cst_185 {dimension_numbers = #tpu.dot_dimension_numbers<[1], [0], [0], [1], [0, 0, 1, 1], [], []>} : vector<128x128xf32>, vector<128x128xf32>, vector<128x128xf32> -> vector<128x128xf32>
    %163 = arith.addf %156, %162 : vector<128x128xf32>
    %c1_186 = arith.constant 1 : index
    %c9_187 = arith.constant 9 : index
    %c0_188 = arith.constant 0 : index
    %c0_189 = arith.constant 0 : index
    %164 = vector.load %arg7[%c1_186, %c9_187, %c0_188, %c0_189] : memref<3x18x16x128xf32, #tpu.memory_space<vmem>>, vector<1x8x16x128xf32>
    %165 = vector.shape_cast %164 : vector<1x8x16x128xf32> to vector<8x16x128xf32>
    %166 = vector.shape_cast %165 : vector<8x16x128xf32> to vector<128x128xf32>
    %c4_190 = arith.constant 4 : index
    %c0_191 = arith.constant 0 : index
    %c0_192 = arith.constant 0 : index
    %167 = vector.load %arg4[%c4_190, %c0_191, %c0_192] : memref<9x128x128xf32, #tpu.memory_space<vmem>>, vector<1x128x128xf32>
    %168 = vector.shape_cast %167 : vector<1x128x128xf32> to vector<128x128xf32>
    %cst_193 = arith.constant dense<0.000000e+00> : vector<128x128xf32>
    %169 = tpu.matmul %166, %168, %cst_193 {dimension_numbers = #tpu.dot_dimension_numbers<[1], [0], [0], [1], [0, 0, 1, 1], [], []>} : vector<128x128xf32>, vector<128x128xf32>, vector<128x128xf32> -> vector<128x128xf32>
    %170 = arith.addf %163, %169 : vector<128x128xf32>
    %c2_194 = arith.constant 2 : index
    %c9_195 = arith.constant 9 : index
    %c0_196 = arith.constant 0 : index
    %c0_197 = arith.constant 0 : index
    %171 = vector.load %arg7[%c2_194, %c9_195, %c0_196, %c0_197] : memref<3x18x16x128xf32, #tpu.memory_space<vmem>>, vector<1x8x16x128xf32>
    %172 = vector.shape_cast %171 : vector<1x8x16x128xf32> to vector<8x16x128xf32>
    %173 = vector.shape_cast %172 : vector<8x16x128xf32> to vector<128x128xf32>
    %c5_198 = arith.constant 5 : index
    %c0_199 = arith.constant 0 : index
    %c0_200 = arith.constant 0 : index
    %174 = vector.load %arg4[%c5_198, %c0_199, %c0_200] : memref<9x128x128xf32, #tpu.memory_space<vmem>>, vector<1x128x128xf32>
    %175 = vector.shape_cast %174 : vector<1x128x128xf32> to vector<128x128xf32>
    %cst_201 = arith.constant dense<0.000000e+00> : vector<128x128xf32>
    %176 = tpu.matmul %173, %175, %cst_201 {dimension_numbers = #tpu.dot_dimension_numbers<[1], [0], [0], [1], [0, 0, 1, 1], [], []>} : vector<128x128xf32>, vector<128x128xf32>, vector<128x128xf32> -> vector<128x128xf32>
    %177 = arith.addf %170, %176 : vector<128x128xf32>
    %c0_202 = arith.constant 0 : index
    %c10 = arith.constant 10 : index
    %c0_203 = arith.constant 0 : index
    %c0_204 = arith.constant 0 : index
    %178 = vector.load %arg7[%c0_202, %c10, %c0_203, %c0_204] : memref<3x18x16x128xf32, #tpu.memory_space<vmem>>, vector<1x8x16x128xf32>
    %179 = vector.shape_cast %178 : vector<1x8x16x128xf32> to vector<8x16x128xf32>
    %180 = vector.shape_cast %179 : vector<8x16x128xf32> to vector<128x128xf32>
    %c6_205 = arith.constant 6 : index
    %c0_206 = arith.constant 0 : index
    %c0_207 = arith.constant 0 : index
    %181 = vector.load %arg4[%c6_205, %c0_206, %c0_207] : memref<9x128x128xf32, #tpu.memory_space<vmem>>, vector<1x128x128xf32>
    %182 = vector.shape_cast %181 : vector<1x128x128xf32> to vector<128x128xf32>
    %cst_208 = arith.constant dense<0.000000e+00> : vector<128x128xf32>
    %183 = tpu.matmul %180, %182, %cst_208 {dimension_numbers = #tpu.dot_dimension_numbers<[1], [0], [0], [1], [0, 0, 1, 1], [], []>} : vector<128x128xf32>, vector<128x128xf32>, vector<128x128xf32> -> vector<128x128xf32>
    %184 = arith.addf %177, %183 : vector<128x128xf32>
    %c1_209 = arith.constant 1 : index
    %c10_210 = arith.constant 10 : index
    %c0_211 = arith.constant 0 : index
    %c0_212 = arith.constant 0 : index
    %185 = vector.load %arg7[%c1_209, %c10_210, %c0_211, %c0_212] : memref<3x18x16x128xf32, #tpu.memory_space<vmem>>, vector<1x8x16x128xf32>
    %186 = vector.shape_cast %185 : vector<1x8x16x128xf32> to vector<8x16x128xf32>
    %187 = vector.shape_cast %186 : vector<8x16x128xf32> to vector<128x128xf32>
    %c7_213 = arith.constant 7 : index
    %c0_214 = arith.constant 0 : index
    %c0_215 = arith.constant 0 : index
    %188 = vector.load %arg4[%c7_213, %c0_214, %c0_215] : memref<9x128x128xf32, #tpu.memory_space<vmem>>, vector<1x128x128xf32>
    %189 = vector.shape_cast %188 : vector<1x128x128xf32> to vector<128x128xf32>
    %cst_216 = arith.constant dense<0.000000e+00> : vector<128x128xf32>
    %190 = tpu.matmul %187, %189, %cst_216 {dimension_numbers = #tpu.dot_dimension_numbers<[1], [0], [0], [1], [0, 0, 1, 1], [], []>} : vector<128x128xf32>, vector<128x128xf32>, vector<128x128xf32> -> vector<128x128xf32>
    %191 = arith.addf %184, %190 : vector<128x128xf32>
    %c2_217 = arith.constant 2 : index
    %c10_218 = arith.constant 10 : index
    %c0_219 = arith.constant 0 : index
    %c0_220 = arith.constant 0 : index
    %192 = vector.load %arg7[%c2_217, %c10_218, %c0_219, %c0_220] : memref<3x18x16x128xf32, #tpu.memory_space<vmem>>, vector<1x8x16x128xf32>
    %193 = vector.shape_cast %192 : vector<1x8x16x128xf32> to vector<8x16x128xf32>
    %194 = vector.shape_cast %193 : vector<8x16x128xf32> to vector<128x128xf32>
    %c8_221 = arith.constant 8 : index
    %c0_222 = arith.constant 0 : index
    %c0_223 = arith.constant 0 : index
    %195 = vector.load %arg4[%c8_221, %c0_222, %c0_223] : memref<9x128x128xf32, #tpu.memory_space<vmem>>, vector<1x128x128xf32>
    %196 = vector.shape_cast %195 : vector<1x128x128xf32> to vector<128x128xf32>
    %cst_224 = arith.constant dense<0.000000e+00> : vector<128x128xf32>
    %197 = tpu.matmul %194, %196, %cst_224 {dimension_numbers = #tpu.dot_dimension_numbers<[1], [0], [0], [1], [0, 0, 1, 1], [], []>} : vector<128x128xf32>, vector<128x128xf32>, vector<128x128xf32> -> vector<128x128xf32>
    %198 = arith.addf %191, %197 : vector<128x128xf32>
    %c0_225 = arith.constant 0 : index
    %c0_226 = arith.constant 0 : index
    %199 = vector.load %arg5[%c0_225, %c0_226] : memref<1x128xf32, #tpu.memory_space<vmem>>, vector<1x128xf32>
    %200 = vector.broadcast %199 : vector<1x128xf32> to vector<128x128xf32>
    %201 = arith.addf %198, %200 : vector<128x128xf32>
    %cst_227 = arith.constant 0.000000e+00 : f32
    %202 = vector.broadcast %cst_227 : f32 to vector<128x128xf32>
    %203 = arith.maximumf %201, %202 : vector<128x128xf32>
    %204 = vector.shape_cast %203 : vector<128x128xf32> to vector<8x16x128xf32>
    %205 = vector.extract_strided_slice %204 {offsets = [0, 0, 0], sizes = [8, 16, 8], strides = [1, 1, 1]} : vector<8x16x128xf32> to vector<8x16x8xf32>
    %c0_228 = arith.constant 0 : index
    %c8_229 = arith.constant 8 : index
    %c0_230 = arith.constant 0 : index
    %c0_231 = arith.constant 0 : index
    %206 = vector.load %arg6[%c0_228, %c8_229, %c0_230, %c0_231] : memref<1x16x16x8xf32, #tpu.memory_space<vmem>>, vector<1x8x16x8xf32>
    %207 = vector.shape_cast %206 : vector<1x8x16x8xf32> to vector<8x16x8xf32>
    %208 = vector.shape_cast %205 : vector<8x16x8xf32> to vector<1x8x16x8xf32>
    tpu.vector_store %arg6[%c0_228, %c8_229, %c0_230, %c0_231], %208 {strides = array<i32>} : memref<1x16x16x8xf32, #tpu.memory_space<vmem>>, vector<1x8x16x8xf32>,
    return
  }
  func.func @transform_0(%arg0: i32) -> (i32, i32, i32, i32) {
    %c0_i32 = arith.constant 0 : i32
    %c0_i32_0 = arith.constant 0 : i32
    %c0_i32_1 = arith.constant 0 : i32
    %c0_i32_2 = arith.constant 0 : i32
    return %arg0, %c0_i32, %c0_i32_0, %c0_i32_1 : i32, i32, i32, i32
  }
  func.func @transform_1(%arg0: i32) -> (i32, i32) {
    %c0_i32 = arith.constant 0 : i32
    %c0_i32_0 = arith.constant 0 : i32
    %c0_i32_1 = arith.constant 0 : i32
    return %c0_i32, %c0_i32_0 : i32, i32
  }
  func.func @transform_2(%arg0: i32) -> (i32, i32) {
    %c0_i32 = arith.constant 0 : i32
    %c0_i32_0 = arith.constant 0 : i32
    %c0_i32_1 = arith.constant 0 : i32
    return %c0_i32, %c0_i32_0 : i32, i32
  }
  func.func @transform_3(%arg0: i32) -> (i32, i32, i32) {
    %c0_i32 = arith.constant 0 : i32
    %c0_i32_0 = arith.constant 0 : i32
    %c0_i32_1 = arith.constant 0 : i32
    %c0_i32_2 = arith.constant 0 : i32
    return %c0_i32, %c0_i32_0, %c0_i32_1 : i32, i32, i32
  }
  func.func @transform_4(%arg0: i32) -> (i32, i32) {
    %c0_i32 = arith.constant 0 : i32
    %c0_i32_0 = arith.constant 0 : i32
    %c0_i32_1 = arith.constant 0 : i32
    return %c0_i32, %c0_i32_0 : i32, i32
  }
  func.func @transform_5(%arg0: i32) -> (i32, i32, i32, i32) {
    %c0_i32 = arith.constant 0 : i32
    %c0_i32_0 = arith.constant 0 : i32
    %c0_i32_1 = arith.constant 0 : i32
    %c0_i32_2 = arith.constant 0 : i32
    return %arg0, %c0_i32, %c0_i32_0, %c0_i32_1 : i32, i32, i32, i32
  }
}

</mosaic_0001>

<llo_original>
// kernel: tpu_custom_call.1
$region0: #{tpu_custom_call.1}
  #allocation0 [shape = 'u32[]', space=smem, size = 0x4, offset = 0x4, fixed_abs, tag = 'smem constant byte address 0x4 - core index']
  #allocation1 [shape = 'u32[72,128]{1,0:T(1,128)}', space=vmem, size = 0x9000, scoped, tag = 'internal scratch']
  #allocation2 [shape = 'f32[3,18,16,128]{3,2,1,0:T(8,128)}', space=vmem, size = 0x6c000, scoped, tag = 'scratch operand']
  %s0 = inlined_call_operand.vmem [shape: f32[2,18,18,4], index: 0, kind: input, shape index: {}]
  %s1 = inlined_call_operand.vmem [shape: f32[36,128], index: 1, kind: input, shape index: {}]
  %s2 = inlined_call_operand.vmem [shape: f32[1,128], index: 2, kind: input, shape index: {}]
  %s3 = inlined_call_operand.hbm [shape: f32[9,128,128], index: 3, kind: input, shape index: {}]
  %s4 = inlined_call_operand.vmem [shape: f32[1,128], index: 4, kind: input, shape index: {}]
  %s5 = inlined_call_operand.vmem [shape: f32[2,16,16,8], index: 5, kind: output, shape index: {}]
  %s6 = sld [smem:[#allocation0]]
  $region57: #{tpu_custom_call.1} parent=0
    _
  %s8 = ssub.s32 1, %s6
  %s9 = scalar_select 0, %s8, %s6
  $region1: #{tpu_custom_call.1} parent=0
    #allocation3 [shape = 'u8[589824]{0}', space=vmem, size = 0x90000, scoped, tag = 'input window, operand 3, single buffered']
    #allocation4 [shape = 's32[2]{0}', space=sflag, size = 0x8, scoped, tag = 'scoped memory for tpu_custom_call.1']
    %10 = vsyncpa [#allocation4], 0
    loop: start=0, step=1, limit=4
    $region2: #{tpu_custom_call.1} parent=1 // loop_pre_header
      _
    $region3: #{tpu_custom_call.1} parent=1 // loop_header
      %s12 = sphi 0, %s16
      %p13 = scmp.ge.s32.totalorder %s12, 4
      %s22 = sphi 0, %s24
      %s25 = sphi 0, %s22
      %s26 = sphi 0, %s25
      %s42 = sphi 0, %s26
      %s46 = sphi 0, %s46
      %s48 = sphi 0, %s46
      %s49 = sphi 0, %s48
      %s63 = sphi 0, %s49
      %s67 = sphi 0, %s67
      %s69 = sphi 0, %s67
      %s70 = sphi 0, %s69
      %s84 = sphi 0, %s70
      %s88 = sphi 0, %s88
      %s90 = sphi 0, %s88
      %s91 = sphi 0, %s90
      %s105 = sphi 0, %s91
      %s109 = sphi 0, %s109
      %s111 = sphi 0, %s109
      %s112 = sphi 0, %s111
      %s126 = sphi 0, %s112
      %s132 = sphi 0, %s134
      %s135 = sphi 0, %s132
      %s136 = sphi 0, %s135
      %s152 = sphi 0, %s136
    $region4: #{tpu_custom_call.1} parent=1 // loop_header_branch
      %15 = sbr.rel (%p13) target = $region8
    $region5: #{tpu_custom_call.1} parent=1 // loop_body
      %s17 = ssub.s32 %s12, 1
      %s18 = ssub.s32 %s12, 2
      %s19 = sadd.s32 %s12, 1
      %s20 = ssub.s32 %s12, %s19
      %p21 = scmp.eq.s32.totalorder %s20, 0
      %s23 = sadd.s32 %s22, 1
      %s24 = scalar_select %p21, %s22, %s23
      %p27 = pneg %p21
      %p28 = scmp.eq.s32.totalorder %s12, 1
      %p29 = por %p27, %p28
      %p30 = scmp.ne.s32.totalorder %s22, %s25
      %p31 = scmp.eq.s32.totalorder %s12, 0
      %p32 = por %p30, %p31
      %p33 = scmp.ne.s32.totalorder %s22, %s25
      %p34 = scmp.eq.s32.totalorder %s17, 1
      %p35 = por %p33, %p34
      %p36 = scmp.ne.s32.totalorder %s25, %s26
      %p37 = scmp.eq.s32.totalorder %s17, 0
      %p38 = por %p36, %p37
      %p39 = scmp.ne.s32.totalorder %s25, %s26
      %p40 = scmp.eq.s32.totalorder %s18, 1
      %p41 = por %p39, %p40
      %p43 = scmp.ne.s32.totalorder %s26, %s42
      %p44 = scmp.eq.s32.totalorder %s18, 0
      %p45 = por %p43, %p44
      %s47 = sadd.s32 %s46, 1
      %p50 = scmp.eq.s32.totalorder %s12, 1
      %p51 = scmp.ne.s32.totalorder %s46, %s48
      %p52 = scmp.eq.s32.totalorder %s12, 0
      %p53 = por %p51, %p52
      %p54 = scmp.ne.s32.totalorder %s46, %s48
      %p55 = scmp.eq.s32.totalorder %s17, 1
      %p56 = por %p54, %p55
      %p57 = scmp.ne.s32.totalorder %s48, %s49
      %p58 = scmp.eq.s32.totalorder %s17, 0
      %p59 = por %p57, %p58
      %p60 = scmp.ne.s32.totalorder %s48, %s49
      %p61 = scmp.eq.s32.totalorder %s18, 1
      %p62 = por %p60, %p61
      %p64 = scmp.ne.s32.totalorder %s49, %s63
      %p65 = scmp.eq.s32.totalorder %s18, 0
      %p66 = por %p64, %p65
      %s68 = sadd.s32 %s67, 1
      %p71 = scmp.eq.s32.totalorder %s12, 1
      %p72 = scmp.ne.s32.totalorder %s67, %s69
      %p73 = scmp.eq.s32.totalorder %s12, 0
      %p74 = por %p72, %p73
      %p75 = scmp.ne.s32.totalorder %s67, %s69
      %p76 = scmp.eq.s32.totalorder %s17, 1
      %p77 = por %p75, %p76
      %p78 = scmp.ne.s32.totalorder %s69, %s70
      %p79 = scmp.eq.s32.totalorder %s17, 0
      %p80 = por %p78, %p79
      %p81 = scmp.ne.s32.totalorder %s69, %s70
      %p82 = scmp.eq.s32.totalorder %s18, 1
      %p83 = por %p81, %p82
      %p85 = scmp.ne.s32.totalorder %s70, %s84
      %p86 = scmp.eq.s32.totalorder %s18, 0
      %p87 = por %p85, %p86
      %s89 = sadd.s32 %s88, 1
      %p92 = scmp.eq.s32.totalorder %s12, 1
      %p93 = scmp.ne.s32.totalorder %s88, %s90
      %p94 = scmp.eq.s32.totalorder %s12, 0
      %p95 = por %p93, %p94
      %p96 = scmp.ne.s32.totalorder %s88, %s90
      %p97 = scmp.eq.s32.totalorder %s17, 1
      %p98 = por %p96, %p97
      %p99 = scmp.ne.s32.totalorder %s90, %s91
      %p100 = scmp.eq.s32.totalorder %s17, 0
      %p101 = por %p99, %p100
      %p102 = scmp.ne.s32.totalorder %s90, %s91
      %p103 = scmp.eq.s32.totalorder %s18, 1
      %p104 = por %p102, %p103
      %p106 = scmp.ne.s32.totalorder %s91, %s105
      %p107 = scmp.eq.s32.totalorder %s18, 0
      %p108 = por %p106, %p107
      %s110 = sadd.s32 %s109, 1
      %p113 = scmp.eq.s32.totalorder %s12, 1
      %p114 = scmp.ne.s32.totalorder %s109, %s111
      %p115 = scmp.eq.s32.totalorder %s12, 0
      %p116 = por %p114, %p115
      %p117 = scmp.ne.s32.totalorder %s109, %s111
      %p118 = scmp.eq.s32.totalorder %s17, 1
      %p119 = por %p117, %p118
      %p120 = scmp.ne.s32.totalorder %s111, %s112
      %p121 = scmp.eq.s32.totalorder %s17, 0
      %p122 = por %p120, %p121
      %p123 = scmp.ne.s32.totalorder %s111, %s112
      %p124 = scmp.eq.s32.totalorder %s18, 1
      %p125 = por %p123, %p124
      %p127 = scmp.ne.s32.totalorder %s112, %s126
      %p128 = scmp.eq.s32.totalorder %s18, 0
      %p129 = por %p127, %p128
      %s130 = ssub.s32 %s12, %s19
      %p131 = scmp.eq.s32.totalorder %s130, 0
      %s133 = sadd.s32 %s132, 1
      %s134 = scalar_select %p131, %s132, %s133
      %p137 = pneg %p131
      %p138 = scmp.eq.s32.totalorder %s12, 1
      %p139 = por %p137, %p138
      %p140 = scmp.ne.s32.totalorder %s132, %s135
      %p141 = scmp.eq.s32.totalorder %s12, 0
      %p142 = por %p140, %p141
      %p143 = scmp.ne.s32.totalorder %s132, %s135
      %p144 = scmp.eq.s32.totalorder %s17, 1
      %p145 = por %p143, %p144
      %p146 = scmp.ne.s32.totalorder %s135, %s136
      %p147 = scmp.eq.s32.totalorder %s17, 0
      %p148 = por %p146, %p147
      %p149 = scmp.ne.s32.totalorder %s135, %s136
      %p150 = scmp.eq.s32.totalorder %s18, 1
      %p151 = por %p149, %p150
      %p153 = scmp.ne.s32.totalorder %s136, %s152
      %p154 = scmp.eq.s32.totalorder %s18, 0
      %p155 = por %p153, %p154
      %p156 = scmp.le.s32.totalorder 1, %s12
      %p157 = scmp.lt.s32.totalorder %s12, 3
      %p158 = pnand %p156, %p157
      %p159 = pneg %p158
      // Predicated region
      $region9: #{tpu_custom_call.1} parent=5 // pred_check
        _
      $region10: #{tpu_custom_call.1} parent=5 // pred_check_branch
        %161 = sbr.rel (%p158) target = $region12
      $region11: #{tpu_custom_call.1} parent=5 // pred_region
        %s162 = ssub.s32 %s12, 1
        // Predicated region
        $region13: #{tpu_custom_call.1} parent=11 // pred_check
          %p163 = pneg %p59
        $region14: #{tpu_custom_call.1} parent=11 // pred_check_branch
          %165 = sbr.rel (%p163) target = $region16
        $region15: #{tpu_custom_call.1} parent=11 // pred_region
          _
        $region16: #{tpu_custom_call.1} parent=11 // pred_fallthru
          _
        // Predicated region
        $region17: #{tpu_custom_call.1} parent=11 // pred_check
          %p166 = pneg %p80
        $region18: #{tpu_custom_call.1} parent=11 // pred_check_branch
          %168 = sbr.rel (%p166) target = $region20
        $region19: #{tpu_custom_call.1} parent=11 // pred_region
          _
        $region20: #{tpu_custom_call.1} parent=11 // pred_fallthru
          _
        // Predicated region
        $region21: #{tpu_custom_call.1} parent=11 // pred_check
          %p169 = pneg %p101
        $region22: #{tpu_custom_call.1} parent=11 // pred_check_branch
          %171 = sbr.rel (%p169) target = $region24
        $region23: #{tpu_custom_call.1} parent=11 // pred_region
          %173 = vsyncadd [#allocation4], 0
          %s174 = sshll.u32 %s3, 4
          %s175 = int_to_ptr.hbm [resolvable:$true] %s174
          %s176 = sshll.u32 [#allocation3], 4
          %s177 = int_to_ptr.vmem [resolvable:$true] %s176
          %182 = dma.hbm_to_vmem [thread:$0]  %s175, 18432, %s177, [#allocation4], 128, 128, 8
        $region24: #{tpu_custom_call.1} parent=11 // pred_fallthru
          _
        // Predicated region
        $region25: #{tpu_custom_call.1} parent=11 // pred_check
          %p183 = pneg %p122
        $region26: #{tpu_custom_call.1} parent=11 // pred_check_branch
          %185 = sbr.rel (%p183) target = $region28
        $region27: #{tpu_custom_call.1} parent=11 // pred_region
          _
        $region28: #{tpu_custom_call.1} parent=11 // pred_fallthru
          _
      $region12: #{tpu_custom_call.1} parent=5 // pred_fallthru
        _
      %p186 = scmp.lt.s32.totalorder %s12, 2
      // Predicated region
      $region29: #{tpu_custom_call.1} parent=5 // pred_check
        %p187 = pneg %p186
      $region30: #{tpu_custom_call.1} parent=5 // pred_check_branch
        %189 = sbr.rel (%p187) target = $region32
      $region31: #{tpu_custom_call.1} parent=5 // pred_region
        // Predicated region
        $region33: #{tpu_custom_call.1} parent=31 // pred_check
          %p190 = pneg %p32
        $region34: #{tpu_custom_call.1} parent=31 // pred_check_branch
          %192 = sbr.rel (%p190) target = $region36
        $region35: #{tpu_custom_call.1} parent=31 // pred_region
          %p193 = scmp.lt.s32.totalorder %s12, 1
          %s194 = scalar_select %p193, %s12, 1
          %s195 = smul.addr %s194, 54
          %s196 = smul.addr %s195, 8
          %s197 = scalar_lea.vmem %s0, %s196
        $region36: #{tpu_custom_call.1} parent=31 // pred_fallthru
          _
      $region32: #{tpu_custom_call.1} parent=5 // pred_fallthru
        _
      %p198 = scmp.le.s32.totalorder 1, %s12
      %p199 = scmp.lt.s32.totalorder %s12, 3
      %p200 = pnand %p198, %p199
      %p201 = pneg %p200
      // Predicated region
      $region37: #{tpu_custom_call.1} parent=5 // pred_check
        _
      $region38: #{tpu_custom_call.1} parent=5 // pred_check_branch
        %203 = sbr.rel (%p200) target = $region40
      $region39: #{tpu_custom_call.1} parent=5 // pred_region
        %s204 = ssub.s32 %s12, 1
        // Predicated region
        $region41: #{tpu_custom_call.1} parent=39 // pred_check
          %p205 = pneg %p101
        $region42: #{tpu_custom_call.1} parent=39 // pred_check_branch
          %207 = sbr.rel (%p205) target = $region44
        $region43: #{tpu_custom_call.1} parent=39 // pred_region
          %209 = dma.done [#allocation4], 18432
        $region44: #{tpu_custom_call.1} parent=39 // pred_fallthru
          _
        %p210 = scmp.lt.s32.totalorder %s17, 1
        %s211 = scalar_select %p210, %s17, 1
        %s212 = smul.addr %s211, 54
        %s213 = smul.addr %s212, 8
        %s214 = scalar_lea.vmem %s0, %s213
        %p215 = pneg %p38
        %p216 = pneg %p35
        %p217 = pneg %p59
        %p218 = pneg %p56
        %p219 = pneg %p80
        %p220 = pneg %p77
        %p221 = pneg %p101
        %p222 = pneg %p98
        %p223 = pneg %p122
        %p224 = pneg %p119
        %p225 = pneg %p148
        %p226 = pneg %p145
        %p227 = scmp.lt.s32.totalorder %s17, 1
        %s228 = scalar_select %p227, %s17, 1
        %s229 = smul.addr %s228, 32
        %s230 = smul.addr %s229, 8
        %s231 = scalar_lea.vmem %s5, %s230
        %p232 = scmp.lt.s32.totalorder %s17, 1
        %s233 = scalar_select %p232, %s17, 1
        %s234 = smul.addr %s233, 54
        %s235 = smul.addr %s234, 8
        %s236 = scalar_lea.vmem %s0, %s235
        %p237 = scmp.lt.s32.totalorder %s17, 1
        %s238 = scalar_select %p237, %s17, 1
        %s239 = smul.addr %s238, 32
        %s240 = smul.addr %s239, 8
        %s241 = scalar_lea.vmem %s5, %s240
        %v242 = vld [vmem:[%s236] sm:$0xff]
        %v243 = vld [vmem:[%s236 + $0x8] sm:$0xff]
        %v244 = vld [vmem:[%s236 + $0x18] sm:$0xff]
        %v245 = vld [vmem:[%s236 + $0x20] sm:$0xff]
        %v246 = vld [vmem:[%s236 + $0x30] sm:$0xff]
        %v247 = vld [vmem:[%s236 + $0x38] sm:$0xff]
        %v248 = vld [vmem:[%s236 + $0x48] sm:$0xff]
        %v249 = vld [vmem:[%s236 + $0x50] sm:$0xff]
        %v250 = vld [vmem:[%s236 + $0x60] sm:$0xff]
        %v251 = vld [vmem:[%s236 + $0x68] sm:$0xff]
        %v252 = vld [vmem:[%s236 + $0x78] sm:$0xff]
        %v253 = vld [vmem:[%s236 + $0x80] sm:$0xff]
        %v254 = vld [vmem:[%s236 + $0x90] sm:$0xff]
        %v255 = vld [vmem:[%s236 + $0x98] sm:$0xff]
        %v256 = vld [vmem:[%s236 + $0xa8] sm:$0xff]
        %v257 = vld [vmem:[%s236 + $0xb0] sm:$0xff]
        %v258 = vld [vmem:[%s236 + $0xc0] sm:$0xff]
        %v259 = vld [vmem:[%s236 + $0xc8] sm:$0xff]
        %v260 = vld [vmem:[%s236 + $0xd8] sm:$0xff]
        %v261 = vld [vmem:[%s236 + $0xe0] sm:$0xff]
        %v262 = vld [vmem:[%s236 + $0xf0] sm:$0xff]
        %v263 = vld [vmem:[%s236 + $0xf8] sm:$0xff]
        %v264 = vld [vmem:[%s236 + $0x108] sm:$0xff]
        %v265 = vld [vmem:[%s236 + $0x110] sm:$0xff]
        %v266 = vld [vmem:[%s236 + $0x120] sm:$0xff]
        %v267 = vld [vmem:[%s236 + $0x128] sm:$0xff]
        %v268 = vld [vmem:[%s236 + $0x138] sm:$0xff]
        %v269 = vld [vmem:[%s236 + $0x140] sm:$0xff]
        %v270 = vld [vmem:[%s236 + $0x150] sm:$0xff]
        %v271 = vld [vmem:[%s236 + $0x158] sm:$0xff]
        %v272 = vld [vmem:[%s236 + $0x168] sm:$0xff]
        %v273 = vld [vmem:[%s236 + $0x170] sm:$0xff]
        %v274 = vld [vmem:[%s236 + $0x1] sm:$0xff]
        %v275 = vld [vmem:[%s236 + $0x9] sm:$0xff]
        %v276 = vld [vmem:[%s236 + $0x19] sm:$0xff]
        %v277 = vld [vmem:[%s236 + $0x21] sm:$0xff]
        %v278 = vld [vmem:[%s236 + $0x31] sm:$0xff]
        %v279 = vld [vmem:[%s236 + $0x39] sm:$0xff]
        %v280 = vld [vmem:[%s236 + $0x49] sm:$0xff]
        %v281 = vld [vmem:[%s236 + $0x51] sm:$0xff]
        %v282 = vld [vmem:[%s236 + $0x61] sm:$0xff]
        %v283 = vld [vmem:[%s236 + $0x69] sm:$0xff]
        %v284 = vld [vmem:[%s236 + $0x79] sm:$0xff]
        %v285 = vld [vmem:[%s236 + $0x81] sm:$0xff]
        %v286 = vld [vmem:[%s236 + $0x91] sm:$0xff]
        %v287 = vld [vmem:[%s236 + $0x99] sm:$0xff]
        %v288 = vld [vmem:[%s236 + $0xa9] sm:$0xff]
        %v289 = vld [vmem:[%s236 + $0xb1] sm:$0xff]
        %v290 = vld [vmem:[%s236 + $0xc1] sm:$0xff]
        %v291 = vld [vmem:[%s236 + $0xc9] sm:$0xff]
        %v292 = vld [vmem:[%s236 + $0xd9] sm:$0xff]
        %v293 = vld [vmem:[%s236 + $0xe1] sm:$0xff]
        %v294 = vld [vmem:[%s236 + $0xf1] sm:$0xff]
        %v295 = vld [vmem:[%s236 + $0xf9] sm:$0xff]
        %v296 = vld [vmem:[%s236 + $0x109] sm:$0xff]
        %v297 = vld [vmem:[%s236 + $0x111] sm:$0xff]
        %v298 = vld [vmem:[%s236 + $0x121] sm:$0xff]
        %v299 = vld [vmem:[%s236 + $0x129] sm:$0xff]
        %v300 = vld [vmem:[%s236 + $0x139] sm:$0xff]
        %v301 = vld [vmem:[%s236 + $0x141] sm:$0xff]
        %v302 = vld [vmem:[%s236 + $0x151] sm:$0xff]
        %v303 = vld [vmem:[%s236 + $0x159] sm:$0xff]
        %v304 = vld [vmem:[%s236 + $0x169] sm:$0xff]
        %v305 = vld [vmem:[%s236 + $0x171] sm:$0xff]
        %v306 = vld [vmem:[%s236 + $0x2] sm:$0xff]
        %v307 = vld [vmem:[%s236 + $0xa] sm:$0xff]
        %v308 = vld [vmem:[%s236 + $0x1a] sm:$0xff]
        %v309 = vld [vmem:[%s236 + $0x22] sm:$0xff]
        %v310 = vld [vmem:[%s236 + $0x32] sm:$0xff]
        %v311 = vld [vmem:[%s236 + $0x3a] sm:$0xff]
        %v312 = vld [vmem:[%s236 + $0x4a] sm:$0xff]
        %v313 = vld [vmem:[%s236 + $0x52] sm:$0xff]
        %v314 = vld [vmem:[%s236 + $0x62] sm:$0xff]
        %v315 = vld [vmem:[%s236 + $0x6a] sm:$0xff]
        %v316 = vld [vmem:[%s236 + $0x7a] sm:$0xff]
        %v317 = vld [vmem:[%s236 + $0x82] sm:$0xff]
        %v318 = vld [vmem:[%s236 + $0x92] sm:$0xff]
        %v319 = vld [vmem:[%s236 + $0x9a] sm:$0xff]
        %v320 = vld [vmem:[%s236 + $0xaa] sm:$0xff]
        %v321 = vld [vmem:[%s236 + $0xb2] sm:$0xff]
        %v322 = vld [vmem:[%s236 + $0xc2] sm:$0xff]
        %v323 = vld [vmem:[%s236 + $0xca] sm:$0xff]
        %v324 = vld [vmem:[%s236 + $0xda] sm:$0xff]
        %v325 = vld [vmem:[%s236 + $0xe2] sm:$0xff]
        %v326 = vld [vmem:[%s236 + $0xf2] sm:$0xff]
        %v327 = vld [vmem:[%s236 + $0xfa] sm:$0xff]
        %v328 = vld [vmem:[%s236 + $0x10a] sm:$0xff]
        %v329 = vld [vmem:[%s236 + $0x112] sm:$0xff]
        %v330 = vld [vmem:[%s236 + $0x122] sm:$0xff]
        %v331 = vld [vmem:[%s236 + $0x12a] sm:$0xff]
        %v332 = vld [vmem:[%s236 + $0x13a] sm:$0xff]
        %v333 = vld [vmem:[%s236 + $0x142] sm:$0xff]
        %v334 = vld [vmem:[%s236 + $0x152] sm:$0xff]
        %v335 = vld [vmem:[%s236 + $0x15a] sm:$0xff]
        %v336 = vld [vmem:[%s236 + $0x16a] sm:$0xff]
        %v337 = vld [vmem:[%s236 + $0x172] sm:$0xff]
        %s338 = scalar_lea.vmem %s236, 24
        %v339 = vld [vmem:[%s338] sm:$0xff]
        %v340 = vld [vmem:[%s338 + $0x8] sm:$0xff]
        %v341 = vld [vmem:[%s338 + $0x18] sm:$0xff]
        %v342 = vld [vmem:[%s338 + $0x20] sm:$0xff]
        %v343 = vld [vmem:[%s338 + $0x30] sm:$0xff]
        %v344 = vld [vmem:[%s338 + $0x38] sm:$0xff]
        %v345 = vld [vmem:[%s338 + $0x48] sm:$0xff]
        %v346 = vld [vmem:[%s338 + $0x50] sm:$0xff]
        %v347 = vld [vmem:[%s338 + $0x60] sm:$0xff]
        %v348 = vld [vmem:[%s338 + $0x68] sm:$0xff]
        %v349 = vld [vmem:[%s338 + $0x78] sm:$0xff]
        %v350 = vld [vmem:[%s338 + $0x80] sm:$0xff]
        %v351 = vld [vmem:[%s338 + $0x90] sm:$0xff]
        %v352 = vld [vmem:[%s338 + $0x98] sm:$0xff]
        %v353 = vld [vmem:[%s338 + $0xa8] sm:$0xff]
        %v354 = vld [vmem:[%s338 + $0xb0] sm:$0xff]
        %v355 = vld [vmem:[%s338 + $0xc0] sm:$0xff]
        %v356 = vld [vmem:[%s338 + $0xc8] sm:$0xff]
        %v357 = vld [vmem:[%s338 + $0xd8] sm:$0xff]
        %v358 = vld [vmem:[%s338 + $0xe0] sm:$0xff]
        %v359 = vld [vmem:[%s338 + $0xf0] sm:$0xff]
        %v360 = vld [vmem:[%s338 + $0xf8] sm:$0xff]
        %v361 = vld [vmem:[%s338 + $0x108] sm:$0xff]
        %v362 = vld [vmem:[%s338 + $0x110] sm:$0xff]
        %v363 = vld [vmem:[%s338 + $0x120] sm:$0xff]
        %v364 = vld [vmem:[%s338 + $0x128] sm:$0xff]
        %v365 = vld [vmem:[%s338 + $0x138] sm:$0xff]
        %v366 = vld [vmem:[%s338 + $0x140] sm:$0xff]
        %v367 = vld [vmem:[%s338 + $0x150] sm:$0xff]
        %v368 = vld [vmem:[%s338 + $0x158] sm:$0xff]
        %v369 = vld [vmem:[%s338 + $0x168] sm:$0xff]
        %v370 = vld [vmem:[%s338 + $0x170] sm:$0xff]
        %v371 = vld [vmem:[%s338 + $0x1] sm:$0xff]
        %v372 = vld [vmem:[%s338 + $0x9] sm:$0xff]
        %v373 = vld [vmem:[%s338 + $0x19] sm:$0xff]
        %v374 = vld [vmem:[%s338 + $0x21] sm:$0xff]
        %v375 = vld [vmem:[%s338 + $0x31] sm:$0xff]
        %v376 = vld [vmem:[%s338 + $0x39] sm:$0xff]
        %v377 = vld [vmem:[%s338 + $0x49] sm:$0xff]
        %v378 = vld [vmem:[%s338 + $0x51] sm:$0xff]
        %v379 = vld [vmem:[%s338 + $0x61] sm:$0xff]
        %v380 = vld [vmem:[%s338 + $0x69] sm:$0xff]
        %v381 = vld [vmem:[%s338 + $0x79] sm:$0xff]
        %v382 = vld [vmem:[%s338 + $0x81] sm:$0xff]
        %v383 = vld [vmem:[%s338 + $0x91] sm:$0xff]
        %v384 = vld [vmem:[%s338 + $0x99] sm:$0xff]
        %v385 = vld [vmem:[%s338 + $0xa9] sm:$0xff]
        %v386 = vld [vmem:[%s338 + $0xb1] sm:$0xff]
        %v387 = vld [vmem:[%s338 + $0xc1] sm:$0xff]
        %v388 = vld [vmem:[%s338 + $0xc9] sm:$0xff]
        %v389 = vld [vmem:[%s338 + $0xd9] sm:$0xff]
        %v390 = vld [vmem:[%s338 + $0xe1] sm:$0xff]
        %v391 = vld [vmem:[%s338 + $0xf1] sm:$0xff]
        %v392 = vld [vmem:[%s338 + $0xf9] sm:$0xff]
        %v393 = vld [vmem:[%s338 + $0x109] sm:$0xff]
        %v394 = vld [vmem:[%s338 + $0x111] sm:$0xff]
        %v395 = vld [vmem:[%s338 + $0x121] sm:$0xff]
        %v396 = vld [vmem:[%s338 + $0x129] sm:$0xff]
        %v397 = vld [vmem:[%s338 + $0x139] sm:$0xff]
        %v398 = vld [vmem:[%s338 + $0x141] sm:$0xff]
        %v399 = vld [vmem:[%s338 + $0x151] sm:$0xff]
        %v400 = vld [vmem:[%s338 + $0x159] sm:$0xff]
        %v401 = vld [vmem:[%s338 + $0x169] sm:$0xff]
        %v402 = vld [vmem:[%s338 + $0x171] sm:$0xff]
        %v403 = vld [vmem:[%s338 + $0x2] sm:$0xff]
        %v404 = vld [vmem:[%s338 + $0xa] sm:$0xff]
        %v405 = vld [vmem:[%s338 + $0x1a] sm:$0xff]
        %v406 = vld [vmem:[%s338 + $0x22] sm:$0xff]
        %v407 = vld [vmem:[%s338 + $0x32] sm:$0xff]
        %v408 = vld [vmem:[%s338 + $0x3a] sm:$0xff]
        %v409 = vld [vmem:[%s338 + $0x4a] sm:$0xff]
        %v410 = vld [vmem:[%s338 + $0x52] sm:$0xff]
        %v411 = vld [vmem:[%s338 + $0x62] sm:$0xff]
        %v412 = vld [vmem:[%s338 + $0x6a] sm:$0xff]
        %v413 = vld [vmem:[%s338 + $0x7a] sm:$0xff]
        %v414 = vld [vmem:[%s338 + $0x82] sm:$0xff]
        %v415 = vld [vmem:[%s338 + $0x92] sm:$0xff]
        %v416 = vld [vmem:[%s338 + $0x9a] sm:$0xff]
        %v417 = vld [vmem:[%s338 + $0xaa] sm:$0xff]
        %v418 = vld [vmem:[%s338 + $0xb2] sm:$0xff]
        %v419 = vld [vmem:[%s338 + $0xc2] sm:$0xff]
        %v420 = vld [vmem:[%s338 + $0xca] sm:$0xff]
        %v421 = vld [vmem:[%s338 + $0xda] sm:$0xff]
        %v422 = vld [vmem:[%s338 + $0xe2] sm:$0xff]
        %v423 = vld [vmem:[%s338 + $0xf2] sm:$0xff]
        %v424 = vld [vmem:[%s338 + $0xfa] sm:$0xff]
        %v425 = vld [vmem:[%s338 + $0x10a] sm:$0xff]
        %v426 = vld [vmem:[%s338 + $0x112] sm:$0xff]
        %v427 = vld [vmem:[%s338 + $0x122] sm:$0xff]
        %v428 = vld [vmem:[%s338 + $0x12a] sm:$0xff]
        %v429 = vld [vmem:[%s338 + $0x13a] sm:$0xff]
        %v430 = vld [vmem:[%s338 + $0x142] sm:$0xff]
        %v431 = vld [vmem:[%s338 + $0x152] sm:$0xff]
        %v432 = vld [vmem:[%s338 + $0x15a] sm:$0xff]
        %v433 = vld [vmem:[%s338 + $0x16a] sm:$0xff]
        %v434 = vld [vmem:[%s338 + $0x172] sm:$0xff]
        %s435 = scalar_lea.vmem %s236, 48
        %v436 = vld [vmem:[%s435] sm:$0xff]
        %v437 = vld [vmem:[%s435 + $0x8] sm:$0xff]
        %v438 = vld [vmem:[%s435 + $0x18] sm:$0xff]
        %v439 = vld [vmem:[%s435 + $0x20] sm:$0xff]
        %v440 = vld [vmem:[%s435 + $0x30] sm:$0xff]
        %v441 = vld [vmem:[%s435 + $0x38] sm:$0xff]
        %v442 = vld [vmem:[%s435 + $0x48] sm:$0xff]
        %v443 = vld [vmem:[%s435 + $0x50] sm:$0xff]
        %v444 = vld [vmem:[%s435 + $0x60] sm:$0xff]
        %v445 = vld [vmem:[%s435 + $0x68] sm:$0xff]
        %v446 = vld [vmem:[%s435 + $0x78] sm:$0xff]
        %v447 = vld [vmem:[%s435 + $0x80] sm:$0xff]
        %v448 = vld [vmem:[%s435 + $0x90] sm:$0xff]
        %v449 = vld [vmem:[%s435 + $0x98] sm:$0xff]
        %v450 = vld [vmem:[%s435 + $0xa8] sm:$0xff]
        %v451 = vld [vmem:[%s435 + $0xb0] sm:$0xff]
        %v452 = vld [vmem:[%s435 + $0xc0] sm:$0xff]
        %v453 = vld [vmem:[%s435 + $0xc8] sm:$0xff]
        %v454 = vld [vmem:[%s435 + $0xd8] sm:$0xff]
        %v455 = vld [vmem:[%s435 + $0xe0] sm:$0xff]
        %v456 = vld [vmem:[%s435 + $0xf0] sm:$0xff]
        %v457 = vld [vmem:[%s435 + $0xf8] sm:$0xff]
        %v458 = vld [vmem:[%s435 + $0x108] sm:$0xff]
        %v459 = vld [vmem:[%s435 + $0x110] sm:$0xff]
        %v460 = vld [vmem:[%s435 + $0x120] sm:$0xff]
        %v461 = vld [vmem:[%s435 + $0x128] sm:$0xff]
        %v462 = vld [vmem:[%s435 + $0x138] sm:$0xff]
        %v463 = vld [vmem:[%s435 + $0x140] sm:$0xff]
        %v464 = vld [vmem:[%s435 + $0x150] sm:$0xff]
        %v465 = vld [vmem:[%s435 + $0x158] sm:$0xff]
        %v466 = vld [vmem:[%s435 + $0x168] sm:$0xff]
        %v467 = vld [vmem:[%s435 + $0x170] sm:$0xff]
        %v468 = vld [vmem:[%s435 + $0x1] sm:$0xff]
        %v469 = vld [vmem:[%s435 + $0x9] sm:$0xff]
        %v470 = vld [vmem:[%s435 + $0x19] sm:$0xff]
        %v471 = vld [vmem:[%s435 + $0x21] sm:$0xff]
        %v472 = vld [vmem:[%s435 + $0x31] sm:$0xff]
        %v473 = vld [vmem:[%s435 + $0x39] sm:$0xff]
        %v474 = vld [vmem:[%s435 + $0x49] sm:$0xff]
        %v475 = vld [vmem:[%s435 + $0x51] sm:$0xff]
        %v476 = vld [vmem:[%s435 + $0x61] sm:$0xff]
        %v477 = vld [vmem:[%s435 + $0x69] sm:$0xff]
        %v478 = vld [vmem:[%s435 + $0x79] sm:$0xff]
        %v479 = vld [vmem:[%s435 + $0x81] sm:$0xff]
        %v480 = vld [vmem:[%s435 + $0x91] sm:$0xff]
        %v481 = vld [vmem:[%s435 + $0x99] sm:$0xff]
        %v482 = vld [vmem:[%s435 + $0xa9] sm:$0xff]
        %v483 = vld [vmem:[%s435 + $0xb1] sm:$0xff]
        %v484 = vld [vmem:[%s435 + $0xc1] sm:$0xff]
        %v485 = vld [vmem:[%s435 + $0xc9] sm:$0xff]
        %v486 = vld [vmem:[%s435 + $0xd9] sm:$0xff]
        %v487 = vld [vmem:[%s435 + $0xe1] sm:$0xff]
        %v488 = vld [vmem:[%s435 + $0xf1] sm:$0xff]
        %v489 = vld [vmem:[%s435 + $0xf9] sm:$0xff]
        %v490 = vld [vmem:[%s435 + $0x109] sm:$0xff]
        %v491 = vld [vmem:[%s435 + $0x111] sm:$0xff]
        %v492 = vld [vmem:[%s435 + $0x121] sm:$0xff]
        %v493 = vld [vmem:[%s435 + $0x129] sm:$0xff]
        %v494 = vld [vmem:[%s435 + $0x139] sm:$0xff]
        %v495 = vld [vmem:[%s435 + $0x141] sm:$0xff]
        %v496 = vld [vmem:[%s435 + $0x151] sm:$0xff]
        %v497 = vld [vmem:[%s435 + $0x159] sm:$0xff]
        %v498 = vld [vmem:[%s435 + $0x169] sm:$0xff]
        %v499 = vld [vmem:[%s435 + $0x171] sm:$0xff]
        %v500 = vld [vmem:[%s435 + $0x2] sm:$0xff]
        %v501 = vld [vmem:[%s435 + $0xa] sm:$0xff]
        %v502 = vld [vmem:[%s435 + $0x1a] sm:$0xff]
        %v503 = vld [vmem:[%s435 + $0x22] sm:$0xff]
        %v504 = vld [vmem:[%s435 + $0x32] sm:$0xff]
        %v505 = vld [vmem:[%s435 + $0x3a] sm:$0xff]
        %v506 = vld [vmem:[%s435 + $0x4a] sm:$0xff]
        %v507 = vld [vmem:[%s435 + $0x52] sm:$0xff]
        %v508 = vld [vmem:[%s435 + $0x62] sm:$0xff]
        %v509 = vld [vmem:[%s435 + $0x6a] sm:$0xff]
        %v510 = vld [vmem:[%s435 + $0x7a] sm:$0xff]
        %v511 = vld [vmem:[%s435 + $0x82] sm:$0xff]
        %v512 = vld [vmem:[%s435 + $0x92] sm:$0xff]
        %v513 = vld [vmem:[%s435 + $0x9a] sm:$0xff]
        %v514 = vld [vmem:[%s435 + $0xaa] sm:$0xff]
        %v515 = vld [vmem:[%s435 + $0xb2] sm:$0xff]
        %v516 = vld [vmem:[%s435 + $0xc2] sm:$0xff]
        %v517 = vld [vmem:[%s435 + $0xca] sm:$0xff]
        %v518 = vld [vmem:[%s435 + $0xda] sm:$0xff]
        %v519 = vld [vmem:[%s435 + $0xe2] sm:$0xff]
        %v520 = vld [vmem:[%s435 + $0xf2] sm:$0xff]
        %v521 = vld [vmem:[%s435 + $0xfa] sm:$0xff]
        %v522 = vld [vmem:[%s435 + $0x10a] sm:$0xff]
        %v523 = vld [vmem:[%s435 + $0x112] sm:$0xff]
        %v524 = vld [vmem:[%s435 + $0x122] sm:$0xff]
        %v525 = vld [vmem:[%s435 + $0x12a] sm:$0xff]
        %v526 = vld [vmem:[%s435 + $0x13a] sm:$0xff]
        %v527 = vld [vmem:[%s435 + $0x142] sm:$0xff]
        %v528 = vld [vmem:[%s435 + $0x152] sm:$0xff]
        %v529 = vld [vmem:[%s435 + $0x15a] sm:$0xff]
        %v530 = vld [vmem:[%s435 + $0x16a] sm:$0xff]
        %v531 = vld [vmem:[%s435 + $0x172] sm:$0xff]
        %564 = vrot.lane.b32.xlu0 %v274, 4
        %v565 = vpop.permute.xlu0 %564
        %566 = vrot.lane.b32.xlu0 %v275, 4
        %v567 = vpop.permute.xlu0 %566
        %568 = vrot.lane.b32.xlu0 %v276, 4
        %v569 = vpop.permute.xlu0 %568
        %570 = vrot.lane.b32.xlu0 %v277, 4
        %v571 = vpop.permute.xlu0 %570
        %572 = vrot.lane.b32.xlu0 %v278, 4
        %v573 = vpop.permute.xlu0 %572
        %574 = vrot.lane.b32.xlu0 %v279, 4
        %v575 = vpop.permute.xlu0 %574
        %576 = vrot.lane.b32.xlu0 %v280, 4
        %v577 = vpop.permute.xlu0 %576
        %578 = vrot.lane.b32.xlu0 %v281, 4
        %v579 = vpop.permute.xlu0 %578
        %580 = vrot.lane.b32.xlu0 %v282, 4
        %v581 = vpop.permute.xlu0 %580
        %582 = vrot.lane.b32.xlu0 %v283, 4
        %v583 = vpop.permute.xlu0 %582
        %584 = vrot.lane.b32.xlu0 %v284, 4
        %v585 = vpop.permute.xlu0 %584
        %586 = vrot.lane.b32.xlu0 %v285, 4
        %v587 = vpop.permute.xlu0 %586
        %588 = vrot.lane.b32.xlu0 %v286, 4
        %v589 = vpop.permute.xlu0 %588
        %590 = vrot.lane.b32.xlu0 %v287, 4
        %v591 = vpop.permute.xlu0 %590
        %592 = vrot.lane.b32.xlu0 %v288, 4
        %v593 = vpop.permute.xlu0 %592
        %594 = vrot.lane.b32.xlu0 %v289, 4
        %v595 = vpop.permute.xlu0 %594
        %596 = vrot.lane.b32.xlu0 %v290, 4
        %v597 = vpop.permute.xlu0 %596
        %598 = vrot.lane.b32.xlu0 %v291, 4
        %v599 = vpop.permute.xlu0 %598
        %600 = vrot.lane.b32.xlu0 %v292, 4
        %v601 = vpop.permute.xlu0 %600
        %602 = vrot.lane.b32.xlu0 %v293, 4
        %v603 = vpop.permute.xlu0 %602
        %604 = vrot.lane.b32.xlu0 %v294, 4
        %v605 = vpop.permute.xlu0 %604
        %606 = vrot.lane.b32.xlu0 %v295, 4
        %v607 = vpop.permute.xlu0 %606
        %608 = vrot.lane.b32.xlu0 %v296, 4
        %v609 = vpop.permute.xlu0 %608
        %610 = vrot.lane.b32.xlu0 %v297, 4
        %v611 = vpop.permute.xlu0 %610
        %612 = vrot.lane.b32.xlu0 %v298, 4
        %v613 = vpop.permute.xlu0 %612
        %614 = vrot.lane.b32.xlu0 %v299, 4
        %v615 = vpop.permute.xlu0 %614
        %616 = vrot.lane.b32.xlu0 %v300, 4
        %v617 = vpop.permute.xlu0 %616
        %618 = vrot.lane.b32.xlu0 %v301, 4
        %v619 = vpop.permute.xlu0 %618
        %620 = vrot.lane.b32.xlu0 %v302, 4
        %v621 = vpop.permute.xlu0 %620
        %622 = vrot.lane.b32.xlu0 %v303, 4
        %v623 = vpop.permute.xlu0 %622
        %624 = vrot.lane.b32.xlu0 %v304, 4
        %v625 = vpop.permute.xlu0 %624
        %626 = vrot.lane.b32.xlu0 %v305, 4
        %v627 = vpop.permute.xlu0 %626
        %692 = vrot.lane.b32.xlu0 %v306, 8
        %v693 = vpop.permute.xlu0 %692
        %694 = vrot.lane.b32.xlu0 %v307, 8
        %v695 = vpop.permute.xlu0 %694
        %696 = vrot.lane.b32.xlu0 %v308, 8
        %v697 = vpop.permute.xlu0 %696
        %698 = vrot.lane.b32.xlu0 %v309, 8
        %v699 = vpop.permute.xlu0 %698
        %700 = vrot.lane.b32.xlu0 %v310, 8
        %v701 = vpop.permute.xlu0 %700
        %702 = vrot.lane.b32.xlu0 %v311, 8
        %v703 = vpop.permute.xlu0 %702
        %704 = vrot.lane.b32.xlu0 %v312, 8
        %v705 = vpop.permute.xlu0 %704
        %706 = vrot.lane.b32.xlu0 %v313, 8
        %v707 = vpop.permute.xlu0 %706
        %708 = vrot.lane.b32.xlu0 %v314, 8
        %v709 = vpop.permute.xlu0 %708
        %710 = vrot.lane.b32.xlu0 %v315, 8
        %v711 = vpop.permute.xlu0 %710
        %712 = vrot.lane.b32.xlu0 %v316, 8
        %v713 = vpop.permute.xlu0 %712
        %714 = vrot.lane.b32.xlu0 %v317, 8
        %v715 = vpop.permute.xlu0 %714
        %716 = vrot.lane.b32.xlu0 %v318, 8
        %v717 = vpop.permute.xlu0 %716
        %718 = vrot.lane.b32.xlu0 %v319, 8
        %v719 = vpop.permute.xlu0 %718
        %720 = vrot.lane.b32.xlu0 %v320, 8
        %v721 = vpop.permute.xlu0 %720
        %722 = vrot.lane.b32.xlu0 %v321, 8
        %v723 = vpop.permute.xlu0 %722
        %724 = vrot.lane.b32.xlu0 %v322, 8
        %v725 = vpop.permute.xlu0 %724
        %726 = vrot.lane.b32.xlu0 %v323, 8
        %v727 = vpop.permute.xlu0 %726
        %728 = vrot.lane.b32.xlu0 %v324, 8
        %v729 = vpop.permute.xlu0 %728
        %730 = vrot.lane.b32.xlu0 %v325, 8
        %v731 = vpop.permute.xlu0 %730
        %732 = vrot.lane.b32.xlu0 %v326, 8
        %v733 = vpop.permute.xlu0 %732
        %734 = vrot.lane.b32.xlu0 %v327, 8
        %v735 = vpop.permute.xlu0 %734
        %736 = vrot.lane.b32.xlu0 %v328, 8
        %v737 = vpop.permute.xlu0 %736
        %738 = vrot.lane.b32.xlu0 %v329, 8
        %v739 = vpop.permute.xlu0 %738
        %740 = vrot.lane.b32.xlu0 %v330, 8
        %v741 = vpop.permute.xlu0 %740
        %742 = vrot.lane.b32.xlu0 %v331, 8
        %v743 = vpop.permute.xlu0 %742
        %744 = vrot.lane.b32.xlu0 %v332, 8
        %v745 = vpop.permute.xlu0 %744
        %746 = vrot.lane.b32.xlu0 %v333, 8
        %v747 = vpop.permute.xlu0 %746
        %748 = vrot.lane.b32.xlu0 %v334, 8
        %v749 = vpop.permute.xlu0 %748
        %750 = vrot.lane.b32.xlu0 %v335, 8
        %v751 = vpop.permute.xlu0 %750
        %752 = vrot.lane.b32.xlu0 %v336, 8
        %v753 = vpop.permute.xlu0 %752
        %754 = vrot.lane.b32.xlu0 %v337, 8
        %v755 = vpop.permute.xlu0 %754
        %820 = vrot.lane.b32.xlu0 %v339, 12
        %v821 = vpop.permute.xlu0 %820
        %822 = vrot.lane.b32.xlu0 %v340, 12
        %v823 = vpop.permute.xlu0 %822
        %824 = vrot.lane.b32.xlu0 %v341, 12
        %v825 = vpop.permute.xlu0 %824
        %826 = vrot.lane.b32.xlu0 %v342, 12
        %v827 = vpop.permute.xlu0 %826
        %828 = vrot.lane.b32.xlu0 %v343, 12
        %v829 = vpop.permute.xlu0 %828
        %830 = vrot.lane.b32.xlu0 %v344, 12
        %v831 = vpop.permute.xlu0 %830
        %832 = vrot.lane.b32.xlu0 %v345, 12
        %v833 = vpop.permute.xlu0 %832
        %834 = vrot.lane.b32.xlu0 %v346, 12
        %v835 = vpop.permute.xlu0 %834
        %836 = vrot.lane.b32.xlu0 %v347, 12
        %v837 = vpop.permute.xlu0 %836
        %838 = vrot.lane.b32.xlu0 %v348, 12
        %v839 = vpop.permute.xlu0 %838
        %840 = vrot.lane.b32.xlu0 %v349, 12
        %v841 = vpop.permute.xlu0 %840
        %842 = vrot.lane.b32.xlu0 %v350, 12
        %v843 = vpop.permute.xlu0 %842
        %844 = vrot.lane.b32.xlu0 %v351, 12
        %v845 = vpop.permute.xlu0 %844
        %846 = vrot.lane.b32.xlu0 %v352, 12
        %v847 = vpop.permute.xlu0 %846
        %848 = vrot.lane.b32.xlu0 %v353, 12
        %v849 = vpop.permute.xlu0 %848
        %850 = vrot.lane.b32.xlu0 %v354, 12
        %v851 = vpop.permute.xlu0 %850
        %852 = vrot.lane.b32.xlu0 %v355, 12
        %v853 = vpop.permute.xlu0 %852
        %854 = vrot.lane.b32.xlu0 %v356, 12
        %v855 = vpop.permute.xlu0 %854
        %856 = vrot.lane.b32.xlu0 %v357, 12
        %v857 = vpop.permute.xlu0 %856
        %858 = vrot.lane.b32.xlu0 %v358, 12
        %v859 = vpop.permute.xlu0 %858
        %860 = vrot.lane.b32.xlu0 %v359, 12
        %v861 = vpop.permute.xlu0 %860
        %862 = vrot.lane.b32.xlu0 %v360, 12
        %v863 = vpop.permute.xlu0 %862
        %864 = vrot.lane.b32.xlu0 %v361, 12
        %v865 = vpop.permute.xlu0 %864
        %866 = vrot.lane.b32.xlu0 %v362, 12
        %v867 = vpop.permute.xlu0 %866
        %868 = vrot.lane.b32.xlu0 %v363, 12
        %v869 = vpop.permute.xlu0 %868
        %870 = vrot.lane.b32.xlu0 %v364, 12
        %v871 = vpop.permute.xlu0 %870
        %872 = vrot.lane.b32.xlu0 %v365, 12
        %v873 = vpop.permute.xlu0 %872
        %874 = vrot.lane.b32.xlu0 %v366, 12
        %v875 = vpop.permute.xlu0 %874
        %876 = vrot.lane.b32.xlu0 %v367, 12
        %v877 = vpop.permute.xlu0 %876
        %878 = vrot.lane.b32.xlu0 %v368, 12
        %v879 = vpop.permute.xlu0 %878
        %880 = vrot.lane.b32.xlu0 %v369, 12
        %v881 = vpop.permute.xlu0 %880
        %882 = vrot.lane.b32.xlu0 %v370, 12
        %v883 = vpop.permute.xlu0 %882
        %948 = vrot.lane.b32.xlu0 %v371, 16
        %v949 = vpop.permute.xlu0 %948
        %950 = vrot.lane.b32.xlu0 %v372, 16
        %v951 = vpop.permute.xlu0 %950
        %952 = vrot.lane.b32.xlu0 %v373, 16
        %v953 = vpop.permute.xlu0 %952
        %954 = vrot.lane.b32.xlu0 %v374, 16
        %v955 = vpop.permute.xlu0 %954
        %956 = vrot.lane.b32.xlu0 %v375, 16
        %v957 = vpop.permute.xlu0 %956
        %958 = vrot.lane.b32.xlu0 %v376, 16
        %v959 = vpop.permute.xlu0 %958
        %960 = vrot.lane.b32.xlu0 %v377, 16
        %v961 = vpop.permute.xlu0 %960
        %962 = vrot.lane.b32.xlu0 %v378, 16
        %v963 = vpop.permute.xlu0 %962
        %964 = vrot.lane.b32.xlu0 %v379, 16
        %v965 = vpop.permute.xlu0 %964
        %966 = vrot.lane.b32.xlu0 %v380, 16
        %v967 = vpop.permute.xlu0 %966
        %968 = vrot.lane.b32.xlu0 %v381, 16
        %v969 = vpop.permute.xlu0 %968
        %970 = vrot.lane.b32.xlu0 %v382, 16
        %v971 = vpop.permute.xlu0 %970
        %972 = vrot.lane.b32.xlu0 %v383, 16
        %v973 = vpop.permute.xlu0 %972
        %974 = vrot.lane.b32.xlu0 %v384, 16
        %v975 = vpop.permute.xlu0 %974
        %976 = vrot.lane.b32.xlu0 %v385, 16
        %v977 = vpop.permute.xlu0 %976
        %978 = vrot.lane.b32.xlu0 %v386, 16
        %v979 = vpop.permute.xlu0 %978
        %980 = vrot.lane.b32.xlu0 %v387, 16
        %v981 = vpop.permute.xlu0 %980
        %982 = vrot.lane.b32.xlu0 %v388, 16
        %v983 = vpop.permute.xlu0 %982
        %984 = vrot.lane.b32.xlu0 %v389, 16
        %v985 = vpop.permute.xlu0 %984
        %986 = vrot.lane.b32.xlu0 %v390, 16
        %v987 = vpop.permute.xlu0 %986
        %988 = vrot.lane.b32.xlu0 %v391, 16
        %v989 = vpop.permute.xlu0 %988
        %990 = vrot.lane.b32.xlu0 %v392, 16
        %v991 = vpop.permute.xlu0 %990
        %992 = vrot.lane.b32.xlu0 %v393, 16
        %v993 = vpop.permute.xlu0 %992
        %994 = vrot.lane.b32.xlu0 %v394, 16
        %v995 = vpop.permute.xlu0 %994
        %996 = vrot.lane.b32.xlu0 %v395, 16
        %v997 = vpop.permute.xlu0 %996
        %998 = vrot.lane.b32.xlu0 %v396, 16
        %v999 = vpop.permute.xlu0 %998
        %1000 = vrot.lane.b32.xlu0 %v397, 16
        %v1001 = vpop.permute.xlu0 %1000
        %1002 = vrot.lane.b32.xlu0 %v398, 16
        %v1003 = vpop.permute.xlu0 %1002
        %1004 = vrot.lane.b32.xlu0 %v399, 16
        %v1005 = vpop.permute.xlu0 %1004
        %1006 = vrot.lane.b32.xlu0 %v400, 16
        %v1007 = vpop.permute.xlu0 %1006
        %1008 = vrot.lane.b32.xlu0 %v401, 16
        %v1009 = vpop.permute.xlu0 %1008
        %1010 = vrot.lane.b32.xlu0 %v402, 16
        %v1011 = vpop.permute.xlu0 %1010
        %1076 = vrot.lane.b32.xlu0 %v403, 20
        %v1077 = vpop.permute.xlu0 %1076
        %1078 = vrot.lane.b32.xlu0 %v404, 20
        %v1079 = vpop.permute.xlu0 %1078
        %1080 = vrot.lane.b32.xlu0 %v405, 20
        %v1081 = vpop.permute.xlu0 %1080
        %1082 = vrot.lane.b32.xlu0 %v406, 20
        %v1083 = vpop.permute.xlu0 %1082
        %1084 = vrot.lane.b32.xlu0 %v407, 20
        %v1085 = vpop.permute.xlu0 %1084
        %1086 = vrot.lane.b32.xlu0 %v408, 20
        %v1087 = vpop.permute.xlu0 %1086
        %1088 = vrot.lane.b32.xlu0 %v409, 20
        %v1089 = vpop.permute.xlu0 %1088
        %1090 = vrot.lane.b32.xlu0 %v410, 20
        %v1091 = vpop.permute.xlu0 %1090
        %1092 = vrot.lane.b32.xlu0 %v411, 20
        %v1093 = vpop.permute.xlu0 %1092
        %1094 = vrot.lane.b32.xlu0 %v412, 20
        %v1095 = vpop.permute.xlu0 %1094
        %1096 = vrot.lane.b32.xlu0 %v413, 20
        %v1097 = vpop.permute.xlu0 %1096
        %1098 = vrot.lane.b32.xlu0 %v414, 20
        %v1099 = vpop.permute.xlu0 %1098
        %1100 = vrot.lane.b32.xlu0 %v415, 20
        %v1101 = vpop.permute.xlu0 %1100
        %1102 = vrot.lane.b32.xlu0 %v416, 20
        %v1103 = vpop.permute.xlu0 %1102
        %1104 = vrot.lane.b32.xlu0 %v417, 20
        %v1105 = vpop.permute.xlu0 %1104
        %1106 = vrot.lane.b32.xlu0 %v418, 20
        %v1107 = vpop.permute.xlu0 %1106
        %1108 = vrot.lane.b32.xlu0 %v419, 20
        %v1109 = vpop.permute.xlu0 %1108
        %1110 = vrot.lane.b32.xlu0 %v420, 20
        %v1111 = vpop.permute.xlu0 %1110
        %1112 = vrot.lane.b32.xlu0 %v421, 20
        %v1113 = vpop.permute.xlu0 %1112
        %1114 = vrot.lane.b32.xlu0 %v422, 20
        %v1115 = vpop.permute.xlu0 %1114
        %1116 = vrot.lane.b32.xlu0 %v423, 20
        %v1117 = vpop.permute.xlu0 %1116
        %1118 = vrot.lane.b32.xlu0 %v424, 20
        %v1119 = vpop.permute.xlu0 %1118
        %1120 = vrot.lane.b32.xlu0 %v425, 20
        %v1121 = vpop.permute.xlu0 %1120
        %1122 = vrot.lane.b32.xlu0 %v426, 20
        %v1123 = vpop.permute.xlu0 %1122
        %1124 = vrot.lane.b32.xlu0 %v427, 20
        %v1125 = vpop.permute.xlu0 %1124
        %1126 = vrot.lane.b32.xlu0 %v428, 20
        %v1127 = vpop.permute.xlu0 %1126
        %1128 = vrot.lane.b32.xlu0 %v429, 20
        %v1129 = vpop.permute.xlu0 %1128
        %1130 = vrot.lane.b32.xlu0 %v430, 20
        %v1131 = vpop.permute.xlu0 %1130
        %1132 = vrot.lane.b32.xlu0 %v431, 20
        %v1133 = vpop.permute.xlu0 %1132
        %1134 = vrot.lane.b32.xlu0 %v432, 20
        %v1135 = vpop.permute.xlu0 %1134
        %1136 = vrot.lane.b32.xlu0 %v433, 20
        %v1137 = vpop.permute.xlu0 %1136
        %1138 = vrot.lane.b32.xlu0 %v434, 20
        %v1139 = vpop.permute.xlu0 %1138
        %1204 = vrot.lane.b32.xlu0 %v436, 24
        %v1205 = vpop.permute.xlu0 %1204
        %1206 = vrot.lane.b32.xlu0 %v437, 24
        %v1207 = vpop.permute.xlu0 %1206
        %1208 = vrot.lane.b32.xlu0 %v438, 24
        %v1209 = vpop.permute.xlu0 %1208
        %1210 = vrot.lane.b32.xlu0 %v439, 24
        %v1211 = vpop.permute.xlu0 %1210
        %1212 = vrot.lane.b32.xlu0 %v440, 24
        %v1213 = vpop.permute.xlu0 %1212
        %1214 = vrot.lane.b32.xlu0 %v441, 24
        %v1215 = vpop.permute.xlu0 %1214
        %1216 = vrot.lane.b32.xlu0 %v442, 24
        %v1217 = vpop.permute.xlu0 %1216
        %1218 = vrot.lane.b32.xlu0 %v443, 24
        %v1219 = vpop.permute.xlu0 %1218
        %1220 = vrot.lane.b32.xlu0 %v444, 24
        %v1221 = vpop.permute.xlu0 %1220
        %1222 = vrot.lane.b32.xlu0 %v445, 24
        %v1223 = vpop.permute.xlu0 %1222
        %1224 = vrot.lane.b32.xlu0 %v446, 24
        %v1225 = vpop.permute.xlu0 %1224
        %1226 = vrot.lane.b32.xlu0 %v447, 24
        %v1227 = vpop.permute.xlu0 %1226
        %1228 = vrot.lane.b32.xlu0 %v448, 24
        %v1229 = vpop.permute.xlu0 %1228
        %1230 = vrot.lane.b32.xlu0 %v449, 24
        %v1231 = vpop.permute.xlu0 %1230
        %1232 = vrot.lane.b32.xlu0 %v450, 24
        %v1233 = vpop.permute.xlu0 %1232
        %1234 = vrot.lane.b32.xlu0 %v451, 24
        %v1235 = vpop.permute.xlu0 %1234
        %1236 = vrot.lane.b32.xlu0 %v452, 24
        %v1237 = vpop.permute.xlu0 %1236
        %1238 = vrot.lane.b32.xlu0 %v453, 24
        %v1239 = vpop.permute.xlu0 %1238
        %1240 = vrot.lane.b32.xlu0 %v454, 24
        %v1241 = vpop.permute.xlu0 %1240
        %1242 = vrot.lane.b32.xlu0 %v455, 24
        %v1243 = vpop.permute.xlu0 %1242
        %1244 = vrot.lane.b32.xlu0 %v456, 24
        %v1245 = vpop.permute.xlu0 %1244
        %1246 = vrot.lane.b32.xlu0 %v457, 24
        %v1247 = vpop.permute.xlu0 %1246
        %1248 = vrot.lane.b32.xlu0 %v458, 24
        %v1249 = vpop.permute.xlu0 %1248
        %1250 = vrot.lane.b32.xlu0 %v459, 24
        %v1251 = vpop.permute.xlu0 %1250
        %1252 = vrot.lane.b32.xlu0 %v460, 24
        %v1253 = vpop.permute.xlu0 %1252
        %1254 = vrot.lane.b32.xlu0 %v461, 24
        %v1255 = vpop.permute.xlu0 %1254
        %1256 = vrot.lane.b32.xlu0 %v462, 24
        %v1257 = vpop.permute.xlu0 %1256
        %1258 = vrot.lane.b32.xlu0 %v463, 24
        %v1259 = vpop.permute.xlu0 %1258
        %1260 = vrot.lane.b32.xlu0 %v464, 24
        %v1261 = vpop.permute.xlu0 %1260
        %1262 = vrot.lane.b32.xlu0 %v465, 24
        %v1263 = vpop.permute.xlu0 %1262
        %1264 = vrot.lane.b32.xlu0 %v466, 24
        %v1265 = vpop.permute.xlu0 %1264
        %1266 = vrot.lane.b32.xlu0 %v467, 24
        %v1267 = vpop.permute.xlu0 %1266
        %1332 = vrot.lane.b32.xlu0 %v468, 28
        %v1333 = vpop.permute.xlu0 %1332
        %1334 = vrot.lane.b32.xlu0 %v469, 28
        %v1335 = vpop.permute.xlu0 %1334
        %1336 = vrot.lane.b32.xlu0 %v470, 28
        %v1337 = vpop.permute.xlu0 %1336
        %1338 = vrot.lane.b32.xlu0 %v471, 28
        %v1339 = vpop.permute.xlu0 %1338
        %1340 = vrot.lane.b32.xlu0 %v472, 28
        %v1341 = vpop.permute.xlu0 %1340
        %1342 = vrot.lane.b32.xlu0 %v473, 28
        %v1343 = vpop.permute.xlu0 %1342
        %1344 = vrot.lane.b32.xlu0 %v474, 28
        %v1345 = vpop.permute.xlu0 %1344
        %1346 = vrot.lane.b32.xlu0 %v475, 28
        %v1347 = vpop.permute.xlu0 %1346
        %1348 = vrot.lane.b32.xlu0 %v476, 28
        %v1349 = vpop.permute.xlu0 %1348
        %1350 = vrot.lane.b32.xlu0 %v477, 28
        %v1351 = vpop.permute.xlu0 %1350
        %1352 = vrot.lane.b32.xlu0 %v478, 28
        %v1353 = vpop.permute.xlu0 %1352
        %1354 = vrot.lane.b32.xlu0 %v479, 28
        %v1355 = vpop.permute.xlu0 %1354
        %1356 = vrot.lane.b32.xlu0 %v480, 28
        %v1357 = vpop.permute.xlu0 %1356
        %1358 = vrot.lane.b32.xlu0 %v481, 28
        %v1359 = vpop.permute.xlu0 %1358
        %1360 = vrot.lane.b32.xlu0 %v482, 28
        %v1361 = vpop.permute.xlu0 %1360
        %1362 = vrot.lane.b32.xlu0 %v483, 28
        %v1363 = vpop.permute.xlu0 %1362
        %1364 = vrot.lane.b32.xlu0 %v484, 28
        %v1365 = vpop.permute.xlu0 %1364
        %1366 = vrot.lane.b32.xlu0 %v485, 28
        %v1367 = vpop.permute.xlu0 %1366
        %1368 = vrot.lane.b32.xlu0 %v486, 28
        %v1369 = vpop.permute.xlu0 %1368
        %1370 = vrot.lane.b32.xlu0 %v487, 28
        %v1371 = vpop.permute.xlu0 %1370
        %1372 = vrot.lane.b32.xlu0 %v488, 28
        %v1373 = vpop.permute.xlu0 %1372
        %1374 = vrot.lane.b32.xlu0 %v489, 28
        %v1375 = vpop.permute.xlu0 %1374
        %1376 = vrot.lane.b32.xlu0 %v490, 28
        %v1377 = vpop.permute.xlu0 %1376
        %1378 = vrot.lane.b32.xlu0 %v491, 28
        %v1379 = vpop.permute.xlu0 %1378
        %1380 = vrot.lane.b32.xlu0 %v492, 28
        %v1381 = vpop.permute.xlu0 %1380
        %1382 = vrot.lane.b32.xlu0 %v493, 28
        %v1383 = vpop.permute.xlu0 %1382
        %1384 = vrot.lane.b32.xlu0 %v494, 28
        %v1385 = vpop.permute.xlu0 %1384
        %1386 = vrot.lane.b32.xlu0 %v495, 28
        %v1387 = vpop.permute.xlu0 %1386
        %1388 = vrot.lane.b32.xlu0 %v496, 28
        %v1389 = vpop.permute.xlu0 %1388
        %1390 = vrot.lane.b32.xlu0 %v497, 28
        %v1391 = vpop.permute.xlu0 %1390
        %1392 = vrot.lane.b32.xlu0 %v498, 28
        %v1393 = vpop.permute.xlu0 %1392
        %1394 = vrot.lane.b32.xlu0 %v499, 28
        %v1395 = vpop.permute.xlu0 %1394
        %1460 = vrot.lane.b32.xlu0 %v500, 32
        %v1461 = vpop.permute.xlu0 %1460
        %1462 = vrot.lane.b32.xlu0 %v501, 32
        %v1463 = vpop.permute.xlu0 %1462
        %1464 = vrot.lane.b32.xlu0 %v502, 32
        %v1465 = vpop.permute.xlu0 %1464
        %1466 = vrot.lane.b32.xlu0 %v503, 32
        %v1467 = vpop.permute.xlu0 %1466
        %1468 = vrot.lane.b32.xlu0 %v504, 32
        %v1469 = vpop.permute.xlu0 %1468
        %1470 = vrot.lane.b32.xlu0 %v505, 32
        %v1471 = vpop.permute.xlu0 %1470
        %1472 = vrot.lane.b32.xlu0 %v506, 32
        %v1473 = vpop.permute.xlu0 %1472
        %1474 = vrot.lane.b32.xlu0 %v507, 32
        %v1475 = vpop.permute.xlu0 %1474
        %1476 = vrot.lane.b32.xlu0 %v508, 32
        %v1477 = vpop.permute.xlu0 %1476
        %1478 = vrot.lane.b32.xlu0 %v509, 32
        %v1479 = vpop.permute.xlu0 %1478
        %1480 = vrot.lane.b32.xlu0 %v510, 32
        %v1481 = vpop.permute.xlu0 %1480
        %1482 = vrot.lane.b32.xlu0 %v511, 32
        %v1483 = vpop.permute.xlu0 %1482
        %1484 = vrot.lane.b32.xlu0 %v512, 32
        %v1485 = vpop.permute.xlu0 %1484
        %1486 = vrot.lane.b32.xlu0 %v513, 32
        %v1487 = vpop.permute.xlu0 %1486
        %1488 = vrot.lane.b32.xlu0 %v514, 32
        %v1489 = vpop.permute.xlu0 %1488
        %1490 = vrot.lane.b32.xlu0 %v515, 32
        %v1491 = vpop.permute.xlu0 %1490
        %1492 = vrot.lane.b32.xlu0 %v516, 32
        %v1493 = vpop.permute.xlu0 %1492
        %1494 = vrot.lane.b32.xlu0 %v517, 32
        %v1495 = vpop.permute.xlu0 %1494
        %1496 = vrot.lane.b32.xlu0 %v518, 32
        %v1497 = vpop.permute.xlu0 %1496
        %1498 = vrot.lane.b32.xlu0 %v519, 32
        %v1499 = vpop.permute.xlu0 %1498
        %1500 = vrot.lane.b32.xlu0 %v520, 32
        %v1501 = vpop.permute.xlu0 %1500
        %1502 = vrot.lane.b32.xlu0 %v521, 32
        %v1503 = vpop.permute.xlu0 %1502
        %1504 = vrot.lane.b32.xlu0 %v522, 32
        %v1505 = vpop.permute.xlu0 %1504
        %1506 = vrot.lane.b32.xlu0 %v523, 32
        %v1507 = vpop.permute.xlu0 %1506
        %1508 = vrot.lane.b32.xlu0 %v524, 32
        %v1509 = vpop.permute.xlu0 %1508
        %1510 = vrot.lane.b32.xlu0 %v525, 32
        %v1511 = vpop.permute.xlu0 %1510
        %1512 = vrot.lane.b32.xlu0 %v526, 32
        %v1513 = vpop.permute.xlu0 %1512
        %1514 = vrot.lane.b32.xlu0 %v527, 32
        %v1515 = vpop.permute.xlu0 %1514
        %1516 = vrot.lane.b32.xlu0 %v528, 32
        %v1517 = vpop.permute.xlu0 %1516
        %1518 = vrot.lane.b32.xlu0 %v529, 32
        %v1519 = vpop.permute.xlu0 %1518
        %1520 = vrot.lane.b32.xlu0 %v530, 32
        %v1521 = vpop.permute.xlu0 %1520
        %1522 = vrot.lane.b32.xlu0 %v531, 32
        %v1523 = vpop.permute.xlu0 %1522
        %vm1556 = vcmask 31744
        %v1557 = vsel %vm1556, %v242, %v565
        %v1558 = vsel %vm1556, %v243, %v567
        %v1559 = vsel %vm1556, %v244, %v569
        %v1560 = vsel %vm1556, %v245, %v571
        %v1561 = vsel %vm1556, %v246, %v573
        %v1562 = vsel %vm1556, %v247, %v575
        %v1563 = vsel %vm1556, %v248, %v577
        %v1564 = vsel %vm1556, %v249, %v579
        %v1565 = vsel %vm1556, %v250, %v581
        %v1566 = vsel %vm1556, %v251, %v583
        %v1567 = vsel %vm1556, %v252, %v585
        %v1568 = vsel %vm1556, %v253, %v587
        %v1569 = vsel %vm1556, %v254, %v589
        %v1570 = vsel %vm1556, %v255, %v591
        %v1571 = vsel %vm1556, %v256, %v593
        %v1572 = vsel %vm1556, %v257, %v595
        %v1573 = vsel %vm1556, %v258, %v597
        %v1574 = vsel %vm1556, %v259, %v599
        %v1575 = vsel %vm1556, %v260, %v601
        %v1576 = vsel %vm1556, %v261, %v603
        %v1577 = vsel %vm1556, %v262, %v605
        %v1578 = vsel %vm1556, %v263, %v607
        %v1579 = vsel %vm1556, %v264, %v609
        %v1580 = vsel %vm1556, %v265, %v611
        %v1581 = vsel %vm1556, %v266, %v613
        %v1582 = vsel %vm1556, %v267, %v615
        %v1583 = vsel %vm1556, %v268, %v617
        %v1584 = vsel %vm1556, %v269, %v619
        %v1585 = vsel %vm1556, %v270, %v621
        %v1586 = vsel %vm1556, %v271, %v623
        %v1587 = vsel %vm1556, %v272, %v625
        %v1588 = vsel %vm1556, %v273, %v627
        %vm1589 = vcmask 64512
        %v1590 = vsel %vm1589, %v1557, %v693
        %v1591 = vsel %vm1589, %v1558, %v695
        %v1592 = vsel %vm1589, %v1559, %v697
        %v1593 = vsel %vm1589, %v1560, %v699
        %v1594 = vsel %vm1589, %v1561, %v701
        %v1595 = vsel %vm1589, %v1562, %v703
        %v1596 = vsel %vm1589, %v1563, %v705
        %v1597 = vsel %vm1589, %v1564, %v707
        %v1598 = vsel %vm1589, %v1565, %v709
        %v1599 = vsel %vm1589, %v1566, %v711
        %v1600 = vsel %vm1589, %v1567, %v713
        %v1601 = vsel %vm1589, %v1568, %v715
        %v1602 = vsel %vm1589, %v1569, %v717
        %v1603 = vsel %vm1589, %v1570, %v719
        %v1604 = vsel %vm1589, %v1571, %v721
        %v1605 = vsel %vm1589, %v1572, %v723
        %v1606 = vsel %vm1589, %v1573, %v725
        %v1607 = vsel %vm1589, %v1574, %v727
        %v1608 = vsel %vm1589, %v1575, %v729
        %v1609 = vsel %vm1589, %v1576, %v731
        %v1610 = vsel %vm1589, %v1577, %v733
        %v1611 = vsel %vm1589, %v1578, %v735
        %v1612 = vsel %vm1589, %v1579, %v737
        %v1613 = vsel %vm1589, %v1580, %v739
        %v1614 = vsel %vm1589, %v1581, %v741
        %v1615 = vsel %vm1589, %v1582, %v743
        %v1616 = vsel %vm1589, %v1583, %v745
        %v1617 = vsel %vm1589, %v1584, %v747
        %v1618 = vsel %vm1589, %v1585, %v749
        %v1619 = vsel %vm1589, %v1586, %v751
        %v1620 = vsel %vm1589, %v1587, %v753
        %v1621 = vsel %vm1589, %v1588, %v755
        %vm1622 = vcmask 97280
        %v1623 = vsel %vm1622, %v1590, %v821
        %v1624 = vsel %vm1622, %v1591, %v823
        %v1625 = vsel %vm1622, %v1592, %v825
        %v1626 = vsel %vm1622, %v1593, %v827
        %v1627 = vsel %vm1622, %v1594, %v829
        %v1628 = vsel %vm1622, %v1595, %v831
        %v1629 = vsel %vm1622, %v1596, %v833
        %v1630 = vsel %vm1622, %v1597, %v835
        %v1631 = vsel %vm1622, %v1598, %v837
        %v1632 = vsel %vm1622, %v1599, %v839
        %v1633 = vsel %vm1622, %v1600, %v841
        %v1634 = vsel %vm1622, %v1601, %v843
        %v1635 = vsel %vm1622, %v1602, %v845
        %v1636 = vsel %vm1622, %v1603, %v847
        %v1637 = vsel %vm1622, %v1604, %v849
        %v1638 = vsel %vm1622, %v1605, %v851
        %v1639 = vsel %vm1622, %v1606, %v853
        %v1640 = vsel %vm1622, %v1607, %v855
        %v1641 = vsel %vm1622, %v1608, %v857
        %v1642 = vsel %vm1622, %v1609, %v859
        %v1643 = vsel %vm1622, %v1610, %v861
        %v1644 = vsel %vm1622, %v1611, %v863
        %v1645 = vsel %vm1622, %v1612, %v865
        %v1646 = vsel %vm1622, %v1613, %v867
        %v1647 = vsel %vm1622, %v1614, %v869
        %v1648 = vsel %vm1622, %v1615, %v871
        %v1649 = vsel %vm1622, %v1616, %v873
        %v1650 = vsel %vm1622, %v1617, %v875
        %v1651 = vsel %vm1622, %v1618, %v877
        %v1652 = vsel %vm1622, %v1619, %v879
        %v1653 = vsel %vm1622, %v1620, %v881
        %v1654 = vsel %vm1622, %v1621, %v883
        %vm1655 = vcmask 130048
        %v1656 = vsel %vm1655, %v1623, %v949
        %v1657 = vsel %vm1655, %v1624, %v951
        %v1658 = vsel %vm1655, %v1625, %v953
        %v1659 = vsel %vm1655, %v1626, %v955
        %v1660 = vsel %vm1655, %v1627, %v957
        %v1661 = vsel %vm1655, %v1628, %v959
        %v1662 = vsel %vm1655, %v1629, %v961
        %v1663 = vsel %vm1655, %v1630, %v963
        %v1664 = vsel %vm1655, %v1631, %v965
        %v1665 = vsel %vm1655, %v1632, %v967
        %v1666 = vsel %vm1655, %v1633, %v969
        %v1667 = vsel %vm1655, %v1634, %v971
        %v1668 = vsel %vm1655, %v1635, %v973
        %v1669 = vsel %vm1655, %v1636, %v975
        %v1670 = vsel %vm1655, %v1637, %v977
        %v1671 = vsel %vm1655, %v1638, %v979
        %v1672 = vsel %vm1655, %v1639, %v981
        %v1673 = vsel %vm1655, %v1640, %v983
        %v1674 = vsel %vm1655, %v1641, %v985
        %v1675 = vsel %vm1655, %v1642, %v987
        %v1676 = vsel %vm1655, %v1643, %v989
        %v1677 = vsel %vm1655, %v1644, %v991
        %v1678 = vsel %vm1655, %v1645, %v993
        %v1679 = vsel %vm1655, %v1646, %v995
        %v1680 = vsel %vm1655, %v1647, %v997
        %v1681 = vsel %vm1655, %v1648, %v999
        %v1682 = vsel %vm1655, %v1649, %v1001
        %v1683 = vsel %vm1655, %v1650, %v1003
        %v1684 = vsel %vm1655, %v1651, %v1005
        %v1685 = vsel %vm1655, %v1652, %v1007
        %v1686 = vsel %vm1655, %v1653, %v1009
        %v1687 = vsel %vm1655, %v1654, %v1011
        %vm1688 = vcmask 162816
        %v1689 = vsel %vm1688, %v1656, %v1077
        %v1690 = vsel %vm1688, %v1657, %v1079
        %v1691 = vsel %vm1688, %v1658, %v1081
        %v1692 = vsel %vm1688, %v1659, %v1083
        %v1693 = vsel %vm1688, %v1660, %v1085
        %v1694 = vsel %vm1688, %v1661, %v1087
        %v1695 = vsel %vm1688, %v1662, %v1089
        %v1696 = vsel %vm1688, %v1663, %v1091
        %v1697 = vsel %vm1688, %v1664, %v1093
        %v1698 = vsel %vm1688, %v1665, %v1095
        %v1699 = vsel %vm1688, %v1666, %v1097
        %v1700 = vsel %vm1688, %v1667, %v1099
        %v1701 = vsel %vm1688, %v1668, %v1101
        %v1702 = vsel %vm1688, %v1669, %v1103
        %v1703 = vsel %vm1688, %v1670, %v1105
        %v1704 = vsel %vm1688, %v1671, %v1107
        %v1705 = vsel %vm1688, %v1672, %v1109
        %v1706 = vsel %vm1688, %v1673, %v1111
        %v1707 = vsel %vm1688, %v1674, %v1113
        %v1708 = vsel %vm1688, %v1675, %v1115
        %v1709 = vsel %vm1688, %v1676, %v1117
        %v1710 = vsel %vm1688, %v1677, %v1119
        %v1711 = vsel %vm1688, %v1678, %v1121
        %v1712 = vsel %vm1688, %v1679, %v1123
        %v1713 = vsel %vm1688, %v1680, %v1125
        %v1714 = vsel %vm1688, %v1681, %v1127
        %v1715 = vsel %vm1688, %v1682, %v1129
        %v1716 = vsel %vm1688, %v1683, %v1131
        %v1717 = vsel %vm1688, %v1684, %v1133
        %v1718 = vsel %vm1688, %v1685, %v1135
        %v1719 = vsel %vm1688, %v1686, %v1137
        %v1720 = vsel %vm1688, %v1687, %v1139
        %vm1721 = vcmask 195584
        %v1722 = vsel %vm1721, %v1689, %v1205
        %v1723 = vsel %vm1721, %v1690, %v1207
        %v1724 = vsel %vm1721, %v1691, %v1209
        %v1725 = vsel %vm1721, %v1692, %v1211
        %v1726 = vsel %vm1721, %v1693, %v1213
        %v1727 = vsel %vm1721, %v1694, %v1215
        %v1728 = vsel %vm1721, %v1695, %v1217
        %v1729 = vsel %vm1721, %v1696, %v1219
        %v1730 = vsel %vm1721, %v1697, %v1221
        %v1731 = vsel %vm1721, %v1698, %v1223
        %v1732 = vsel %vm1721, %v1699, %v1225
        %v1733 = vsel %vm1721, %v1700, %v1227
        %v1734 = vsel %vm1721, %v1701, %v1229
        %v1735 = vsel %vm1721, %v1702, %v1231
        %v1736 = vsel %vm1721, %v1703, %v1233
        %v1737 = vsel %vm1721, %v1704, %v1235
        %v1738 = vsel %vm1721, %v1705, %v1237
        %v1739 = vsel %vm1721, %v1706, %v1239
        %v1740 = vsel %vm1721, %v1707, %v1241
        %v1741 = vsel %vm1721, %v1708, %v1243
        %v1742 = vsel %vm1721, %v1709, %v1245
        %v1743 = vsel %vm1721, %v1710, %v1247
        %v1744 = vsel %vm1721, %v1711, %v1249
        %v1745 = vsel %vm1721, %v1712, %v1251
        %v1746 = vsel %vm1721, %v1713, %v1253
        %v1747 = vsel %vm1721, %v1714, %v1255
        %v1748 = vsel %vm1721, %v1715, %v1257
        %v1749 = vsel %vm1721, %v1716, %v1259
        %v1750 = vsel %vm1721, %v1717, %v1261
        %v1751 = vsel %vm1721, %v1718, %v1263
        %v1752 = vsel %vm1721, %v1719, %v1265
        %v1753 = vsel %vm1721, %v1720, %v1267
        %vm1754 = vcmask 228352
        %v1755 = vsel %vm1754, %v1722, %v1333
        %v1756 = vsel %vm1754, %v1723, %v1335
        %v1757 = vsel %vm1754, %v1724, %v1337
        %v1758 = vsel %vm1754, %v1725, %v1339
        %v1759 = vsel %vm1754, %v1726, %v1341
        %v1760 = vsel %vm1754, %v1727, %v1343
        %v1761 = vsel %vm1754, %v1728, %v1345
        %v1762 = vsel %vm1754, %v1729, %v1347
        %v1763 = vsel %vm1754, %v1730, %v1349
        %v1764 = vsel %vm1754, %v1731, %v1351
        %v1765 = vsel %vm1754, %v1732, %v1353
        %v1766 = vsel %vm1754, %v1733, %v1355
        %v1767 = vsel %vm1754, %v1734, %v1357
        %v1768 = vsel %vm1754, %v1735, %v1359
        %v1769 = vsel %vm1754, %v1736, %v1361
        %v1770 = vsel %vm1754, %v1737, %v1363
        %v1771 = vsel %vm1754, %v1738, %v1365
        %v1772 = vsel %vm1754, %v1739, %v1367
        %v1773 = vsel %vm1754, %v1740, %v1369
        %v1774 = vsel %vm1754, %v1741, %v1371
        %v1775 = vsel %vm1754, %v1742, %v1373
        %v1776 = vsel %vm1754, %v1743, %v1375
        %v1777 = vsel %vm1754, %v1744, %v1377
        %v1778 = vsel %vm1754, %v1745, %v1379
        %v1779 = vsel %vm1754, %v1746, %v1381
        %v1780 = vsel %vm1754, %v1747, %v1383
        %v1781 = vsel %vm1754, %v1748, %v1385
        %v1782 = vsel %vm1754, %v1749, %v1387
        %v1783 = vsel %vm1754, %v1750, %v1389
        %v1784 = vsel %vm1754, %v1751, %v1391
        %v1785 = vsel %vm1754, %v1752, %v1393
        %v1786 = vsel %vm1754, %v1753, %v1395
        %vm1787 = vcmask 261120
        %v1788 = vsel %vm1787, %v1755, %v1461
        %v1789 = vsel %vm1787, %v1756, %v1463
        %v1790 = vsel %vm1787, %v1757, %v1465
        %v1791 = vsel %vm1787, %v1758, %v1467
        %v1792 = vsel %vm1787, %v1759, %v1469
        %v1793 = vsel %vm1787, %v1760, %v1471
        %v1794 = vsel %vm1787, %v1761, %v1473
        %v1795 = vsel %vm1787, %v1762, %v1475
        %v1796 = vsel %vm1787, %v1763, %v1477
        %v1797 = vsel %vm1787, %v1764, %v1479
        %v1798 = vsel %vm1787, %v1765, %v1481
        %v1799 = vsel %vm1787, %v1766, %v1483
        %v1800 = vsel %vm1787, %v1767, %v1485
        %v1801 = vsel %vm1787, %v1768, %v1487
        %v1802 = vsel %vm1787, %v1769, %v1489
        %v1803 = vsel %vm1787, %v1770, %v1491
        %v1804 = vsel %vm1787, %v1771, %v1493
        %v1805 = vsel %vm1787, %v1772, %v1495
        %v1806 = vsel %vm1787, %v1773, %v1497
        %v1807 = vsel %vm1787, %v1774, %v1499
        %v1808 = vsel %vm1787, %v1775, %v1501
        %v1809 = vsel %vm1787, %v1776, %v1503
        %v1810 = vsel %vm1787, %v1777, %v1505
        %v1811 = vsel %vm1787, %v1778, %v1507
        %v1812 = vsel %vm1787, %v1779, %v1509
        %v1813 = vsel %vm1787, %v1780, %v1511
        %v1814 = vsel %vm1787, %v1781, %v1513
        %v1815 = vsel %vm1787, %v1782, %v1515
        %v1816 = vsel %vm1787, %v1783, %v1517
        %v1817 = vsel %vm1787, %v1784, %v1519
        %v1818 = vsel %vm1787, %v1785, %v1521
        %v1819 = vsel %vm1787, %v1786, %v1523
        %v1820 = vld [vmem:[%s1] sm:$0xff]
        %v1821 = vld [vmem:[%s1 + $0x8] sm:$0xff]
        %v1822 = vld [vmem:[%s1 + $0x10] sm:$0xff]
        %v1823 = vld [vmem:[%s1 + $0x18] sm:$0xff]
        %v1824 = vld [vmem:[%s1 + $0x20] sm:$0xf]
        %v1825 = vld [vmem:[%s2] sm:$0x1]
        %v1827 = vperm.slane %v1825, 0
        %vm1829 = vcmask 293888
        %v1831 = vsel %vm1829, %v1788, 0
        %v1834 = vsel %vm1829, %v1789, 0
        %v1837 = vsel %vm1829, %v1790, 0
        %v1840 = vsel %vm1829, %v1791, 0
        %v1843 = vsel %vm1829, %v1792, 0
        %v1846 = vsel %vm1829, %v1793, 0
        %v1849 = vsel %vm1829, %v1794, 0
        %v1852 = vsel %vm1829, %v1795, 0
        %v1855 = vsel %vm1829, %v1796, 0
        %v1858 = vsel %vm1829, %v1797, 0
        %v1861 = vsel %vm1829, %v1798, 0
        %v1864 = vsel %vm1829, %v1799, 0
        %v1867 = vsel %vm1829, %v1800, 0
        %v1870 = vsel %vm1829, %v1801, 0
        %v1873 = vsel %vm1829, %v1802, 0
        %v1876 = vsel %vm1829, %v1803, 0
        %v1879 = vsel %vm1829, %v1804, 0
        %v1882 = vsel %vm1829, %v1805, 0
        %v1885 = vsel %vm1829, %v1806, 0
        %v1888 = vsel %vm1829, %v1807, 0
        %v1891 = vsel %vm1829, %v1808, 0
        %v1894 = vsel %vm1829, %v1809, 0
        %v1897 = vsel %vm1829, %v1810, 0
        %v1900 = vsel %vm1829, %v1811, 0
        %v1903 = vsel %vm1829, %v1812, 0
        %v1906 = vsel %vm1829, %v1813, 0
        %v1909 = vsel %vm1829, %v1814, 0
        %v1912 = vsel %vm1829, %v1815, 0
        %v1915 = vsel %vm1829, %v1816, 0
        %v1918 = vsel %vm1829, %v1817, 0
        %v1921 = vsel %vm1829, %v1818, 0
        %v1924 = vsel %vm1829, %v1819, 0
        %vm1926 = vcmask 1043456
        %v1928 = vsel %vm1926, %v1824, 0
        %1930 = vmatpush.msra.mxu0 0.0
        %1931 = vmatpush.msra.mxu0 0.0
        %1932 = vmatpush.msra.mxu0 0.0
        %1933 = vmatpush.msra.mxu0 0.0
        %1934 = vmatpush.msra.mxu0 0.0
        %1935 = vmatpush.msra.mxu0 0.0
        %1936 = vmatpush.msra.mxu0 0.0
        %1937 = vmatpush.msra.mxu0 0.0
        %1938 = vmatpush.msra.mxu0 0.0
        %1939 = vmatpush.msra.mxu0 0.0
        %1940 = vmatpush.msra.mxu0 0.0
        %1941 = vmatpush.msra.mxu0 %v1928
        %1942 = vmatpush.msra.mxu0 %v1823
        %1943 = vmatpush.msra.mxu0 %v1822
        %1944 = vmatpush.msra.mxu0 %v1821
        %1945 = vmatpush.msra.mxu0 %v1820
        %1946 = vmatmul.f32.gmra.mxu0 %v1831
        %v1947 = vpop.f32.mrf.mxu0
        %v1948 = vadd.f32 %v1827, %v1947
        %1949 = vmatmul.f32.gmra.mxu0 %v1834
        %v1950 = vpop.f32.mrf.mxu0
        %v1951 = vadd.f32 %v1827, %v1950
        %1952 = vmatmul.f32.gmra.mxu0 %v1837
        %v1953 = vpop.f32.mrf.mxu0
        %v1954 = vadd.f32 %v1827, %v1953
        %1955 = vmatmul.f32.gmra.mxu0 %v1840
        %v1956 = vpop.f32.mrf.mxu0
        %v1957 = vadd.f32 %v1827, %v1956
        %1958 = vmatmul.f32.gmra.mxu0 %v1843
        %v1959 = vpop.f32.mrf.mxu0
        %v1960 = vadd.f32 %v1827, %v1959
        %1961 = vmatmul.f32.gmra.mxu0 %v1846
        %v1962 = vpop.f32.mrf.mxu0
        %v1963 = vadd.f32 %v1827, %v1962
        %1964 = vmatmul.f32.gmra.mxu0 %v1849
        %v1965 = vpop.f32.mrf.mxu0
        %v1966 = vadd.f32 %v1827, %v1965
        %1967 = vmatmul.f32.gmra.mxu0 %v1852
        %v1968 = vpop.f32.mrf.mxu0
        %v1969 = vadd.f32 %v1827, %v1968
        %1970 = vmatmul.f32.gmra.mxu0 %v1855
        %v1971 = vpop.f32.mrf.mxu0
        %v1972 = vadd.f32 %v1827, %v1971
        %1973 = vmatmul.f32.gmra.mxu0 %v1858
        %v1974 = vpop.f32.mrf.mxu0
        %v1975 = vadd.f32 %v1827, %v1974
        %1976 = vmatmul.f32.gmra.mxu0 %v1861
        %v1977 = vpop.f32.mrf.mxu0
        %v1978 = vadd.f32 %v1827, %v1977
        %1979 = vmatmul.f32.gmra.mxu0 %v1864
        %v1980 = vpop.f32.mrf.mxu0
        %v1981 = vadd.f32 %v1827, %v1980
        %1982 = vmatmul.f32.gmra.mxu0 %v1867
        %v1983 = vpop.f32.mrf.mxu0
        %v1984 = vadd.f32 %v1827, %v1983
        %1985 = vmatmul.f32.gmra.mxu0 %v1870
        %v1986 = vpop.f32.mrf.mxu0
        %v1987 = vadd.f32 %v1827, %v1986
        %1988 = vmatmul.f32.gmra.mxu0 %v1873
        %v1989 = vpop.f32.mrf.mxu0
        %v1990 = vadd.f32 %v1827, %v1989
        %1991 = vmatmul.f32.gmra.mxu0 %v1876
        %v1992 = vpop.f32.mrf.mxu0
        %v1993 = vadd.f32 %v1827, %v1992
        %1994 = vmatmul.f32.gmra.mxu0 %v1879
        %v1995 = vpop.f32.mrf.mxu0
        %v1996 = vadd.f32 %v1827, %v1995
        %1997 = vmatmul.f32.gmra.mxu0 %v1882
        %v1998 = vpop.f32.mrf.mxu0
        %v1999 = vadd.f32 %v1827, %v1998
        %2000 = vmatmul.f32.gmra.mxu0 %v1885
        %v2001 = vpop.f32.mrf.mxu0
        %v2002 = vadd.f32 %v1827, %v2001
        %2003 = vmatmul.f32.gmra.mxu0 %v1888
        %v2004 = vpop.f32.mrf.mxu0
        %v2005 = vadd.f32 %v1827, %v2004
        %2006 = vmatmul.f32.gmra.mxu0 %v1891
        %v2007 = vpop.f32.mrf.mxu0
        %v2008 = vadd.f32 %v1827, %v2007
        %2009 = vmatmul.f32.gmra.mxu0 %v1894
        %v2010 = vpop.f32.mrf.mxu0
        %v2011 = vadd.f32 %v1827, %v2010
        %2012 = vmatmul.f32.gmra.mxu0 %v1897
        %v2013 = vpop.f32.mrf.mxu0
        %v2014 = vadd.f32 %v1827, %v2013
        %2015 = vmatmul.f32.gmra.mxu0 %v1900
        %v2016 = vpop.f32.mrf.mxu0
        %v2017 = vadd.f32 %v1827, %v2016
        %2018 = vmatmul.f32.gmra.mxu0 %v1903
        %v2019 = vpop.f32.mrf.mxu0
        %v2020 = vadd.f32 %v1827, %v2019
        %2021 = vmatmul.f32.gmra.mxu0 %v1906
        %v2022 = vpop.f32.mrf.mxu0
        %v2023 = vadd.f32 %v1827, %v2022
        %2024 = vmatmul.f32.gmra.mxu0 %v1909
        %v2025 = vpop.f32.mrf.mxu0
        %v2026 = vadd.f32 %v1827, %v2025
        %2027 = vmatmul.f32.gmra.mxu0 %v1912
        %v2028 = vpop.f32.mrf.mxu0
        %v2029 = vadd.f32 %v1827, %v2028
        %2030 = vmatmul.f32.gmra.mxu0 %v1915
        %v2031 = vpop.f32.mrf.mxu0
        %v2032 = vadd.f32 %v1827, %v2031
        %2033 = vmatmul.f32.gmra.mxu0 %v1918
        %v2034 = vpop.f32.mrf.mxu0
        %v2035 = vadd.f32 %v1827, %v2034
        %2036 = vmatmul.f32.gmra.mxu0 %v1921
        %v2037 = vpop.f32.mrf.mxu0
        %v2038 = vadd.f32 %v1827, %v2037
        %2039 = vmatmul.f32.gmra.mxu0 %v1924
        %v2040 = vpop.f32.mrf.mxu0
        %v2041 = vadd.f32 %v1827, %v2040
        %2042 = vdwg.mxu0
        %v2043 = vmax.f32 %v1948, 0.0
        %v2044 = vmax.f32 %v1951, 0.0
        %v2045 = vmax.f32 %v1954, 0.0
        %v2046 = vmax.f32 %v1957, 0.0
        %v2047 = vmax.f32 %v1960, 0.0
        %v2048 = vmax.f32 %v1963, 0.0
        %v2049 = vmax.f32 %v1966, 0.0
        %v2050 = vmax.f32 %v1969, 0.0
        %v2051 = vmax.f32 %v1972, 0.0
        %v2052 = vmax.f32 %v1975, 0.0
        %v2053 = vmax.f32 %v1978, 0.0
        %v2054 = vmax.f32 %v1981, 0.0
        %v2055 = vmax.f32 %v1984, 0.0
        %v2056 = vmax.f32 %v1987, 0.0
        %v2057 = vmax.f32 %v1990, 0.0
        %v2058 = vmax.f32 %v1993, 0.0
        %v2059 = vmax.f32 %v1996, 0.0
        %v2060 = vmax.f32 %v1999, 0.0
        %v2061 = vmax.f32 %v2002, 0.0
        %v2062 = vmax.f32 %v2005, 0.0
        %v2063 = vmax.f32 %v2008, 0.0
        %v2064 = vmax.f32 %v2011, 0.0
        %v2065 = vmax.f32 %v2014, 0.0
        %v2066 = vmax.f32 %v2017, 0.0
        %v2067 = vmax.f32 %v2020, 0.0
        %v2068 = vmax.f32 %v2023, 0.0
        %v2069 = vmax.f32 %v2026, 0.0
        %v2070 = vmax.f32 %v2029, 0.0
        %v2071 = vmax.f32 %v2032, 0.0
        %v2072 = vmax.f32 %v2035, 0.0
        %v2073 = vmax.f32 %v2038, 0.0
        %v2074 = vmax.f32 %v2041, 0.0
        %2075 = vst [vmem:[#allocation2] sm:$0xff] 0.0
        %2076 = vst [vmem:[#allocation2 + $0x8] sm:$0xff] 0.0
        %s2077 = scalar_lea.vmem [#allocation2], 272
        %2078 = vst [vmem:[%s2077] sm:$0xff] 0.0
        %2079 = vst [vmem:[%s2077 + $0x8] sm:$0xff] 0.0
        %s2080 = scalar_lea.vmem [#allocation2], 288
        %2081 = vst [vmem:[%s2080] sm:$0xff] 0.0
        %2082 = vst [vmem:[%s2080 + $0x8] sm:$0xff] 0.0
        %s2083 = scalar_lea.vmem [#allocation2], 560
        %2084 = vst [vmem:[%s2083] sm:$0xff] 0.0
        %2085 = vst [vmem:[%s2083 + $0x8] sm:$0xff] 0.0
        %s2086 = scalar_lea.vmem [#allocation2], 576
        %2087 = vst [vmem:[%s2086] sm:$0xff] 0.0
        %2088 = vst [vmem:[%s2086 + $0x8] sm:$0xff] 0.0
        %s2089 = scalar_lea.vmem [#allocation2], 848
        %2090 = vst [vmem:[%s2089] sm:$0xff] 0.0
        %2091 = vst [vmem:[%s2089 + $0x8] sm:$0xff] 0.0
        %s2092 = scalar_lea.vmem [#allocation2], 304
        %2093 = vst [vmem:[%s2092] sm:$0xff] %v2043
        %2094 = vst [vmem:[%s2092 + $0x8] sm:$0xff] %v2044
        %2095 = vst [vmem:[%s2092 + $0x10] sm:$0xff] %v2045
        %2096 = vst [vmem:[%s2092 + $0x18] sm:$0xff] %v2046
        %2097 = vst [vmem:[%s2092 + $0x20] sm:$0xff] %v2047
        %2098 = vst [vmem:[%s2092 + $0x28] sm:$0xff] %v2048
        %2099 = vst [vmem:[%s2092 + $0x30] sm:$0xff] %v2049
        %2100 = vst [vmem:[%s2092 + $0x38] sm:$0xff] %v2050
        %2101 = vst [vmem:[%s2092 + $0x40] sm:$0xff] %v2051
        %2102 = vst [vmem:[%s2092 + $0x48] sm:$0xff] %v2052
        %2103 = vst [vmem:[%s2092 + $0x50] sm:$0xff] %v2053
        %2104 = vst [vmem:[%s2092 + $0x58] sm:$0xff] %v2054
        %2105 = vst [vmem:[%s2092 + $0x60] sm:$0xff] %v2055
        %2106 = vst [vmem:[%s2092 + $0x68] sm:$0xff] %v2056
        %2107 = vst [vmem:[%s2092 + $0x70] sm:$0xff] %v2057
        %2108 = vst [vmem:[%s2092 + $0x78] sm:$0xff] %v2058
        %2109 = vst [vmem:[%s2092 + $0x80] sm:$0xff] %v2059
        %2110 = vst [vmem:[%s2092 + $0x88] sm:$0xff] %v2060
        %2111 = vst [vmem:[%s2092 + $0x90] sm:$0xff] %v2061
        %2112 = vst [vmem:[%s2092 + $0x98] sm:$0xff] %v2062
        %2113 = vst [vmem:[%s2092 + $0xa0] sm:$0xff] %v2063
        %2114 = vst [vmem:[%s2092 + $0xa8] sm:$0xff] %v2064
        %2115 = vst [vmem:[%s2092 + $0xb0] sm:$0xff] %v2065
        %2116 = vst [vmem:[%s2092 + $0xb8] sm:$0xff] %v2066
        %2117 = vst [vmem:[%s2092 + $0xc0] sm:$0xff] %v2067
        %2118 = vst [vmem:[%s2092 + $0xc8] sm:$0xff] %v2068
        %2119 = vst [vmem:[%s2092 + $0xd0] sm:$0xff] %v2069
        %2120 = vst [vmem:[%s2092 + $0xd8] sm:$0xff] %v2070
        %2121 = vst [vmem:[%s2092 + $0xe0] sm:$0xff] %v2071
        %2122 = vst [vmem:[%s2092 + $0xe8] sm:$0xff] %v2072
        %2123 = vst [vmem:[%s2092 + $0xf0] sm:$0xff] %v2073
        %2124 = vst [vmem:[%s2092 + $0xf8] sm:$0xff] %v2074
        %s2125 = scalar_lea.vmem [#allocation2], 16
        %2126 = vst [vmem:[%s2125 + $0x1] sm:$0xff] %v2043
        %2127 = vst [vmem:[%s2125 + $0x9] sm:$0x7f] %v2044
        %2128 = vst [vmem:[%s2125 + $0x11] sm:$0xff] %v2045
        %2129 = vst [vmem:[%s2125 + $0x19] sm:$0x7f] %v2046
        %2130 = vst [vmem:[%s2125 + $0x21] sm:$0xff] %v2047
        %2131 = vst [vmem:[%s2125 + $0x29] sm:$0x7f] %v2048
        %2132 = vst [vmem:[%s2125 + $0x31] sm:$0xff] %v2049
        %2133 = vst [vmem:[%s2125 + $0x39] sm:$0x7f] %v2050
        %2134 = vst [vmem:[%s2125 + $0x41] sm:$0xff] %v2051
        %2135 = vst [vmem:[%s2125 + $0x49] sm:$0x7f] %v2052
        %2136 = vst [vmem:[%s2125 + $0x51] sm:$0xff] %v2053
        %2137 = vst [vmem:[%s2125 + $0x59] sm:$0x7f] %v2054
        %2138 = vst [vmem:[%s2125 + $0x61] sm:$0xff] %v2055
        %2139 = vst [vmem:[%s2125 + $0x69] sm:$0x7f] %v2056
        %2140 = vst [vmem:[%s2125 + $0x71] sm:$0xff] %v2057
        %2141 = vst [vmem:[%s2125 + $0x79] sm:$0x7f] %v2058
        %2142 = vst [vmem:[%s2125 + $0x81] sm:$0xff] %v2059
        %2143 = vst [vmem:[%s2125 + $0x89] sm:$0x7f] %v2060
        %2144 = vst [vmem:[%s2125 + $0x91] sm:$0xff] %v2061
        %2145 = vst [vmem:[%s2125 + $0x99] sm:$0x7f] %v2062
        %2146 = vst [vmem:[%s2125 + $0xa1] sm:$0xff] %v2063
        %2147 = vst [vmem:[%s2125 + $0xa9] sm:$0x7f] %v2064
        %2148 = vst [vmem:[%s2125 + $0xb1] sm:$0xff] %v2065
        %2149 = vst [vmem:[%s2125 + $0xb9] sm:$0x7f] %v2066
        %2150 = vst [vmem:[%s2125 + $0xc1] sm:$0xff] %v2067
        %2151 = vst [vmem:[%s2125 + $0xc9] sm:$0x7f] %v2068
        %2152 = vst [vmem:[%s2125 + $0xd1] sm:$0xff] %v2069
        %2153 = vst [vmem:[%s2125 + $0xd9] sm:$0x7f] %v2070
        %2154 = vst [vmem:[%s2125 + $0xe1] sm:$0xff] %v2071
        %2155 = vst [vmem:[%s2125 + $0xe9] sm:$0x7f] %v2072
        %2156 = vst [vmem:[%s2125 + $0xf1] sm:$0xff] %v2073
        %2157 = vst [vmem:[%s2125 + $0xf9] sm:$0x7f] %v2074
        %2158 = vst [vmem:[%s2125] sm:$0x1] 0.0
        %2159 = vst [vmem:[%s2125 + $0x10] sm:$0x1] 0.0
        %2160 = vst [vmem:[%s2125 + $0x20] sm:$0x1] 0.0
        %2161 = vst [vmem:[%s2125 + $0x30] sm:$0x1] 0.0
        %2162 = vst [vmem:[%s2125 + $0x40] sm:$0x1] 0.0
        %2163 = vst [vmem:[%s2125 + $0x50] sm:$0x1] 0.0
        %2164 = vst [vmem:[%s2125 + $0x60] sm:$0x1] 0.0
        %2165 = vst [vmem:[%s2125 + $0x70] sm:$0x1] 0.0
        %2166 = vst [vmem:[%s2125 + $0x80] sm:$0x1] 0.0
        %2167 = vst [vmem:[%s2125 + $0x90] sm:$0x1] 0.0
        %2168 = vst [vmem:[%s2125 + $0xa0] sm:$0x1] 0.0
        %2169 = vst [vmem:[%s2125 + $0xb0] sm:$0x1] 0.0
        %2170 = vst [vmem:[%s2125 + $0xc0] sm:$0x1] 0.0
        %2171 = vst [vmem:[%s2125 + $0xd0] sm:$0x1] 0.0
        %2172 = vst [vmem:[%s2125 + $0xe0] sm:$0x1] 0.0
        %2173 = vst [vmem:[%s2125 + $0xf0] sm:$0x1] 0.0
        %s2174 = scalar_lea.vmem [#allocation2], 592
        %2175 = vst [vmem:[%s2174 - $0x1] sm:$0xfe] %v2043
        %2176 = vst [vmem:[%s2174 + $0x7] sm:$0xff] %v2044
        %2177 = vst [vmem:[%s2174 + $0xf] sm:$0xfe] %v2045
        %2178 = vst [vmem:[%s2174 + $0x17] sm:$0xff] %v2046
        %2179 = vst [vmem:[%s2174 + $0x1f] sm:$0xfe] %v2047
        %2180 = vst [vmem:[%s2174 + $0x27] sm:$0xff] %v2048
        %2181 = vst [vmem:[%s2174 + $0x2f] sm:$0xfe] %v2049
        %2182 = vst [vmem:[%s2174 + $0x37] sm:$0xff] %v2050
        %2183 = vst [vmem:[%s2174 + $0x3f] sm:$0xfe] %v2051
        %2184 = vst [vmem:[%s2174 + $0x47] sm:$0xff] %v2052
        %2185 = vst [vmem:[%s2174 + $0x4f] sm:$0xfe] %v2053
        %2186 = vst [vmem:[%s2174 + $0x57] sm:$0xff] %v2054
        %2187 = vst [vmem:[%s2174 + $0x5f] sm:$0xfe] %v2055
        %2188 = vst [vmem:[%s2174 + $0x67] sm:$0xff] %v2056
        %2189 = vst [vmem:[%s2174 + $0x6f] sm:$0xfe] %v2057
        %2190 = vst [vmem:[%s2174 + $0x77] sm:$0xff] %v2058
        %2191 = vst [vmem:[%s2174 + $0x7f] sm:$0xfe] %v2059
        %2192 = vst [vmem:[%s2174 + $0x87] sm:$0xff] %v2060
        %2193 = vst [vmem:[%s2174 + $0x8f] sm:$0xfe] %v2061
        %2194 = vst [vmem:[%s2174 + $0x97] sm:$0xff] %v2062
        %2195 = vst [vmem:[%s2174 + $0x9f] sm:$0xfe] %v2063
        %2196 = vst [vmem:[%s2174 + $0xa7] sm:$0xff] %v2064
        %2197 = vst [vmem:[%s2174 + $0xaf] sm:$0xfe] %v2065
        %2198 = vst [vmem:[%s2174 + $0xb7] sm:$0xff] %v2066
        %2199 = vst [vmem:[%s2174 + $0xbf] sm:$0xfe] %v2067
        %2200 = vst [vmem:[%s2174 + $0xc7] sm:$0xff] %v2068
        %2201 = vst [vmem:[%s2174 + $0xcf] sm:$0xfe] %v2069
        %2202 = vst [vmem:[%s2174 + $0xd7] sm:$0xff] %v2070
        %2203 = vst [vmem:[%s2174 + $0xdf] sm:$0xfe] %v2071
        %2204 = vst [vmem:[%s2174 + $0xe7] sm:$0xff] %v2072
        %2205 = vst [vmem:[%s2174 + $0xef] sm:$0xfe] %v2073
        %2206 = vst [vmem:[%s2174 + $0xf7] sm:$0xff] %v2074
        %2207 = vst [vmem:[%s2174 + $0xf] sm:$0x1] 0.0
        %2208 = vst [vmem:[%s2174 + $0x1f] sm:$0x1] 0.0
        %2209 = vst [vmem:[%s2174 + $0x2f] sm:$0x1] 0.0
        %2210 = vst [vmem:[%s2174 + $0x3f] sm:$0x1] 0.0
        %2211 = vst [vmem:[%s2174 + $0x4f] sm:$0x1] 0.0
        %2212 = vst [vmem:[%s2174 + $0x5f] sm:$0x1] 0.0
        %2213 = vst [vmem:[%s2174 + $0x6f] sm:$0x1] 0.0
        %2214 = vst [vmem:[%s2174 + $0x7f] sm:$0x1] 0.0
        %2215 = vst [vmem:[%s2174 + $0x8f] sm:$0x1] 0.0
        %2216 = vst [vmem:[%s2174 + $0x9f] sm:$0x1] 0.0
        %2217 = vst [vmem:[%s2174 + $0xaf] sm:$0x1] 0.0
        %2218 = vst [vmem:[%s2174 + $0xbf] sm:$0x1] 0.0
        %2219 = vst [vmem:[%s2174 + $0xcf] sm:$0x1] 0.0
        %2220 = vst [vmem:[%s2174 + $0xdf] sm:$0x1] 0.0
        %2221 = vst [vmem:[%s2174 + $0xef] sm:$0x1] 0.0
        %2222 = vst [vmem:[%s2174 + $0xff] sm:$0x1] 0.0
        %v2223 = vld [vmem:[#allocation2] sm:$0xff]
        %v2224 = vld [vmem:[#allocation2 + $0x8] sm:$0xff]
        %v2225 = vld [vmem:[#allocation2 + $0x10] sm:$0xff]
        %v2226 = vld [vmem:[#allocation2 + $0x18] sm:$0xff]
        %v2227 = vld [vmem:[#allocation2 + $0x20] sm:$0xff]
        %v2228 = vld [vmem:[#allocation2 + $0x28] sm:$0xff]
        %v2229 = vld [vmem:[#allocation2 + $0x30] sm:$0xff]
        %v2230 = vld [vmem:[#allocation2 + $0x38] sm:$0xff]
        %v2231 = vld [vmem:[#allocation2 + $0x40] sm:$0xff]
        %v2232 = vld [vmem:[#allocation2 + $0x48] sm:$0xff]
        %v2233 = vld [vmem:[#allocation2 + $0x50] sm:$0xff]
        %v2234 = vld [vmem:[#allocation2 + $0x58] sm:$0xff]
        %v2235 = vld [vmem:[#allocation2 + $0x60] sm:$0xff]
        %v2236 = vld [vmem:[#allocation2 + $0x68] sm:$0xff]
        %v2237 = vld [vmem:[#allocation2 + $0x70] sm:$0xff]
        %v2238 = vld [vmem:[#allocation2 + $0x78] sm:$0xff]
        %v2239 = vld [vmem:[#allocation3] sm:$0xff]
        %v2240 = vld [vmem:[#allocation3 + $0x8] sm:$0xff]
        %v2241 = vld [vmem:[#allocation3 + $0x10] sm:$0xff]
        %v2242 = vld [vmem:[#allocation3 + $0x18] sm:$0xff]
        %v2243 = vld [vmem:[#allocation3 + $0x20] sm:$0xff]
        %v2244 = vld [vmem:[#allocation3 + $0x28] sm:$0xff]
        %v2245 = vld [vmem:[#allocation3 + $0x30] sm:$0xff]
        %v2246 = vld [vmem:[#allocation3 + $0x38] sm:$0xff]
        %v2247 = vld [vmem:[#allocation3 + $0x40] sm:$0xff]
        %v2248 = vld [vmem:[#allocation3 + $0x48] sm:$0xff]
        %v2249 = vld [vmem:[#allocation3 + $0x50] sm:$0xff]
        %v2250 = vld [vmem:[#allocation3 + $0x58] sm:$0xff]
        %v2251 = vld [vmem:[#allocation3 + $0x60] sm:$0xff]
        %v2252 = vld [vmem:[#allocation3 + $0x68] sm:$0xff]
        %v2253 = vld [vmem:[#allocation3 + $0x70] sm:$0xff]
        %v2254 = vld [vmem:[#allocation3 + $0x78] sm:$0xff]
        %v2255 = vld [vmem:[%s2080] sm:$0xff]
        %v2256 = vld [vmem:[%s2080 + $0x8] sm:$0xff]
        %v2257 = vld [vmem:[%s2080 + $0x10] sm:$0xff]
        %v2258 = vld [vmem:[%s2080 + $0x18] sm:$0xff]
        %v2259 = vld [vmem:[%s2080 + $0x20] sm:$0xff]
        %v2260 = vld [vmem:[%s2080 + $0x28] sm:$0xff]
        %v2261 = vld [vmem:[%s2080 + $0x30] sm:$0xff]
        %v2262 = vld [vmem:[%s2080 + $0x38] sm:$0xff]
        %v2263 = vld [vmem:[%s2080 + $0x40] sm:$0xff]
        %v2264 = vld [vmem:[%s2080 + $0x48] sm:$0xff]
        %v2265 = vld [vmem:[%s2080 + $0x50] sm:$0xff]
        %v2266 = vld [vmem:[%s2080 + $0x58] sm:$0xff]
        %v2267 = vld [vmem:[%s2080 + $0x60] sm:$0xff]
        %v2268 = vld [vmem:[%s2080 + $0x68] sm:$0xff]
        %v2269 = vld [vmem:[%s2080 + $0x70] sm:$0xff]
        %v2270 = vld [vmem:[%s2080 + $0x78] sm:$0xff]
        %s2271 = scalar_lea.vmem [#allocation3], 128
        %v2272 = vld [vmem:[%s2271] sm:$0xff]
        %v2273 = vld [vmem:[%s2271 + $0x8] sm:$0xff]
        %v2274 = vld [vmem:[%s2271 + $0x10] sm:$0xff]
        %v2275 = vld [vmem:[%s2271 + $0x18] sm:$0xff]
        %v2276 = vld [vmem:[%s2271 + $0x20] sm:$0xff]
        %v2277 = vld [vmem:[%s2271 + $0x28] sm:$0xff]
        %v2278 = vld [vmem:[%s2271 + $0x30] sm:$0xff]
        %v2279 = vld [vmem:[%s2271 + $0x38] sm:$0xff]
        %v2280 = vld [vmem:[%s2271 + $0x40] sm:$0xff]
        %v2281 = vld [vmem:[%s2271 + $0x48] sm:$0xff]
        %v2282 = vld [vmem:[%s2271 + $0x50] sm:$0xff]
        %v2283 = vld [vmem:[%s2271 + $0x58] sm:$0xff]
        %v2284 = vld [vmem:[%s2271 + $0x60] sm:$0xff]
        %v2285 = vld [vmem:[%s2271 + $0x68] sm:$0xff]
        %v2286 = vld [vmem:[%s2271 + $0x70] sm:$0xff]
        %v2287 = vld [vmem:[%s2271 + $0x78] sm:$0xff]
        %2288 = vmatpush.msra.mxu0 %v2287
        %2289 = vmatpush.msra.mxu0 %v2286
        %2290 = vmatpush.msra.mxu0 %v2285
        %2291 = vmatpush.msra.mxu0 %v2284
        %2292 = vmatpush.msra.mxu0 %v2283
        %2293 = vmatpush.msra.mxu0 %v2282
        %2294 = vmatpush.msra.mxu0 %v2281
        %2295 = vmatpush.msra.mxu0 %v2280
        %2296 = vmatpush.msra.mxu0 %v2279
        %2297 = vmatpush.msra.mxu0 %v2278
        %2298 = vmatpush.msra.mxu0 %v2277
        %2299 = vmatpush.msra.mxu0 %v2276
        %2300 = vmatpush.msra.mxu0 %v2275
        %2301 = vmatpush.msra.mxu0 %v2274
        %2302 = vmatpush.msra.mxu0 %v2273
        %2303 = vmatpush.msra.mxu0 %v2272
        %2304 = vmatmul.f32.gmra.mxu0 %v2255
        %v2305 = vpop.f32.mrf.mxu0
        %v2306 = vadd.f32 0.0, %v2305
        %2307 = vmatmul.f32.gmra.mxu0 %v2256
        %v2308 = vpop.f32.mrf.mxu0
        %v2309 = vadd.f32 0.0, %v2308
        %2310 = vmatmul.f32.gmra.mxu0 %v2257
        %v2311 = vpop.f32.mrf.mxu0
        %v2312 = vadd.f32 0.0, %v2311
        %2313 = vmatmul.f32.gmra.mxu0 %v2258
        %v2314 = vpop.f32.mrf.mxu0
        %v2315 = vadd.f32 0.0, %v2314
        %2316 = vmatmul.f32.gmra.mxu0 %v2259
        %v2317 = vpop.f32.mrf.mxu0
        %v2318 = vadd.f32 0.0, %v2317
        %2319 = vmatmul.f32.gmra.mxu0 %v2260
        %v2320 = vpop.f32.mrf.mxu0
        %v2321 = vadd.f32 0.0, %v2320
        %2322 = vmatmul.f32.gmra.mxu0 %v2261
        %v2323 = vpop.f32.mrf.mxu0
        %v2324 = vadd.f32 0.0, %v2323
        %2325 = vmatmul.f32.gmra.mxu0 %v2262
        %v2326 = vpop.f32.mrf.mxu0
        %v2327 = vadd.f32 0.0, %v2326
        %2328 = vmatmul.f32.gmra.mxu0 %v2263
        %v2329 = vpop.f32.mrf.mxu0
        %v2330 = vadd.f32 0.0, %v2329
        %2331 = vmatmul.f32.gmra.mxu0 %v2264
        %v2332 = vpop.f32.mrf.mxu0
        %v2333 = vadd.f32 0.0, %v2332
        %2334 = vmatmul.f32.gmra.mxu0 %v2265
        %v2335 = vpop.f32.mrf.mxu0
        %v2336 = vadd.f32 0.0, %v2335
        %2337 = vmatmul.f32.gmra.mxu0 %v2266
        %v2338 = vpop.f32.mrf.mxu0
        %v2339 = vadd.f32 0.0, %v2338
        %2340 = vmatmul.f32.gmra.mxu0 %v2267
        %v2341 = vpop.f32.mrf.mxu0
        %v2342 = vadd.f32 0.0, %v2341
        %2343 = vmatmul.f32.gmra.mxu0 %v2268
        %v2344 = vpop.f32.mrf.mxu0
        %v2345 = vadd.f32 0.0, %v2344
        %2346 = vmatmul.f32.gmra.mxu0 %v2269
        %v2347 = vpop.f32.mrf.mxu0
        %v2348 = vadd.f32 0.0, %v2347
        %2349 = vmatmul.f32.gmra.mxu0 %v2270
        %v2350 = vpop.f32.mrf.mxu0
        %v2351 = vadd.f32 0.0, %v2350
        %2352 = vdwg.mxu0
        %2353 = vmatpush.msra.mxu0 %v2254
        %2354 = vmatpush.msra.mxu0 %v2253
        %2355 = vmatpush.msra.mxu0 %v2252
        %2356 = vmatpush.msra.mxu0 %v2251
        %2357 = vmatpush.msra.mxu0 %v2250
        %2358 = vmatpush.msra.mxu0 %v2249
        %2359 = vmatpush.msra.mxu0 %v2248
        %2360 = vmatpush.msra.mxu0 %v2247
        %2361 = vmatpush.msra.mxu0 %v2246
        %2362 = vmatpush.msra.mxu0 %v2245
        %2363 = vmatpush.msra.mxu0 %v2244
        %2364 = vmatpush.msra.mxu0 %v2243
        %2365 = vmatpush.msra.mxu0 %v2242
        %2366 = vmatpush.msra.mxu0 %v2241
        %2367 = vmatpush.msra.mxu0 %v2240
        %2368 = vmatpush.msra.mxu0 %v2239
        %2369 = vmatmul.f32.gmra.mxu0 %v2223
        %v2370 = vpop.f32.mrf.mxu0
        %v2371 = vadd.f32 %v2306, %v2370
        %2372 = vmatmul.f32.gmra.mxu0 %v2224
        %v2373 = vpop.f32.mrf.mxu0
        %v2374 = vadd.f32 %v2309, %v2373
        %2375 = vmatmul.f32.gmra.mxu0 %v2225
        %v2376 = vpop.f32.mrf.mxu0
        %v2377 = vadd.f32 %v2312, %v2376
        %2378 = vmatmul.f32.gmra.mxu0 %v2226
        %v2379 = vpop.f32.mrf.mxu0
        %v2380 = vadd.f32 %v2315, %v2379
        %2381 = vmatmul.f32.gmra.mxu0 %v2227
        %v2382 = vpop.f32.mrf.mxu0
        %v2383 = vadd.f32 %v2318, %v2382
        %2384 = vmatmul.f32.gmra.mxu0 %v2228
        %v2385 = vpop.f32.mrf.mxu0
        %v2386 = vadd.f32 %v2321, %v2385
        %2387 = vmatmul.f32.gmra.mxu0 %v2229
        %v2388 = vpop.f32.mrf.mxu0
        %v2389 = vadd.f32 %v2324, %v2388
        %2390 = vmatmul.f32.gmra.mxu0 %v2230
        %v2391 = vpop.f32.mrf.mxu0
        %v2392 = vadd.f32 %v2327, %v2391
        %2393 = vmatmul.f32.gmra.mxu0 %v2231
        %v2394 = vpop.f32.mrf.mxu0
        %v2395 = vadd.f32 %v2330, %v2394
        %2396 = vmatmul.f32.gmra.mxu0 %v2232
        %v2397 = vpop.f32.mrf.mxu0
        %v2398 = vadd.f32 %v2333, %v2397
        %2399 = vmatmul.f32.gmra.mxu0 %v2233
        %v2400 = vpop.f32.mrf.mxu0
        %v2401 = vadd.f32 %v2336, %v2400
        %2402 = vmatmul.f32.gmra.mxu0 %v2234
        %v2403 = vpop.f32.mrf.mxu0
        %v2404 = vadd.f32 %v2339, %v2403
        %2405 = vmatmul.f32.gmra.mxu0 %v2235
        %v2406 = vpop.f32.mrf.mxu0
        %v2407 = vadd.f32 %v2342, %v2406
        %2408 = vmatmul.f32.gmra.mxu0 %v2236
        %v2409 = vpop.f32.mrf.mxu0
        %v2410 = vadd.f32 %v2345, %v2409
        %2411 = vmatmul.f32.gmra.mxu0 %v2237
        %v2412 = vpop.f32.mrf.mxu0
        %v2413 = vadd.f32 %v2348, %v2412
        %2414 = vmatmul.f32.gmra.mxu0 %v2238
        %v2415 = vpop.f32.mrf.mxu0
        %v2416 = vadd.f32 %v2351, %v2415
        %2417 = vdwg.mxu0
        %v2418 = vld [vmem:[%s2086] sm:$0xff]
        %v2419 = vld [vmem:[%s2086 + $0x8] sm:$0xff]
        %v2420 = vld [vmem:[%s2086 + $0x10] sm:$0xff]
        %v2421 = vld [vmem:[%s2086 + $0x18] sm:$0xff]
        %v2422 = vld [vmem:[%s2086 + $0x20] sm:$0xff]
        %v2423 = vld [vmem:[%s2086 + $0x28] sm:$0xff]
        %v2424 = vld [vmem:[%s2086 + $0x30] sm:$0xff]
        %v2425 = vld [vmem:[%s2086 + $0x38] sm:$0xff]
        %v2426 = vld [vmem:[%s2086 + $0x40] sm:$0xff]
        %v2427 = vld [vmem:[%s2086 + $0x48] sm:$0xff]
        %v2428 = vld [vmem:[%s2086 + $0x50] sm:$0xff]
        %v2429 = vld [vmem:[%s2086 + $0x58] sm:$0xff]
        %v2430 = vld [vmem:[%s2086 + $0x60] sm:$0xff]
        %v2431 = vld [vmem:[%s2086 + $0x68] sm:$0xff]
        %v2432 = vld [vmem:[%s2086 + $0x70] sm:$0xff]
        %v2433 = vld [vmem:[%s2086 + $0x78] sm:$0xff]
        %s2434 = scalar_lea.vmem [#allocation3], 256
        %v2435 = vld [vmem:[%s2434] sm:$0xff]
        %v2436 = vld [vmem:[%s2434 + $0x8] sm:$0xff]
        %v2437 = vld [vmem:[%s2434 + $0x10] sm:$0xff]
        %v2438 = vld [vmem:[%s2434 + $0x18] sm:$0xff]
        %v2439 = vld [vmem:[%s2434 + $0x20] sm:$0xff]
        %v2440 = vld [vmem:[%s2434 + $0x28] sm:$0xff]
        %v2441 = vld [vmem:[%s2434 + $0x30] sm:$0xff]
        %v2442 = vld [vmem:[%s2434 + $0x38] sm:$0xff]
        %v2443 = vld [vmem:[%s2434 + $0x40] sm:$0xff]
        %v2444 = vld [vmem:[%s2434 + $0x48] sm:$0xff]
        %v2445 = vld [vmem:[%s2434 + $0x50] sm:$0xff]
        %v2446 = vld [vmem:[%s2434 + $0x58] sm:$0xff]
        %v2447 = vld [vmem:[%s2434 + $0x60] sm:$0xff]
        %v2448 = vld [vmem:[%s2434 + $0x68] sm:$0xff]
        %v2449 = vld [vmem:[%s2434 + $0x70] sm:$0xff]
        %v2450 = vld [vmem:[%s2434 + $0x78] sm:$0xff]
        %2451 = vmatpush.msra.mxu0 %v2450
        %2452 = vmatpush.msra.mxu0 %v2449
        %2453 = vmatpush.msra.mxu0 %v2448
        %2454 = vmatpush.msra.mxu0 %v2447
        %2455 = vmatpush.msra.mxu0 %v2446
        %2456 = vmatpush.msra.mxu0 %v2445
        %2457 = vmatpush.msra.mxu0 %v2444
        %2458 = vmatpush.msra.mxu0 %v2443
        %2459 = vmatpush.msra.mxu0 %v2442
        %2460 = vmatpush.msra.mxu0 %v2441
        %2461 = vmatpush.msra.mxu0 %v2440
        %2462 = vmatpush.msra.mxu0 %v2439
        %2463 = vmatpush.msra.mxu0 %v2438
        %2464 = vmatpush.msra.mxu0 %v2437
        %2465 = vmatpush.msra.mxu0 %v2436
        %2466 = vmatpush.msra.mxu0 %v2435
        %2467 = vmatmul.f32.gmra.mxu0 %v2418
        %v2468 = vpop.f32.mrf.mxu0
        %v2469 = vadd.f32 0.0, %v2468
        %2470 = vmatmul.f32.gmra.mxu0 %v2419
        %v2471 = vpop.f32.mrf.mxu0
        %v2472 = vadd.f32 0.0, %v2471
        %2473 = vmatmul.f32.gmra.mxu0 %v2420
        %v2474 = vpop.f32.mrf.mxu0
        %v2475 = vadd.f32 0.0, %v2474
        %2476 = vmatmul.f32.gmra.mxu0 %v2421
        %v2477 = vpop.f32.mrf.mxu0
        %v2478 = vadd.f32 0.0, %v2477
        %2479 = vmatmul.f32.gmra.mxu0 %v2422
        %v2480 = vpop.f32.mrf.mxu0
        %v2481 = vadd.f32 0.0, %v2480
        %2482 = vmatmul.f32.gmra.mxu0 %v2423
        %v2483 = vpop.f32.mrf.mxu0
        %v2484 = vadd.f32 0.0, %v2483
        %2485 = vmatmul.f32.gmra.mxu0 %v2424
        %v2486 = vpop.f32.mrf.mxu0
        %v2487 = vadd.f32 0.0, %v2486
        %2488 = vmatmul.f32.gmra.mxu0 %v2425
        %v2489 = vpop.f32.mrf.mxu0
        %v2490 = vadd.f32 0.0, %v2489
        %2491 = vmatmul.f32.gmra.mxu0 %v2426
        %v2492 = vpop.f32.mrf.mxu0
        %v2493 = vadd.f32 0.0, %v2492
        %2494 = vmatmul.f32.gmra.mxu0 %v2427
        %v2495 = vpop.f32.mrf.mxu0
        %v2496 = vadd.f32 0.0, %v2495
        %2497 = vmatmul.f32.gmra.mxu0 %v2428
        %v2498 = vpop.f32.mrf.mxu0
        %v2499 = vadd.f32 0.0, %v2498
        %2500 = vmatmul.f32.gmra.mxu0 %v2429
        %v2501 = vpop.f32.mrf.mxu0
        %v2502 = vadd.f32 0.0, %v2501
        %2503 = vmatmul.f32.gmra.mxu0 %v2430
        %v2504 = vpop.f32.mrf.mxu0
        %v2505 = vadd.f32 0.0, %v2504
        %2506 = vmatmul.f32.gmra.mxu0 %v2431
        %v2507 = vpop.f32.mrf.mxu0
        %v2508 = vadd.f32 0.0, %v2507
        %2509 = vmatmul.f32.gmra.mxu0 %v2432
        %v2510 = vpop.f32.mrf.mxu0
        %v2511 = vadd.f32 0.0, %v2510
        %2512 = vmatmul.f32.gmra.mxu0 %v2433
        %v2513 = vpop.f32.mrf.mxu0
        %v2514 = vadd.f32 0.0, %v2513
        %2515 = vdwg.mxu0
        %v2516 = vadd.f32 %v2371, %v2469
        %v2517 = vadd.f32 %v2374, %v2472
        %v2518 = vadd.f32 %v2377, %v2475
        %v2519 = vadd.f32 %v2380, %v2478
        %v2520 = vadd.f32 %v2383, %v2481
        %v2521 = vadd.f32 %v2386, %v2484
        %v2522 = vadd.f32 %v2389, %v2487
        %v2523 = vadd.f32 %v2392, %v2490
        %v2524 = vadd.f32 %v2395, %v2493
        %v2525 = vadd.f32 %v2398, %v2496
        %v2526 = vadd.f32 %v2401, %v2499
        %v2527 = vadd.f32 %v2404, %v2502
        %v2528 = vadd.f32 %v2407, %v2505
        %v2529 = vadd.f32 %v2410, %v2508
        %v2530 = vadd.f32 %v2413, %v2511
        %v2531 = vadd.f32 %v2416, %v2514
        %v2532 = vld [vmem:[%s2125] sm:$0xff]
        %v2533 = vld [vmem:[%s2125 + $0x8] sm:$0xff]
        %v2534 = vld [vmem:[%s2125 + $0x10] sm:$0xff]
        %v2535 = vld [vmem:[%s2125 + $0x18] sm:$0xff]
        %v2536 = vld [vmem:[%s2125 + $0x20] sm:$0xff]
        %v2537 = vld [vmem:[%s2125 + $0x28] sm:$0xff]
        %v2538 = vld [vmem:[%s2125 + $0x30] sm:$0xff]
        %v2539 = vld [vmem:[%s2125 + $0x38] sm:$0xff]
        %v2540 = vld [vmem:[%s2125 + $0x40] sm:$0xff]
        %v2541 = vld [vmem:[%s2125 + $0x48] sm:$0xff]
        %v2542 = vld [vmem:[%s2125 + $0x50] sm:$0xff]
        %v2543 = vld [vmem:[%s2125 + $0x58] sm:$0xff]
        %v2544 = vld [vmem:[%s2125 + $0x60] sm:$0xff]
        %v2545 = vld [vmem:[%s2125 + $0x68] sm:$0xff]
        %v2546 = vld [vmem:[%s2125 + $0x70] sm:$0xff]
        %v2547 = vld [vmem:[%s2125 + $0x78] sm:$0xff]
        %s2548 = scalar_lea.vmem [#allocation3], 384
        %v2549 = vld [vmem:[%s2548] sm:$0xff]
        %v2550 = vld [vmem:[%s2548 + $0x8] sm:$0xff]
        %v2551 = vld [vmem:[%s2548 + $0x10] sm:$0xff]
        %v2552 = vld [vmem:[%s2548 + $0x18] sm:$0xff]
        %v2553 = vld [vmem:[%s2548 + $0x20] sm:$0xff]
        %v2554 = vld [vmem:[%s2548 + $0x28] sm:$0xff]
        %v2555 = vld [vmem:[%s2548 + $0x30] sm:$0xff]
        %v2556 = vld [vmem:[%s2548 + $0x38] sm:$0xff]
        %v2557 = vld [vmem:[%s2548 + $0x40] sm:$0xff]
        %v2558 = vld [vmem:[%s2548 + $0x48] sm:$0xff]
        %v2559 = vld [vmem:[%s2548 + $0x50] sm:$0xff]
        %v2560 = vld [vmem:[%s2548 + $0x58] sm:$0xff]
        %v2561 = vld [vmem:[%s2548 + $0x60] sm:$0xff]
        %v2562 = vld [vmem:[%s2548 + $0x68] sm:$0xff]
        %v2563 = vld [vmem:[%s2548 + $0x70] sm:$0xff]
        %v2564 = vld [vmem:[%s2548 + $0x78] sm:$0xff]
        %2565 = vmatpush.msra.mxu0 %v2564
        %2566 = vmatpush.msra.mxu0 %v2563
        %2567 = vmatpush.msra.mxu0 %v2562
        %2568 = vmatpush.msra.mxu0 %v2561
        %2569 = vmatpush.msra.mxu0 %v2560
        %2570 = vmatpush.msra.mxu0 %v2559
        %2571 = vmatpush.msra.mxu0 %v2558
        %2572 = vmatpush.msra.mxu0 %v2557
        %2573 = vmatpush.msra.mxu0 %v2556
        %2574 = vmatpush.msra.mxu0 %v2555
        %2575 = vmatpush.msra.mxu0 %v2554
        %2576 = vmatpush.msra.mxu0 %v2553
        %2577 = vmatpush.msra.mxu0 %v2552
        %2578 = vmatpush.msra.mxu0 %v2551
        %2579 = vmatpush.msra.mxu0 %v2550
        %2580 = vmatpush.msra.mxu0 %v2549
        %2581 = vmatmul.f32.gmra.mxu0 %v2532
        %v2582 = vpop.f32.mrf.mxu0
        %v2583 = vadd.f32 0.0, %v2582
        %2584 = vmatmul.f32.gmra.mxu0 %v2533
        %v2585 = vpop.f32.mrf.mxu0
        %v2586 = vadd.f32 0.0, %v2585
        %2587 = vmatmul.f32.gmra.mxu0 %v2534
        %v2588 = vpop.f32.mrf.mxu0
        %v2589 = vadd.f32 0.0, %v2588
        %2590 = vmatmul.f32.gmra.mxu0 %v2535
        %v2591 = vpop.f32.mrf.mxu0
        %v2592 = vadd.f32 0.0, %v2591
        %2593 = vmatmul.f32.gmra.mxu0 %v2536
        %v2594 = vpop.f32.mrf.mxu0
        %v2595 = vadd.f32 0.0, %v2594
        %2596 = vmatmul.f32.gmra.mxu0 %v2537
        %v2597 = vpop.f32.mrf.mxu0
        %v2598 = vadd.f32 0.0, %v2597
        %2599 = vmatmul.f32.gmra.mxu0 %v2538
        %v2600 = vpop.f32.mrf.mxu0
        %v2601 = vadd.f32 0.0, %v2600
        %2602 = vmatmul.f32.gmra.mxu0 %v2539
        %v2603 = vpop.f32.mrf.mxu0
        %v2604 = vadd.f32 0.0, %v2603
        %2605 = vmatmul.f32.gmra.mxu0 %v2540
        %v2606 = vpop.f32.mrf.mxu0
        %v2607 = vadd.f32 0.0, %v2606
        %2608 = vmatmul.f32.gmra.mxu0 %v2541
        %v2609 = vpop.f32.mrf.mxu0
        %v2610 = vadd.f32 0.0, %v2609
        %2611 = vmatmul.f32.gmra.mxu0 %v2542
        %v2612 = vpop.f32.mrf.mxu0
        %v2613 = vadd.f32 0.0, %v2612
        %2614 = vmatmul.f32.gmra.mxu0 %v2543
        %v2615 = vpop.f32.mrf.mxu0
        %v2616 = vadd.f32 0.0, %v2615
        %2617 = vmatmul.f32.gmra.mxu0 %v2544
        %v2618 = vpop.f32.mrf.mxu0
        %v2619 = vadd.f32 0.0, %v2618
        %2620 = vmatmul.f32.gmra.mxu0 %v2545
        %v2621 = vpop.f32.mrf.mxu0
        %v2622 = vadd.f32 0.0, %v2621
        %2623 = vmatmul.f32.gmra.mxu0 %v2546
        %v2624 = vpop.f32.mrf.mxu0
        %v2625 = vadd.f32 0.0, %v2624
        %2626 = vmatmul.f32.gmra.mxu0 %v2547
        %v2627 = vpop.f32.mrf.mxu0
        %v2628 = vadd.f32 0.0, %v2627
        %2629 = vdwg.mxu0
        %v2630 = vadd.f32 %v2516, %v2583
        %v2631 = vadd.f32 %v2517, %v2586
        %v2632 = vadd.f32 %v2518, %v2589
        %v2633 = vadd.f32 %v2519, %v2592
        %v2634 = vadd.f32 %v2520, %v2595
        %v2635 = vadd.f32 %v2521, %v2598
        %v2636 = vadd.f32 %v2522, %v2601
        %v2637 = vadd.f32 %v2523, %v2604
        %v2638 = vadd.f32 %v2524, %v2607
        %v2639 = vadd.f32 %v2525, %v2610
        %v2640 = vadd.f32 %v2526, %v2613
        %v2641 = vadd.f32 %v2527, %v2616
        %v2642 = vadd.f32 %v2528, %v2619
        %v2643 = vadd.f32 %v2529, %v2622
        %v2644 = vadd.f32 %v2530, %v2625
        %v2645 = vadd.f32 %v2531, %v2628
        %v2646 = vld [vmem:[%s2092] sm:$0xff]
        %v2647 = vld [vmem:[%s2092 + $0x8] sm:$0xff]
        %v2648 = vld [vmem:[%s2092 + $0x10] sm:$0xff]
        %v2649 = vld [vmem:[%s2092 + $0x18] sm:$0xff]
        %v2650 = vld [vmem:[%s2092 + $0x20] sm:$0xff]
        %v2651 = vld [vmem:[%s2092 + $0x28] sm:$0xff]
        %v2652 = vld [vmem:[%s2092 + $0x30] sm:$0xff]
        %v2653 = vld [vmem:[%s2092 + $0x38] sm:$0xff]
        %v2654 = vld [vmem:[%s2092 + $0x40] sm:$0xff]
        %v2655 = vld [vmem:[%s2092 + $0x48] sm:$0xff]
        %v2656 = vld [vmem:[%s2092 + $0x50] sm:$0xff]
        %v2657 = vld [vmem:[%s2092 + $0x58] sm:$0xff]
        %v2658 = vld [vmem:[%s2092 + $0x60] sm:$0xff]
        %v2659 = vld [vmem:[%s2092 + $0x68] sm:$0xff]
        %v2660 = vld [vmem:[%s2092 + $0x70] sm:$0xff]
        %v2661 = vld [vmem:[%s2092 + $0x78] sm:$0xff]
        %s2662 = scalar_lea.vmem [#allocation3], 512
        %v2663 = vld [vmem:[%s2662] sm:$0xff]
        %v2664 = vld [vmem:[%s2662 + $0x8] sm:$0xff]
        %v2665 = vld [vmem:[%s2662 + $0x10] sm:$0xff]
        %v2666 = vld [vmem:[%s2662 + $0x18] sm:$0xff]
        %v2667 = vld [vmem:[%s2662 + $0x20] sm:$0xff]
        %v2668 = vld [vmem:[%s2662 + $0x28] sm:$0xff]
        %v2669 = vld [vmem:[%s2662 + $0x30] sm:$0xff]
        %v2670 = vld [vmem:[%s2662 + $0x38] sm:$0xff]
        %v2671 = vld [vmem:[%s2662 + $0x40] sm:$0xff]
        %v2672 = vld [vmem:[%s2662 + $0x48] sm:$0xff]
        %v2673 = vld [vmem:[%s2662 + $0x50] sm:$0xff]
        %v2674 = vld [vmem:[%s2662 + $0x58] sm:$0xff]
        %v2675 = vld [vmem:[%s2662 + $0x60] sm:$0xff]
        %v2676 = vld [vmem:[%s2662 + $0x68] sm:$0xff]
        %v2677 = vld [vmem:[%s2662 + $0x70] sm:$0xff]
        %v2678 = vld [vmem:[%s2662 + $0x78] sm:$0xff]
        %2679 = vmatpush.msra.mxu0 %v2678
        %2680 = vmatpush.msra.mxu0 %v2677
        %2681 = vmatpush.msra.mxu0 %v2676
        %2682 = vmatpush.msra.mxu0 %v2675
        %2683 = vmatpush.msra.mxu0 %v2674
        %2684 = vmatpush.msra.mxu0 %v2673
        %2685 = vmatpush.msra.mxu0 %v2672
        %2686 = vmatpush.msra.mxu0 %v2671
        %2687 = vmatpush.msra.mxu0 %v2670
        %2688 = vmatpush.msra.mxu0 %v2669
        %2689 = vmatpush.msra.mxu0 %v2668
        %2690 = vmatpush.msra.mxu0 %v2667
        %2691 = vmatpush.msra.mxu0 %v2666
        %2692 = vmatpush.msra.mxu0 %v2665
        %2693 = vmatpush.msra.mxu0 %v2664
        %2694 = vmatpush.msra.mxu0 %v2663
        %2695 = vmatmul.f32.gmra.mxu0 %v2646
        %v2696 = vpop.f32.mrf.mxu0
        %v2697 = vadd.f32 0.0, %v2696
        %2698 = vmatmul.f32.gmra.mxu0 %v2647
        %v2699 = vpop.f32.mrf.mxu0
        %v2700 = vadd.f32 0.0, %v2699
        %2701 = vmatmul.f32.gmra.mxu0 %v2648
        %v2702 = vpop.f32.mrf.mxu0
        %v2703 = vadd.f32 0.0, %v2702
        %2704 = vmatmul.f32.gmra.mxu0 %v2649
        %v2705 = vpop.f32.mrf.mxu0
        %v2706 = vadd.f32 0.0, %v2705
        %2707 = vmatmul.f32.gmra.mxu0 %v2650
        %v2708 = vpop.f32.mrf.mxu0
        %v2709 = vadd.f32 0.0, %v2708
        %2710 = vmatmul.f32.gmra.mxu0 %v2651
        %v2711 = vpop.f32.mrf.mxu0
        %v2712 = vadd.f32 0.0, %v2711
        %2713 = vmatmul.f32.gmra.mxu0 %v2652
        %v2714 = vpop.f32.mrf.mxu0
        %v2715 = vadd.f32 0.0, %v2714
        %2716 = vmatmul.f32.gmra.mxu0 %v2653
        %v2717 = vpop.f32.mrf.mxu0
        %v2718 = vadd.f32 0.0, %v2717
        %2719 = vmatmul.f32.gmra.mxu0 %v2654
        %v2720 = vpop.f32.mrf.mxu0
        %v2721 = vadd.f32 0.0, %v2720
        %2722 = vmatmul.f32.gmra.mxu0 %v2655
        %v2723 = vpop.f32.mrf.mxu0
        %v2724 = vadd.f32 0.0, %v2723
        %2725 = vmatmul.f32.gmra.mxu0 %v2656
        %v2726 = vpop.f32.mrf.mxu0
        %v2727 = vadd.f32 0.0, %v2726
        %2728 = vmatmul.f32.gmra.mxu0 %v2657
        %v2729 = vpop.f32.mrf.mxu0
        %v2730 = vadd.f32 0.0, %v2729
        %2731 = vmatmul.f32.gmra.mxu0 %v2658
        %v2732 = vpop.f32.mrf.mxu0
        %v2733 = vadd.f32 0.0, %v2732
        %2734 = vmatmul.f32.gmra.mxu0 %v2659
        %v2735 = vpop.f32.mrf.mxu0
        %v2736 = vadd.f32 0.0, %v2735
        %2737 = vmatmul.f32.gmra.mxu0 %v2660
        %v2738 = vpop.f32.mrf.mxu0
        %v2739 = vadd.f32 0.0, %v2738
        %2740 = vmatmul.f32.gmra.mxu0 %v2661
        %v2741 = vpop.f32.mrf.mxu0
        %v2742 = vadd.f32 0.0, %v2741
        %2743 = vdwg.mxu0
        %v2744 = vadd.f32 %v2630, %v2697
        %v2745 = vadd.f32 %v2631, %v2700
        %v2746 = vadd.f32 %v2632, %v2703
        %v2747 = vadd.f32 %v2633, %v2706
        %v2748 = vadd.f32 %v2634, %v2709
        %v2749 = vadd.f32 %v2635, %v2712
        %v2750 = vadd.f32 %v2636, %v2715
        %v2751 = vadd.f32 %v2637, %v2718
        %v2752 = vadd.f32 %v2638, %v2721
        %v2753 = vadd.f32 %v2639, %v2724
        %v2754 = vadd.f32 %v2640, %v2727
        %v2755 = vadd.f32 %v2641, %v2730
        %v2756 = vadd.f32 %v2642, %v2733
        %v2757 = vadd.f32 %v2643, %v2736
        %v2758 = vadd.f32 %v2644, %v2739
        %v2759 = vadd.f32 %v2645, %v2742
        %v2760 = vld [vmem:[%s2174] sm:$0xff]
        %v2761 = vld [vmem:[%s2174 + $0x8] sm:$0xff]
        %v2762 = vld [vmem:[%s2174 + $0x10] sm:$0xff]
        %v2763 = vld [vmem:[%s2174 + $0x18] sm:$0xff]
        %v2764 = vld [vmem:[%s2174 + $0x20] sm:$0xff]
        %v2765 = vld [vmem:[%s2174 + $0x28] sm:$0xff]
        %v2766 = vld [vmem:[%s2174 + $0x30] sm:$0xff]
        %v2767 = vld [vmem:[%s2174 + $0x38] sm:$0xff]
        %v2768 = vld [vmem:[%s2174 + $0x40] sm:$0xff]
        %v2769 = vld [vmem:[%s2174 + $0x48] sm:$0xff]
        %v2770 = vld [vmem:[%s2174 + $0x50] sm:$0xff]
        %v2771 = vld [vmem:[%s2174 + $0x58] sm:$0xff]
        %v2772 = vld [vmem:[%s2174 + $0x60] sm:$0xff]
        %v2773 = vld [vmem:[%s2174 + $0x68] sm:$0xff]
        %v2774 = vld [vmem:[%s2174 + $0x70] sm:$0xff]
        %v2775 = vld [vmem:[%s2174 + $0x78] sm:$0xff]
        %s2776 = scalar_lea.vmem [#allocation3], 640
        %v2777 = vld [vmem:[%s2776] sm:$0xff]
        %v2778 = vld [vmem:[%s2776 + $0x8] sm:$0xff]
        %v2779 = vld [vmem:[%s2776 + $0x10] sm:$0xff]
        %v2780 = vld [vmem:[%s2776 + $0x18] sm:$0xff]
        %v2781 = vld [vmem:[%s2776 + $0x20] sm:$0xff]
        %v2782 = vld [vmem:[%s2776 + $0x28] sm:$0xff]
        %v2783 = vld [vmem:[%s2776 + $0x30] sm:$0xff]
        %v2784 = vld [vmem:[%s2776 + $0x38] sm:$0xff]
        %v2785 = vld [vmem:[%s2776 + $0x40] sm:$0xff]
        %v2786 = vld [vmem:[%s2776 + $0x48] sm:$0xff]
        %v2787 = vld [vmem:[%s2776 + $0x50] sm:$0xff]
        %v2788 = vld [vmem:[%s2776 + $0x58] sm:$0xff]
        %v2789 = vld [vmem:[%s2776 + $0x60] sm:$0xff]
        %v2790 = vld [vmem:[%s2776 + $0x68] sm:$0xff]
        %v2791 = vld [vmem:[%s2776 + $0x70] sm:$0xff]
        %v2792 = vld [vmem:[%s2776 + $0x78] sm:$0xff]
        %2793 = vmatpush.msra.mxu0 %v2792
        %2794 = vmatpush.msra.mxu0 %v2791
        %2795 = vmatpush.msra.mxu0 %v2790
        %2796 = vmatpush.msra.mxu0 %v2789
        %2797 = vmatpush.msra.mxu0 %v2788
        %2798 = vmatpush.msra.mxu0 %v2787
        %2799 = vmatpush.msra.mxu0 %v2786
        %2800 = vmatpush.msra.mxu0 %v2785
        %2801 = vmatpush.msra.mxu0 %v2784
        %2802 = vmatpush.msra.mxu0 %v2783
        %2803 = vmatpush.msra.mxu0 %v2782
        %2804 = vmatpush.msra.mxu0 %v2781
        %2805 = vmatpush.msra.mxu0 %v2780
        %2806 = vmatpush.msra.mxu0 %v2779
        %2807 = vmatpush.msra.mxu0 %v2778
        %2808 = vmatpush.msra.mxu0 %v2777
        %2809 = vmatmul.f32.gmra.mxu0 %v2760
        %v2810 = vpop.f32.mrf.mxu0
        %v2811 = vadd.f32 0.0, %v2810
        %2812 = vmatmul.f32.gmra.mxu0 %v2761
        %v2813 = vpop.f32.mrf.mxu0
        %v2814 = vadd.f32 0.0, %v2813
        %2815 = vmatmul.f32.gmra.mxu0 %v2762
        %v2816 = vpop.f32.mrf.mxu0
        %v2817 = vadd.f32 0.0, %v2816
        %2818 = vmatmul.f32.gmra.mxu0 %v2763
        %v2819 = vpop.f32.mrf.mxu0
        %v2820 = vadd.f32 0.0, %v2819
        %2821 = vmatmul.f32.gmra.mxu0 %v2764
        %v2822 = vpop.f32.mrf.mxu0
        %v2823 = vadd.f32 0.0, %v2822
        %2824 = vmatmul.f32.gmra.mxu0 %v2765
        %v2825 = vpop.f32.mrf.mxu0
        %v2826 = vadd.f32 0.0, %v2825
        %2827 = vmatmul.f32.gmra.mxu0 %v2766
        %v2828 = vpop.f32.mrf.mxu0
        %v2829 = vadd.f32 0.0, %v2828
        %2830 = vmatmul.f32.gmra.mxu0 %v2767
        %v2831 = vpop.f32.mrf.mxu0
        %v2832 = vadd.f32 0.0, %v2831
        %2833 = vmatmul.f32.gmra.mxu0 %v2768
        %v2834 = vpop.f32.mrf.mxu0
        %v2835 = vadd.f32 0.0, %v2834
        %2836 = vmatmul.f32.gmra.mxu0 %v2769
        %v2837 = vpop.f32.mrf.mxu0
        %v2838 = vadd.f32 0.0, %v2837
        %2839 = vmatmul.f32.gmra.mxu0 %v2770
        %v2840 = vpop.f32.mrf.mxu0
        %v2841 = vadd.f32 0.0, %v2840
        %2842 = vmatmul.f32.gmra.mxu0 %v2771
        %v2843 = vpop.f32.mrf.mxu0
        %v2844 = vadd.f32 0.0, %v2843
        %2845 = vmatmul.f32.gmra.mxu0 %v2772
        %v2846 = vpop.f32.mrf.mxu0
        %v2847 = vadd.f32 0.0, %v2846
        %2848 = vmatmul.f32.gmra.mxu0 %v2773
        %v2849 = vpop.f32.mrf.mxu0
        %v2850 = vadd.f32 0.0, %v2849
        %2851 = vmatmul.f32.gmra.mxu0 %v2774
        %v2852 = vpop.f32.mrf.mxu0
        %v2853 = vadd.f32 0.0, %v2852
        %2854 = vmatmul.f32.gmra.mxu0 %v2775
        %v2855 = vpop.f32.mrf.mxu0
        %v2856 = vadd.f32 0.0, %v2855
        %2857 = vdwg.mxu0
        %v2858 = vadd.f32 %v2744, %v2811
        %v2859 = vadd.f32 %v2745, %v2814
        %v2860 = vadd.f32 %v2746, %v2817
        %v2861 = vadd.f32 %v2747, %v2820
        %v2862 = vadd.f32 %v2748, %v2823
        %v2863 = vadd.f32 %v2749, %v2826
        %v2864 = vadd.f32 %v2750, %v2829
        %v2865 = vadd.f32 %v2751, %v2832
        %v2866 = vadd.f32 %v2752, %v2835
        %v2867 = vadd.f32 %v2753, %v2838
        %v2868 = vadd.f32 %v2754, %v2841
        %v2869 = vadd.f32 %v2755, %v2844
        %v2870 = vadd.f32 %v2756, %v2847
        %v2871 = vadd.f32 %v2757, %v2850
        %v2872 = vadd.f32 %v2758, %v2853
        %v2873 = vadd.f32 %v2759, %v2856
        %s2874 = scalar_lea.vmem [#allocation2], 32
        %v2875 = vld [vmem:[%s2874] sm:$0xff]
        %v2876 = vld [vmem:[%s2874 + $0x8] sm:$0xff]
        %v2877 = vld [vmem:[%s2874 + $0x10] sm:$0xff]
        %v2878 = vld [vmem:[%s2874 + $0x18] sm:$0xff]
        %v2879 = vld [vmem:[%s2874 + $0x20] sm:$0xff]
        %v2880 = vld [vmem:[%s2874 + $0x28] sm:$0xff]
        %v2881 = vld [vmem:[%s2874 + $0x30] sm:$0xff]
        %v2882 = vld [vmem:[%s2874 + $0x38] sm:$0xff]
        %v2883 = vld [vmem:[%s2874 + $0x40] sm:$0xff]
        %v2884 = vld [vmem:[%s2874 + $0x48] sm:$0xff]
        %v2885 = vld [vmem:[%s2874 + $0x50] sm:$0xff]
        %v2886 = vld [vmem:[%s2874 + $0x58] sm:$0xff]
        %v2887 = vld [vmem:[%s2874 + $0x60] sm:$0xff]
        %v2888 = vld [vmem:[%s2874 + $0x68] sm:$0xff]
        %v2889 = vld [vmem:[%s2874 + $0x70] sm:$0xff]
        %v2890 = vld [vmem:[%s2874 + $0x78] sm:$0xff]
        %s2891 = scalar_lea.vmem [#allocation3], 768
        %v2892 = vld [vmem:[%s2891] sm:$0xff]
        %v2893 = vld [vmem:[%s2891 + $0x8] sm:$0xff]
        %v2894 = vld [vmem:[%s2891 + $0x10] sm:$0xff]
        %v2895 = vld [vmem:[%s2891 + $0x18] sm:$0xff]
        %v2896 = vld [vmem:[%s2891 + $0x20] sm:$0xff]
        %v2897 = vld [vmem:[%s2891 + $0x28] sm:$0xff]
        %v2898 = vld [vmem:[%s2891 + $0x30] sm:$0xff]
        %v2899 = vld [vmem:[%s2891 + $0x38] sm:$0xff]
        %v2900 = vld [vmem:[%s2891 + $0x40] sm:$0xff]
        %v2901 = vld [vmem:[%s2891 + $0x48] sm:$0xff]
        %v2902 = vld [vmem:[%s2891 + $0x50] sm:$0xff]
        %v2903 = vld [vmem:[%s2891 + $0x58] sm:$0xff]
        %v2904 = vld [vmem:[%s2891 + $0x60] sm:$0xff]
        %v2905 = vld [vmem:[%s2891 + $0x68] sm:$0xff]
        %v2906 = vld [vmem:[%s2891 + $0x70] sm:$0xff]
        %v2907 = vld [vmem:[%s2891 + $0x78] sm:$0xff]
        %2908 = vmatpush.msra.mxu0 %v2907
        %2909 = vmatpush.msra.mxu0 %v2906
        %2910 = vmatpush.msra.mxu0 %v2905
        %2911 = vmatpush.msra.mxu0 %v2904
        %2912 = vmatpush.msra.mxu0 %v2903
        %2913 = vmatpush.msra.mxu0 %v2902
        %2914 = vmatpush.msra.mxu0 %v2901
        %2915 = vmatpush.msra.mxu0 %v2900
        %2916 = vmatpush.msra.mxu0 %v2899
        %2917 = vmatpush.msra.mxu0 %v2898
        %2918 = vmatpush.msra.mxu0 %v2897
        %2919 = vmatpush.msra.mxu0 %v2896
        %2920 = vmatpush.msra.mxu0 %v2895
        %2921 = vmatpush.msra.mxu0 %v2894
        %2922 = vmatpush.msra.mxu0 %v2893
        %2923 = vmatpush.msra.mxu0 %v2892
        %2924 = vmatmul.f32.gmra.mxu0 %v2875
        %v2925 = vpop.f32.mrf.mxu0
        %v2926 = vadd.f32 0.0, %v2925
        %2927 = vmatmul.f32.gmra.mxu0 %v2876
        %v2928 = vpop.f32.mrf.mxu0
        %v2929 = vadd.f32 0.0, %v2928
        %2930 = vmatmul.f32.gmra.mxu0 %v2877
        %v2931 = vpop.f32.mrf.mxu0
        %v2932 = vadd.f32 0.0, %v2931
        %2933 = vmatmul.f32.gmra.mxu0 %v2878
        %v2934 = vpop.f32.mrf.mxu0
        %v2935 = vadd.f32 0.0, %v2934
        %2936 = vmatmul.f32.gmra.mxu0 %v2879
        %v2937 = vpop.f32.mrf.mxu0
        %v2938 = vadd.f32 0.0, %v2937
        %2939 = vmatmul.f32.gmra.mxu0 %v2880
        %v2940 = vpop.f32.mrf.mxu0
        %v2941 = vadd.f32 0.0, %v2940
        %2942 = vmatmul.f32.gmra.mxu0 %v2881
        %v2943 = vpop.f32.mrf.mxu0
        %v2944 = vadd.f32 0.0, %v2943
        %2945 = vmatmul.f32.gmra.mxu0 %v2882
        %v2946 = vpop.f32.mrf.mxu0
        %v2947 = vadd.f32 0.0, %v2946
        %2948 = vmatmul.f32.gmra.mxu0 %v2883
        %v2949 = vpop.f32.mrf.mxu0
        %v2950 = vadd.f32 0.0, %v2949
        %2951 = vmatmul.f32.gmra.mxu0 %v2884
        %v2952 = vpop.f32.mrf.mxu0
        %v2953 = vadd.f32 0.0, %v2952
        %2954 = vmatmul.f32.gmra.mxu0 %v2885
        %v2955 = vpop.f32.mrf.mxu0
        %v2956 = vadd.f32 0.0, %v2955
        %2957 = vmatmul.f32.gmra.mxu0 %v2886
        %v2958 = vpop.f32.mrf.mxu0
        %v2959 = vadd.f32 0.0, %v2958
        %2960 = vmatmul.f32.gmra.mxu0 %v2887
        %v2961 = vpop.f32.mrf.mxu0
        %v2962 = vadd.f32 0.0, %v2961
        %2963 = vmatmul.f32.gmra.mxu0 %v2888
        %v2964 = vpop.f32.mrf.mxu0
        %v2965 = vadd.f32 0.0, %v2964
        %2966 = vmatmul.f32.gmra.mxu0 %v2889
        %v2967 = vpop.f32.mrf.mxu0
        %v2968 = vadd.f32 0.0, %v2967
        %2969 = vmatmul.f32.gmra.mxu0 %v2890
        %v2970 = vpop.f32.mrf.mxu0
        %v2971 = vadd.f32 0.0, %v2970
        %2972 = vdwg.mxu0
        %v2973 = vadd.f32 %v2858, %v2926
        %v2974 = vadd.f32 %v2859, %v2929
        %v2975 = vadd.f32 %v2860, %v2932
        %v2976 = vadd.f32 %v2861, %v2935
        %v2977 = vadd.f32 %v2862, %v2938
        %v2978 = vadd.f32 %v2863, %v2941
        %v2979 = vadd.f32 %v2864, %v2944
        %v2980 = vadd.f32 %v2865, %v2947
        %v2981 = vadd.f32 %v2866, %v2950
        %v2982 = vadd.f32 %v2867, %v2953
        %v2983 = vadd.f32 %v2868, %v2956
        %v2984 = vadd.f32 %v2869, %v2959
        %v2985 = vadd.f32 %v2870, %v2962
        %v2986 = vadd.f32 %v2871, %v2965
        %v2987 = vadd.f32 %v2872, %v2968
        %v2988 = vadd.f32 %v2873, %v2971
        %s2989 = scalar_lea.vmem [#allocation2], 320
        %v2990 = vld [vmem:[%s2989] sm:$0xff]
        %v2991 = vld [vmem:[%s2989 + $0x8] sm:$0xff]
        %v2992 = vld [vmem:[%s2989 + $0x10] sm:$0xff]
        %v2993 = vld [vmem:[%s2989 + $0x18] sm:$0xff]
        %v2994 = vld [vmem:[%s2989 + $0x20] sm:$0xff]
        %v2995 = vld [vmem:[%s2989 + $0x28] sm:$0xff]
        %v2996 = vld [vmem:[%s2989 + $0x30] sm:$0xff]
        %v2997 = vld [vmem:[%s2989 + $0x38] sm:$0xff]
        %v2998 = vld [vmem:[%s2989 + $0x40] sm:$0xff]
        %v2999 = vld [vmem:[%s2989 + $0x48] sm:$0xff]
        %v3000 = vld [vmem:[%s2989 + $0x50] sm:$0xff]
        %v3001 = vld [vmem:[%s2989 + $0x58] sm:$0xff]
        %v3002 = vld [vmem:[%s2989 + $0x60] sm:$0xff]
        %v3003 = vld [vmem:[%s2989 + $0x68] sm:$0xff]
        %v3004 = vld [vmem:[%s2989 + $0x70] sm:$0xff]
        %v3005 = vld [vmem:[%s2989 + $0x78] sm:$0xff]
        %s3006 = scalar_lea.vmem [#allocation3], 896
        %v3007 = vld [vmem:[%s3006] sm:$0xff]
        %v3008 = vld [vmem:[%s3006 + $0x8] sm:$0xff]
        %v3009 = vld [vmem:[%s3006 + $0x10] sm:$0xff]
        %v3010 = vld [vmem:[%s3006 + $0x18] sm:$0xff]
        %v3011 = vld [vmem:[%s3006 + $0x20] sm:$0xff]
        %v3012 = vld [vmem:[%s3006 + $0x28] sm:$0xff]
        %v3013 = vld [vmem:[%s3006 + $0x30] sm:$0xff]
        %v3014 = vld [vmem:[%s3006 + $0x38] sm:$0xff]
        %v3015 = vld [vmem:[%s3006 + $0x40] sm:$0xff]
        %v3016 = vld [vmem:[%s3006 + $0x48] sm:$0xff]
        %v3017 = vld [vmem:[%s3006 + $0x50] sm:$0xff]
        %v3018 = vld [vmem:[%s3006 + $0x58] sm:$0xff]
        %v3019 = vld [vmem:[%s3006 + $0x60] sm:$0xff]
        %v3020 = vld [vmem:[%s3006 + $0x68] sm:$0xff]
        %v3021 = vld [vmem:[%s3006 + $0x70] sm:$0xff]
        %v3022 = vld [vmem:[%s3006 + $0x78] sm:$0xff]
        %3023 = vmatpush.msra.mxu0 %v3022
        %3024 = vmatpush.msra.mxu0 %v3021
        %3025 = vmatpush.msra.mxu0 %v3020
        %3026 = vmatpush.msra.mxu0 %v3019
        %3027 = vmatpush.msra.mxu0 %v3018
        %3028 = vmatpush.msra.mxu0 %v3017
        %3029 = vmatpush.msra.mxu0 %v3016
        %3030 = vmatpush.msra.mxu0 %v3015
        %3031 = vmatpush.msra.mxu0 %v3014
        %3032 = vmatpush.msra.mxu0 %v3013
        %3033 = vmatpush.msra.mxu0 %v3012
        %3034 = vmatpush.msra.mxu0 %v3011
        %3035 = vmatpush.msra.mxu0 %v3010
        %3036 = vmatpush.msra.mxu0 %v3009
        %3037 = vmatpush.msra.mxu0 %v3008
        %3038 = vmatpush.msra.mxu0 %v3007
        %3039 = vmatmul.f32.gmra.mxu0 %v2990
        %v3040 = vpop.f32.mrf.mxu0
        %v3041 = vadd.f32 0.0, %v3040
        %3042 = vmatmul.f32.gmra.mxu0 %v2991
        %v3043 = vpop.f32.mrf.mxu0
        %v3044 = vadd.f32 0.0, %v3043
        %3045 = vmatmul.f32.gmra.mxu0 %v2992
        %v3046 = vpop.f32.mrf.mxu0
        %v3047 = vadd.f32 0.0, %v3046
        %3048 = vmatmul.f32.gmra.mxu0 %v2993
        %v3049 = vpop.f32.mrf.mxu0
        %v3050 = vadd.f32 0.0, %v3049
        %3051 = vmatmul.f32.gmra.mxu0 %v2994
        %v3052 = vpop.f32.mrf.mxu0
        %v3053 = vadd.f32 0.0, %v3052
        %3054 = vmatmul.f32.gmra.mxu0 %v2995
        %v3055 = vpop.f32.mrf.mxu0
        %v3056 = vadd.f32 0.0, %v3055
        %3057 = vmatmul.f32.gmra.mxu0 %v2996
        %v3058 = vpop.f32.mrf.mxu0
        %v3059 = vadd.f32 0.0, %v3058
        %3060 = vmatmul.f32.gmra.mxu0 %v2997
        %v3061 = vpop.f32.mrf.mxu0
        %v3062 = vadd.f32 0.0, %v3061
        %3063 = vmatmul.f32.gmra.mxu0 %v2998
        %v3064 = vpop.f32.mrf.mxu0
        %v3065 = vadd.f32 0.0, %v3064
        %3066 = vmatmul.f32.gmra.mxu0 %v2999
        %v3067 = vpop.f32.mrf.mxu0
        %v3068 = vadd.f32 0.0, %v3067
        %3069 = vmatmul.f32.gmra.mxu0 %v3000
        %v3070 = vpop.f32.mrf.mxu0
        %v3071 = vadd.f32 0.0, %v3070
        %3072 = vmatmul.f32.gmra.mxu0 %v3001
        %v3073 = vpop.f32.mrf.mxu0
        %v3074 = vadd.f32 0.0, %v3073
        %3075 = vmatmul.f32.gmra.mxu0 %v3002
        %v3076 = vpop.f32.mrf.mxu0
        %v3077 = vadd.f32 0.0, %v3076
        %3078 = vmatmul.f32.gmra.mxu0 %v3003
        %v3079 = vpop.f32.mrf.mxu0
        %v3080 = vadd.f32 0.0, %v3079
        %3081 = vmatmul.f32.gmra.mxu0 %v3004
        %v3082 = vpop.f32.mrf.mxu0
        %v3083 = vadd.f32 0.0, %v3082
        %3084 = vmatmul.f32.gmra.mxu0 %v3005
        %v3085 = vpop.f32.mrf.mxu0
        %v3086 = vadd.f32 0.0, %v3085
        %3087 = vdwg.mxu0
        %v3088 = vadd.f32 %v2973, %v3041
        %v3089 = vadd.f32 %v2974, %v3044
        %v3090 = vadd.f32 %v2975, %v3047
        %v3091 = vadd.f32 %v2976, %v3050
        %v3092 = vadd.f32 %v2977, %v3053
        %v3093 = vadd.f32 %v2978, %v3056
        %v3094 = vadd.f32 %v2979, %v3059
        %v3095 = vadd.f32 %v2980, %v3062
        %v3096 = vadd.f32 %v2981, %v3065
        %v3097 = vadd.f32 %v2982, %v3068
        %v3098 = vadd.f32 %v2983, %v3071
        %v3099 = vadd.f32 %v2984, %v3074
        %v3100 = vadd.f32 %v2985, %v3077
        %v3101 = vadd.f32 %v2986, %v3080
        %v3102 = vadd.f32 %v2987, %v3083
        %v3103 = vadd.f32 %v2988, %v3086
        %s3104 = scalar_lea.vmem [#allocation2], 608
        %v3105 = vld [vmem:[%s3104] sm:$0xff]
        %v3106 = vld [vmem:[%s3104 + $0x8] sm:$0xff]
        %v3107 = vld [vmem:[%s3104 + $0x10] sm:$0xff]
        %v3108 = vld [vmem:[%s3104 + $0x18] sm:$0xff]
        %v3109 = vld [vmem:[%s3104 + $0x20] sm:$0xff]
        %v3110 = vld [vmem:[%s3104 + $0x28] sm:$0xff]
        %v3111 = vld [vmem:[%s3104 + $0x30] sm:$0xff]
        %v3112 = vld [vmem:[%s3104 + $0x38] sm:$0xff]
        %v3113 = vld [vmem:[%s3104 + $0x40] sm:$0xff]
        %v3114 = vld [vmem:[%s3104 + $0x48] sm:$0xff]
        %v3115 = vld [vmem:[%s3104 + $0x50] sm:$0xff]
        %v3116 = vld [vmem:[%s3104 + $0x58] sm:$0xff]
        %v3117 = vld [vmem:[%s3104 + $0x60] sm:$0xff]
        %v3118 = vld [vmem:[%s3104 + $0x68] sm:$0xff]
        %v3119 = vld [vmem:[%s3104 + $0x70] sm:$0xff]
        %v3120 = vld [vmem:[%s3104 + $0x78] sm:$0xff]
        %s3121 = scalar_lea.vmem [#allocation3], 1024
        %v3122 = vld [vmem:[%s3121] sm:$0xff]
        %v3123 = vld [vmem:[%s3121 + $0x8] sm:$0xff]
        %v3124 = vld [vmem:[%s3121 + $0x10] sm:$0xff]
        %v3125 = vld [vmem:[%s3121 + $0x18] sm:$0xff]
        %v3126 = vld [vmem:[%s3121 + $0x20] sm:$0xff]
        %v3127 = vld [vmem:[%s3121 + $0x28] sm:$0xff]
        %v3128 = vld [vmem:[%s3121 + $0x30] sm:$0xff]
        %v3129 = vld [vmem:[%s3121 + $0x38] sm:$0xff]
        %v3130 = vld [vmem:[%s3121 + $0x40] sm:$0xff]
        %v3131 = vld [vmem:[%s3121 + $0x48] sm:$0xff]
        %v3132 = vld [vmem:[%s3121 + $0x50] sm:$0xff]
        %v3133 = vld [vmem:[%s3121 + $0x58] sm:$0xff]
        %v3134 = vld [vmem:[%s3121 + $0x60] sm:$0xff]
        %v3135 = vld [vmem:[%s3121 + $0x68] sm:$0xff]
        %v3136 = vld [vmem:[%s3121 + $0x70] sm:$0xff]
        %v3137 = vld [vmem:[%s3121 + $0x78] sm:$0xff]
        %3138 = vmatpush.msra.mxu0 %v3137
        %3139 = vmatpush.msra.mxu0 %v3136
        %3140 = vmatpush.msra.mxu0 %v3135
        %3141 = vmatpush.msra.mxu0 %v3134
        %3142 = vmatpush.msra.mxu0 %v3133
        %3143 = vmatpush.msra.mxu0 %v3132
        %3144 = vmatpush.msra.mxu0 %v3131
        %3145 = vmatpush.msra.mxu0 %v3130
        %3146 = vmatpush.msra.mxu0 %v3129
        %3147 = vmatpush.msra.mxu0 %v3128
        %3148 = vmatpush.msra.mxu0 %v3127
        %3149 = vmatpush.msra.mxu0 %v3126
        %3150 = vmatpush.msra.mxu0 %v3125
        %3151 = vmatpush.msra.mxu0 %v3124
        %3152 = vmatpush.msra.mxu0 %v3123
        %3153 = vmatpush.msra.mxu0 %v3122
        %3154 = vmatmul.f32.gmra.mxu0 %v3105
        %v3155 = vpop.f32.mrf.mxu0
        %v3156 = vadd.f32 0.0, %v3155
        %3157 = vmatmul.f32.gmra.mxu0 %v3106
        %v3158 = vpop.f32.mrf.mxu0
        %v3159 = vadd.f32 0.0, %v3158
        %3160 = vmatmul.f32.gmra.mxu0 %v3107
        %v3161 = vpop.f32.mrf.mxu0
        %v3162 = vadd.f32 0.0, %v3161
        %3163 = vmatmul.f32.gmra.mxu0 %v3108
        %v3164 = vpop.f32.mrf.mxu0
        %v3165 = vadd.f32 0.0, %v3164
        %3166 = vmatmul.f32.gmra.mxu0 %v3109
        %v3167 = vpop.f32.mrf.mxu0
        %v3168 = vadd.f32 0.0, %v3167
        %3169 = vmatmul.f32.gmra.mxu0 %v3110
        %v3170 = vpop.f32.mrf.mxu0
        %v3171 = vadd.f32 0.0, %v3170
        %3172 = vmatmul.f32.gmra.mxu0 %v3111
        %v3173 = vpop.f32.mrf.mxu0
        %v3174 = vadd.f32 0.0, %v3173
        %3175 = vmatmul.f32.gmra.mxu0 %v3112
        %v3176 = vpop.f32.mrf.mxu0
        %v3177 = vadd.f32 0.0, %v3176
        %3178 = vmatmul.f32.gmra.mxu0 %v3113
        %v3179 = vpop.f32.mrf.mxu0
        %v3180 = vadd.f32 0.0, %v3179
        %3181 = vmatmul.f32.gmra.mxu0 %v3114
        %v3182 = vpop.f32.mrf.mxu0
        %v3183 = vadd.f32 0.0, %v3182
        %3184 = vmatmul.f32.gmra.mxu0 %v3115
        %v3185 = vpop.f32.mrf.mxu0
        %v3186 = vadd.f32 0.0, %v3185
        %3187 = vmatmul.f32.gmra.mxu0 %v3116
        %v3188 = vpop.f32.mrf.mxu0
        %v3189 = vadd.f32 0.0, %v3188
        %3190 = vmatmul.f32.gmra.mxu0 %v3117
        %v3191 = vpop.f32.mrf.mxu0
        %v3192 = vadd.f32 0.0, %v3191
        %3193 = vmatmul.f32.gmra.mxu0 %v3118
        %v3194 = vpop.f32.mrf.mxu0
        %v3195 = vadd.f32 0.0, %v3194
        %3196 = vmatmul.f32.gmra.mxu0 %v3119
        %v3197 = vpop.f32.mrf.mxu0
        %v3198 = vadd.f32 0.0, %v3197
        %3199 = vmatmul.f32.gmra.mxu0 %v3120
        %v3200 = vpop.f32.mrf.mxu0
        %v3201 = vadd.f32 0.0, %v3200
        %3202 = vdwg.mxu0
        %v3203 = vadd.f32 %v3088, %v3156
        %v3204 = vadd.f32 %v3089, %v3159
        %v3205 = vadd.f32 %v3090, %v3162
        %v3206 = vadd.f32 %v3091, %v3165
        %v3207 = vadd.f32 %v3092, %v3168
        %v3208 = vadd.f32 %v3093, %v3171
        %v3209 = vadd.f32 %v3094, %v3174
        %v3210 = vadd.f32 %v3095, %v3177
        %v3211 = vadd.f32 %v3096, %v3180
        %v3212 = vadd.f32 %v3097, %v3183
        %v3213 = vadd.f32 %v3098, %v3186
        %v3214 = vadd.f32 %v3099, %v3189
        %v3215 = vadd.f32 %v3100, %v3192
        %v3216 = vadd.f32 %v3101, %v3195
        %v3217 = vadd.f32 %v3102, %v3198
        %v3218 = vadd.f32 %v3103, %v3201
        %v3219 = vld [vmem:[%s4] sm:$0x1]
        %v3221 = vperm.slane %v3219, 0
        %v3223 = vadd.f32 %v3203, %v3221
        %v3224 = vadd.f32 %v3204, %v3221
        %v3225 = vadd.f32 %v3205, %v3221
        %v3226 = vadd.f32 %v3206, %v3221
        %v3227 = vadd.f32 %v3207, %v3221
        %v3228 = vadd.f32 %v3208, %v3221
        %v3229 = vadd.f32 %v3209, %v3221
        %v3230 = vadd.f32 %v3210, %v3221
        %v3231 = vadd.f32 %v3211, %v3221
        %v3232 = vadd.f32 %v3212, %v3221
        %v3233 = vadd.f32 %v3213, %v3221
        %v3234 = vadd.f32 %v3214, %v3221
        %v3235 = vadd.f32 %v3215, %v3221
        %v3236 = vadd.f32 %v3216, %v3221
        %v3237 = vadd.f32 %v3217, %v3221
        %v3238 = vadd.f32 %v3218, %v3221
        %v3239 = vmax.f32 %v3223, 0.0
        %v3240 = vmax.f32 %v3224, 0.0
        %v3241 = vmax.f32 %v3225, 0.0
        %v3242 = vmax.f32 %v3226, 0.0
        %v3243 = vmax.f32 %v3227, 0.0
        %v3244 = vmax.f32 %v3228, 0.0
        %v3245 = vmax.f32 %v3229, 0.0
        %v3246 = vmax.f32 %v3230, 0.0
        %v3247 = vmax.f32 %v3231, 0.0
        %v3248 = vmax.f32 %v3232, 0.0
        %v3249 = vmax.f32 %v3233, 0.0
        %v3250 = vmax.f32 %v3234, 0.0
        %v3251 = vmax.f32 %v3235, 0.0
        %v3252 = vmax.f32 %v3236, 0.0
        %v3253 = vmax.f32 %v3237, 0.0
        %v3254 = vmax.f32 %v3238, 0.0
        %3255 = vst.msk [vmem:[%s241] sm:$0xff] %vm1589, %v3239
        %3256 = vst.msk [vmem:[%s241 + $0x8] sm:$0xff] %vm1589, %v3240
        %3257 = vst.msk [vmem:[%s241 + $0x10] sm:$0xff] %vm1589, %v3241
        %3258 = vst.msk [vmem:[%s241 + $0x18] sm:$0xff] %vm1589, %v3242
        %3259 = vst.msk [vmem:[%s241 + $0x20] sm:$0xff] %vm1589, %v3243
        %3260 = vst.msk [vmem:[%s241 + $0x28] sm:$0xff] %vm1589, %v3244
        %3261 = vst.msk [vmem:[%s241 + $0x30] sm:$0xff] %vm1589, %v3245
        %3262 = vst.msk [vmem:[%s241 + $0x38] sm:$0xff] %vm1589, %v3246
        %3263 = vst.msk [vmem:[%s241 + $0x40] sm:$0xff] %vm1589, %v3247
        %3264 = vst.msk [vmem:[%s241 + $0x48] sm:$0xff] %vm1589, %v3248
        %3265 = vst.msk [vmem:[%s241 + $0x50] sm:$0xff] %vm1589, %v3249
        %3266 = vst.msk [vmem:[%s241 + $0x58] sm:$0xff] %vm1589, %v3250
        %3267 = vst.msk [vmem:[%s241 + $0x60] sm:$0xff] %vm1589, %v3251
        %3268 = vst.msk [vmem:[%s241 + $0x68] sm:$0xff] %vm1589, %v3252
        %3269 = vst.msk [vmem:[%s241 + $0x70] sm:$0xff] %vm1589, %v3253
        %3270 = vst.msk [vmem:[%s241 + $0x78] sm:$0xff] %vm1589, %v3254
        %s3271 = scalar_lea.vmem [#allocation2], 128
        %v3272 = vld [vmem:[%s3271] sm:$0xff]
        %v3273 = vld [vmem:[%s3271 + $0x8] sm:$0xff]
        %v3274 = vld [vmem:[%s3271 + $0x10] sm:$0xff]
        %v3275 = vld [vmem:[%s3271 + $0x18] sm:$0xff]
        %v3276 = vld [vmem:[%s3271 + $0x20] sm:$0xff]
        %v3277 = vld [vmem:[%s3271 + $0x28] sm:$0xff]
        %v3278 = vld [vmem:[%s3271 + $0x30] sm:$0xff]
        %v3279 = vld [vmem:[%s3271 + $0x38] sm:$0xff]
        %v3280 = vld [vmem:[%s3271 + $0x40] sm:$0xff]
        %v3281 = vld [vmem:[%s3271 + $0x48] sm:$0xff]
        %v3282 = vld [vmem:[%s3271 + $0x50] sm:$0xff]
        %v3283 = vld [vmem:[%s3271 + $0x58] sm:$0xff]
        %v3284 = vld [vmem:[%s3271 + $0x60] sm:$0xff]
        %v3285 = vld [vmem:[%s3271 + $0x68] sm:$0xff]
        %v3286 = vld [vmem:[%s3271 + $0x70] sm:$0xff]
        %v3287 = vld [vmem:[%s3271 + $0x78] sm:$0xff]
        %v3288 = vld [vmem:[#allocation3] sm:$0xff]
        %v3289 = vld [vmem:[#allocation3 + $0x8] sm:$0xff]
        %v3290 = vld [vmem:[#allocation3 + $0x10] sm:$0xff]
        %v3291 = vld [vmem:[#allocation3 + $0x18] sm:$0xff]
        %v3292 = vld [vmem:[#allocation3 + $0x20] sm:$0xff]
        %v3293 = vld [vmem:[#allocation3 + $0x28] sm:$0xff]
        %v3294 = vld [vmem:[#allocation3 + $0x30] sm:$0xff]
        %v3295 = vld [vmem:[#allocation3 + $0x38] sm:$0xff]
        %v3296 = vld [vmem:[#allocation3 + $0x40] sm:$0xff]
        %v3297 = vld [vmem:[#allocation3 + $0x48] sm:$0xff]
        %v3298 = vld [vmem:[#allocation3 + $0x50] sm:$0xff]
        %v3299 = vld [vmem:[#allocation3 + $0x58] sm:$0xff]
        %v3300 = vld [vmem:[#allocation3 + $0x60] sm:$0xff]
        %v3301 = vld [vmem:[#allocation3 + $0x68] sm:$0xff]
        %v3302 = vld [vmem:[#allocation3 + $0x70] sm:$0xff]
        %v3303 = vld [vmem:[#allocation3 + $0x78] sm:$0xff]
        %s3304 = scalar_lea.vmem [#allocation2], 416
        %v3305 = vld [vmem:[%s3304] sm:$0xff]
        %v3306 = vld [vmem:[%s3304 + $0x8] sm:$0xff]
        %v3307 = vld [vmem:[%s3304 + $0x10] sm:$0xff]
        %v3308 = vld [vmem:[%s3304 + $0x18] sm:$0xff]
        %v3309 = vld [vmem:[%s3304 + $0x20] sm:$0xff]
        %v3310 = vld [vmem:[%s3304 + $0x28] sm:$0xff]
        %v3311 = vld [vmem:[%s3304 + $0x30] sm:$0xff]
        %v3312 = vld [vmem:[%s3304 + $0x38] sm:$0xff]
        %v3313 = vld [vmem:[%s3304 + $0x40] sm:$0xff]
        %v3314 = vld [vmem:[%s3304 + $0x48] sm:$0xff]
        %v3315 = vld [vmem:[%s3304 + $0x50] sm:$0xff]
        %v3316 = vld [vmem:[%s3304 + $0x58] sm:$0xff]
        %v3317 = vld [vmem:[%s3304 + $0x60] sm:$0xff]
        %v3318 = vld [vmem:[%s3304 + $0x68] sm:$0xff]
        %v3319 = vld [vmem:[%s3304 + $0x70] sm:$0xff]
        %v3320 = vld [vmem:[%s3304 + $0x78] sm:$0xff]
        %v3321 = vld [vmem:[%s2271] sm:$0xff]
        %v3322 = vld [vmem:[%s2271 + $0x8] sm:$0xff]
        %v3323 = vld [vmem:[%s2271 + $0x10] sm:$0xff]
        %v3324 = vld [vmem:[%s2271 + $0x18] sm:$0xff]
        %v3325 = vld [vmem:[%s2271 + $0x20] sm:$0xff]
        %v3326 = vld [vmem:[%s2271 + $0x28] sm:$0xff]
        %v3327 = vld [vmem:[%s2271 + $0x30] sm:$0xff]
        %v3328 = vld [vmem:[%s2271 + $0x38] sm:$0xff]
        %v3329 = vld [vmem:[%s2271 + $0x40] sm:$0xff]
        %v3330 = vld [vmem:[%s2271 + $0x48] sm:$0xff]
        %v3331 = vld [vmem:[%s2271 + $0x50] sm:$0xff]
        %v3332 = vld [vmem:[%s2271 + $0x58] sm:$0xff]
        %v3333 = vld [vmem:[%s2271 + $0x60] sm:$0xff]
        %v3334 = vld [vmem:[%s2271 + $0x68] sm:$0xff]
        %v3335 = vld [vmem:[%s2271 + $0x70] sm:$0xff]
        %v3336 = vld [vmem:[%s2271 + $0x78] sm:$0xff]
        %3337 = vmatpush.msra.mxu0 %v3336
        %3338 = vmatpush.msra.mxu0 %v3335
        %3339 = vmatpush.msra.mxu0 %v3334
        %3340 = vmatpush.msra.mxu0 %v3333
        %3341 = vmatpush.msra.mxu0 %v3332
        %3342 = vmatpush.msra.mxu0 %v3331
        %3343 = vmatpush.msra.mxu0 %v3330
        %3344 = vmatpush.msra.mxu0 %v3329
        %3345 = vmatpush.msra.mxu0 %v3328
        %3346 = vmatpush.msra.mxu0 %v3327
        %3347 = vmatpush.msra.mxu0 %v3326
        %3348 = vmatpush.msra.mxu0 %v3325
        %3349 = vmatpush.msra.mxu0 %v3324
        %3350 = vmatpush.msra.mxu0 %v3323
        %3351 = vmatpush.msra.mxu0 %v3322
        %3352 = vmatpush.msra.mxu0 %v3321
        %3353 = vmatmul.f32.gmra.mxu0 %v3305
        %v3354 = vpop.f32.mrf.mxu0
        %v3355 = vadd.f32 0.0, %v3354
        %3356 = vmatmul.f32.gmra.mxu0 %v3306
        %v3357 = vpop.f32.mrf.mxu0
        %v3358 = vadd.f32 0.0, %v3357
        %3359 = vmatmul.f32.gmra.mxu0 %v3307
        %v3360 = vpop.f32.mrf.mxu0
        %v3361 = vadd.f32 0.0, %v3360
        %3362 = vmatmul.f32.gmra.mxu0 %v3308
        %v3363 = vpop.f32.mrf.mxu0
        %v3364 = vadd.f32 0.0, %v3363
        %3365 = vmatmul.f32.gmra.mxu0 %v3309
        %v3366 = vpop.f32.mrf.mxu0
        %v3367 = vadd.f32 0.0, %v3366
        %3368 = vmatmul.f32.gmra.mxu0 %v3310
        %v3369 = vpop.f32.mrf.mxu0
        %v3370 = vadd.f32 0.0, %v3369
        %3371 = vmatmul.f32.gmra.mxu0 %v3311
        %v3372 = vpop.f32.mrf.mxu0
        %v3373 = vadd.f32 0.0, %v3372
        %3374 = vmatmul.f32.gmra.mxu0 %v3312
        %v3375 = vpop.f32.mrf.mxu0
        %v3376 = vadd.f32 0.0, %v3375
        %3377 = vmatmul.f32.gmra.mxu0 %v3313
        %v3378 = vpop.f32.mrf.mxu0
        %v3379 = vadd.f32 0.0, %v3378
        %3380 = vmatmul.f32.gmra.mxu0 %v3314
        %v3381 = vpop.f32.mrf.mxu0
        %v3382 = vadd.f32 0.0, %v3381
        %3383 = vmatmul.f32.gmra.mxu0 %v3315
        %v3384 = vpop.f32.mrf.mxu0
        %v3385 = vadd.f32 0.0, %v3384
        %3386 = vmatmul.f32.gmra.mxu0 %v3316
        %v3387 = vpop.f32.mrf.mxu0
        %v3388 = vadd.f32 0.0, %v3387
        %3389 = vmatmul.f32.gmra.mxu0 %v3317
        %v3390 = vpop.f32.mrf.mxu0
        %v3391 = vadd.f32 0.0, %v3390
        %3392 = vmatmul.f32.gmra.mxu0 %v3318
        %v3393 = vpop.f32.mrf.mxu0
        %v3394 = vadd.f32 0.0, %v3393
        %3395 = vmatmul.f32.gmra.mxu0 %v3319
        %v3396 = vpop.f32.mrf.mxu0
        %v3397 = vadd.f32 0.0, %v3396
        %3398 = vmatmul.f32.gmra.mxu0 %v3320
        %v3399 = vpop.f32.mrf.mxu0
        %v3400 = vadd.f32 0.0, %v3399
        %3401 = vdwg.mxu0
        %3402 = vmatpush.msra.mxu0 %v3303
        %3403 = vmatpush.msra.mxu0 %v3302
        %3404 = vmatpush.msra.mxu0 %v3301
        %3405 = vmatpush.msra.mxu0 %v3300
        %3406 = vmatpush.msra.mxu0 %v3299
        %3407 = vmatpush.msra.mxu0 %v3298
        %3408 = vmatpush.msra.mxu0 %v3297
        %3409 = vmatpush.msra.mxu0 %v3296
        %3410 = vmatpush.msra.mxu0 %v3295
        %3411 = vmatpush.msra.mxu0 %v3294
        %3412 = vmatpush.msra.mxu0 %v3293
        %3413 = vmatpush.msra.mxu0 %v3292
        %3414 = vmatpush.msra.mxu0 %v3291
        %3415 = vmatpush.msra.mxu0 %v3290
        %3416 = vmatpush.msra.mxu0 %v3289
        %3417 = vmatpush.msra.mxu0 %v3288
        %3418 = vmatmul.f32.gmra.mxu0 %v3272
        %v3419 = vpop.f32.mrf.mxu0
        %v3420 = vadd.f32 %v3355, %v3419
        %3421 = vmatmul.f32.gmra.mxu0 %v3273
        %v3422 = vpop.f32.mrf.mxu0
        %v3423 = vadd.f32 %v3358, %v3422
        %3424 = vmatmul.f32.gmra.mxu0 %v3274
        %v3425 = vpop.f32.mrf.mxu0
        %v3426 = vadd.f32 %v3361, %v3425
        %3427 = vmatmul.f32.gmra.mxu0 %v3275
        %v3428 = vpop.f32.mrf.mxu0
        %v3429 = vadd.f32 %v3364, %v3428
        %3430 = vmatmul.f32.gmra.mxu0 %v3276
        %v3431 = vpop.f32.mrf.mxu0
        %v3432 = vadd.f32 %v3367, %v3431
        %3433 = vmatmul.f32.gmra.mxu0 %v3277
        %v3434 = vpop.f32.mrf.mxu0
        %v3435 = vadd.f32 %v3370, %v3434
        %3436 = vmatmul.f32.gmra.mxu0 %v3278
        %v3437 = vpop.f32.mrf.mxu0
        %v3438 = vadd.f32 %v3373, %v3437
        %3439 = vmatmul.f32.gmra.mxu0 %v3279
        %v3440 = vpop.f32.mrf.mxu0
        %v3441 = vadd.f32 %v3376, %v3440
        %3442 = vmatmul.f32.gmra.mxu0 %v3280
        %v3443 = vpop.f32.mrf.mxu0
        %v3444 = vadd.f32 %v3379, %v3443
        %3445 = vmatmul.f32.gmra.mxu0 %v3281
        %v3446 = vpop.f32.mrf.mxu0
        %v3447 = vadd.f32 %v3382, %v3446
        %3448 = vmatmul.f32.gmra.mxu0 %v3282
        %v3449 = vpop.f32.mrf.mxu0
        %v3450 = vadd.f32 %v3385, %v3449
        %3451 = vmatmul.f32.gmra.mxu0 %v3283
        %v3452 = vpop.f32.mrf.mxu0
        %v3453 = vadd.f32 %v3388, %v3452
        %3454 = vmatmul.f32.gmra.mxu0 %v3284
        %v3455 = vpop.f32.mrf.mxu0
        %v3456 = vadd.f32 %v3391, %v3455
        %3457 = vmatmul.f32.gmra.mxu0 %v3285
        %v3458 = vpop.f32.mrf.mxu0
        %v3459 = vadd.f32 %v3394, %v3458
        %3460 = vmatmul.f32.gmra.mxu0 %v3286
        %v3461 = vpop.f32.mrf.mxu0
        %v3462 = vadd.f32 %v3397, %v3461
        %3463 = vmatmul.f32.gmra.mxu0 %v3287
        %v3464 = vpop.f32.mrf.mxu0
        %v3465 = vadd.f32 %v3400, %v3464
        %3466 = vdwg.mxu0
        %s3467 = scalar_lea.vmem [#allocation2], 704
        %v3468 = vld [vmem:[%s3467] sm:$0xff]
        %v3469 = vld [vmem:[%s3467 + $0x8] sm:$0xff]
        %v3470 = vld [vmem:[%s3467 + $0x10] sm:$0xff]
        %v3471 = vld [vmem:[%s3467 + $0x18] sm:$0xff]
        %v3472 = vld [vmem:[%s3467 + $0x20] sm:$0xff]
        %v3473 = vld [vmem:[%s3467 + $0x28] sm:$0xff]
        %v3474 = vld [vmem:[%s3467 + $0x30] sm:$0xff]
        %v3475 = vld [vmem:[%s3467 + $0x38] sm:$0xff]
        %v3476 = vld [vmem:[%s3467 + $0x40] sm:$0xff]
        %v3477 = vld [vmem:[%s3467 + $0x48] sm:$0xff]
        %v3478 = vld [vmem:[%s3467 + $0x50] sm:$0xff]
        %v3479 = vld [vmem:[%s3467 + $0x58] sm:$0xff]
        %v3480 = vld [vmem:[%s3467 + $0x60] sm:$0xff]
        %v3481 = vld [vmem:[%s3467 + $0x68] sm:$0xff]
        %v3482 = vld [vmem:[%s3467 + $0x70] sm:$0xff]
        %v3483 = vld [vmem:[%s3467 + $0x78] sm:$0xff]
        %v3484 = vld [vmem:[%s2434] sm:$0xff]
        %v3485 = vld [vmem:[%s2434 + $0x8] sm:$0xff]
        %v3486 = vld [vmem:[%s2434 + $0x10] sm:$0xff]
        %v3487 = vld [vmem:[%s2434 + $0x18] sm:$0xff]
        %v3488 = vld [vmem:[%s2434 + $0x20] sm:$0xff]
        %v3489 = vld [vmem:[%s2434 + $0x28] sm:$0xff]
        %v3490 = vld [vmem:[%s2434 + $0x30] sm:$0xff]
        %v3491 = vld [vmem:[%s2434 + $0x38] sm:$0xff]
        %v3492 = vld [vmem:[%s2434 + $0x40] sm:$0xff]
        %v3493 = vld [vmem:[%s2434 + $0x48] sm:$0xff]
        %v3494 = vld [vmem:[%s2434 + $0x50] sm:$0xff]
        %v3495 = vld [vmem:[%s2434 + $0x58] sm:$0xff]
        %v3496 = vld [vmem:[%s2434 + $0x60] sm:$0xff]
        %v3497 = vld [vmem:[%s2434 + $0x68] sm:$0xff]
        %v3498 = vld [vmem:[%s2434 + $0x70] sm:$0xff]
        %v3499 = vld [vmem:[%s2434 + $0x78] sm:$0xff]
        %3500 = vmatpush.msra.mxu0 %v3499
        %3501 = vmatpush.msra.mxu0 %v3498
        %3502 = vmatpush.msra.mxu0 %v3497
        %3503 = vmatpush.msra.mxu0 %v3496
        %3504 = vmatpush.msra.mxu0 %v3495
        %3505 = vmatpush.msra.mxu0 %v3494
        %3506 = vmatpush.msra.mxu0 %v3493
        %3507 = vmatpush.msra.mxu0 %v3492
        %3508 = vmatpush.msra.mxu0 %v3491
        %3509 = vmatpush.msra.mxu0 %v3490
        %3510 = vmatpush.msra.mxu0 %v3489
        %3511 = vmatpush.msra.mxu0 %v3488
        %3512 = vmatpush.msra.mxu0 %v3487
        %3513 = vmatpush.msra.mxu0 %v3486
        %3514 = vmatpush.msra.mxu0 %v3485
        %3515 = vmatpush.msra.mxu0 %v3484
        %3516 = vmatmul.f32.gmra.mxu0 %v3468
        %v3517 = vpop.f32.mrf.mxu0
        %v3518 = vadd.f32 0.0, %v3517
        %3519 = vmatmul.f32.gmra.mxu0 %v3469
        %v3520 = vpop.f32.mrf.mxu0
        %v3521 = vadd.f32 0.0, %v3520
        %3522 = vmatmul.f32.gmra.mxu0 %v3470
        %v3523 = vpop.f32.mrf.mxu0
        %v3524 = vadd.f32 0.0, %v3523
        %3525 = vmatmul.f32.gmra.mxu0 %v3471
        %v3526 = vpop.f32.mrf.mxu0
        %v3527 = vadd.f32 0.0, %v3526
        %3528 = vmatmul.f32.gmra.mxu0 %v3472
        %v3529 = vpop.f32.mrf.mxu0
        %v3530 = vadd.f32 0.0, %v3529
        %3531 = vmatmul.f32.gmra.mxu0 %v3473
        %v3532 = vpop.f32.mrf.mxu0
        %v3533 = vadd.f32 0.0, %v3532
        %3534 = vmatmul.f32.gmra.mxu0 %v3474
        %v3535 = vpop.f32.mrf.mxu0
        %v3536 = vadd.f32 0.0, %v3535
        %3537 = vmatmul.f32.gmra.mxu0 %v3475
        %v3538 = vpop.f32.mrf.mxu0
        %v3539 = vadd.f32 0.0, %v3538
        %3540 = vmatmul.f32.gmra.mxu0 %v3476
        %v3541 = vpop.f32.mrf.mxu0
        %v3542 = vadd.f32 0.0, %v3541
        %3543 = vmatmul.f32.gmra.mxu0 %v3477
        %v3544 = vpop.f32.mrf.mxu0
        %v3545 = vadd.f32 0.0, %v3544
        %3546 = vmatmul.f32.gmra.mxu0 %v3478
        %v3547 = vpop.f32.mrf.mxu0
        %v3548 = vadd.f32 0.0, %v3547
        %3549 = vmatmul.f32.gmra.mxu0 %v3479
        %v3550 = vpop.f32.mrf.mxu0
        %v3551 = vadd.f32 0.0, %v3550
        %3552 = vmatmul.f32.gmra.mxu0 %v3480
        %v3553 = vpop.f32.mrf.mxu0
        %v3554 = vadd.f32 0.0, %v3553
        %3555 = vmatmul.f32.gmra.mxu0 %v3481
        %v3556 = vpop.f32.mrf.mxu0
        %v3557 = vadd.f32 0.0, %v3556
        %3558 = vmatmul.f32.gmra.mxu0 %v3482
        %v3559 = vpop.f32.mrf.mxu0
        %v3560 = vadd.f32 0.0, %v3559
        %3561 = vmatmul.f32.gmra.mxu0 %v3483
        %v3562 = vpop.f32.mrf.mxu0
        %v3563 = vadd.f32 0.0, %v3562
        %3564 = vdwg.mxu0
        %v3565 = vadd.f32 %v3420, %v3518
        %v3566 = vadd.f32 %v3423, %v3521
        %v3567 = vadd.f32 %v3426, %v3524
        %v3568 = vadd.f32 %v3429, %v3527
        %v3569 = vadd.f32 %v3432, %v3530
        %v3570 = vadd.f32 %v3435, %v3533
        %v3571 = vadd.f32 %v3438, %v3536
        %v3572 = vadd.f32 %v3441, %v3539
        %v3573 = vadd.f32 %v3444, %v3542
        %v3574 = vadd.f32 %v3447, %v3545
        %v3575 = vadd.f32 %v3450, %v3548
        %v3576 = vadd.f32 %v3453, %v3551
        %v3577 = vadd.f32 %v3456, %v3554
        %v3578 = vadd.f32 %v3459, %v3557
        %v3579 = vadd.f32 %v3462, %v3560
        %v3580 = vadd.f32 %v3465, %v3563
        %s3581 = scalar_lea.vmem [#allocation2], 144
        %v3582 = vld [vmem:[%s3581] sm:$0xff]
        %v3583 = vld [vmem:[%s3581 + $0x8] sm:$0xff]
        %v3584 = vld [vmem:[%s3581 + $0x10] sm:$0xff]
        %v3585 = vld [vmem:[%s3581 + $0x18] sm:$0xff]
        %v3586 = vld [vmem:[%s3581 + $0x20] sm:$0xff]
        %v3587 = vld [vmem:[%s3581 + $0x28] sm:$0xff]
        %v3588 = vld [vmem:[%s3581 + $0x30] sm:$0xff]
        %v3589 = vld [vmem:[%s3581 + $0x38] sm:$0xff]
        %v3590 = vld [vmem:[%s3581 + $0x40] sm:$0xff]
        %v3591 = vld [vmem:[%s3581 + $0x48] sm:$0xff]
        %v3592 = vld [vmem:[%s3581 + $0x50] sm:$0xff]
        %v3593 = vld [vmem:[%s3581 + $0x58] sm:$0xff]
        %v3594 = vld [vmem:[%s3581 + $0x60] sm:$0xff]
        %v3595 = vld [vmem:[%s3581 + $0x68] sm:$0xff]
        %v3596 = vld [vmem:[%s3581 + $0x70] sm:$0xff]
        %v3597 = vld [vmem:[%s3581 + $0x78] sm:$0xff]
        %v3598 = vld [vmem:[%s2548] sm:$0xff]
        %v3599 = vld [vmem:[%s2548 + $0x8] sm:$0xff]
        %v3600 = vld [vmem:[%s2548 + $0x10] sm:$0xff]
        %v3601 = vld [vmem:[%s2548 + $0x18] sm:$0xff]
        %v3602 = vld [vmem:[%s2548 + $0x20] sm:$0xff]
        %v3603 = vld [vmem:[%s2548 + $0x28] sm:$0xff]
        %v3604 = vld [vmem:[%s2548 + $0x30] sm:$0xff]
        %v3605 = vld [vmem:[%s2548 + $0x38] sm:$0xff]
        %v3606 = vld [vmem:[%s2548 + $0x40] sm:$0xff]
        %v3607 = vld [vmem:[%s2548 + $0x48] sm:$0xff]
        %v3608 = vld [vmem:[%s2548 + $0x50] sm:$0xff]
        %v3609 = vld [vmem:[%s2548 + $0x58] sm:$0xff]
        %v3610 = vld [vmem:[%s2548 + $0x60] sm:$0xff]
        %v3611 = vld [vmem:[%s2548 + $0x68] sm:$0xff]
        %v3612 = vld [vmem:[%s2548 + $0x70] sm:$0xff]
        %v3613 = vld [vmem:[%s2548 + $0x78] sm:$0xff]
        %3614 = vmatpush.msra.mxu0 %v3613
        %3615 = vmatpush.msra.mxu0 %v3612
        %3616 = vmatpush.msra.mxu0 %v3611
        %3617 = vmatpush.msra.mxu0 %v3610
        %3618 = vmatpush.msra.mxu0 %v3609
        %3619 = vmatpush.msra.mxu0 %v3608
        %3620 = vmatpush.msra.mxu0 %v3607
        %3621 = vmatpush.msra.mxu0 %v3606
        %3622 = vmatpush.msra.mxu0 %v3605
        %3623 = vmatpush.msra.mxu0 %v3604
        %3624 = vmatpush.msra.mxu0 %v3603
        %3625 = vmatpush.msra.mxu0 %v3602
        %3626 = vmatpush.msra.mxu0 %v3601
        %3627 = vmatpush.msra.mxu0 %v3600
        %3628 = vmatpush.msra.mxu0 %v3599
        %3629 = vmatpush.msra.mxu0 %v3598
        %3630 = vmatmul.f32.gmra.mxu0 %v3582
        %v3631 = vpop.f32.mrf.mxu0
        %v3632 = vadd.f32 0.0, %v3631
        %3633 = vmatmul.f32.gmra.mxu0 %v3583
        %v3634 = vpop.f32.mrf.mxu0
        %v3635 = vadd.f32 0.0, %v3634
        %3636 = vmatmul.f32.gmra.mxu0 %v3584
        %v3637 = vpop.f32.mrf.mxu0
        %v3638 = vadd.f32 0.0, %v3637
        %3639 = vmatmul.f32.gmra.mxu0 %v3585
        %v3640 = vpop.f32.mrf.mxu0
        %v3641 = vadd.f32 0.0, %v3640
        %3642 = vmatmul.f32.gmra.mxu0 %v3586
        %v3643 = vpop.f32.mrf.mxu0
        %v3644 = vadd.f32 0.0, %v3643
        %3645 = vmatmul.f32.gmra.mxu0 %v3587
        %v3646 = vpop.f32.mrf.mxu0
        %v3647 = vadd.f32 0.0, %v3646
        %3648 = vmatmul.f32.gmra.mxu0 %v3588
        %v3649 = vpop.f32.mrf.mxu0
        %v3650 = vadd.f32 0.0, %v3649
        %3651 = vmatmul.f32.gmra.mxu0 %v3589
        %v3652 = vpop.f32.mrf.mxu0
        %v3653 = vadd.f32 0.0, %v3652
        %3654 = vmatmul.f32.gmra.mxu0 %v3590
        %v3655 = vpop.f32.mrf.mxu0
        %v3656 = vadd.f32 0.0, %v3655
        %3657 = vmatmul.f32.gmra.mxu0 %v3591
        %v3658 = vpop.f32.mrf.mxu0
        %v3659 = vadd.f32 0.0, %v3658
        %3660 = vmatmul.f32.gmra.mxu0 %v3592
        %v3661 = vpop.f32.mrf.mxu0
        %v3662 = vadd.f32 0.0, %v3661
        %3663 = vmatmul.f32.gmra.mxu0 %v3593
        %v3664 = vpop.f32.mrf.mxu0
        %v3665 = vadd.f32 0.0, %v3664
        %3666 = vmatmul.f32.gmra.mxu0 %v3594
        %v3667 = vpop.f32.mrf.mxu0
        %v3668 = vadd.f32 0.0, %v3667
        %3669 = vmatmul.f32.gmra.mxu0 %v3595
        %v3670 = vpop.f32.mrf.mxu0
        %v3671 = vadd.f32 0.0, %v3670
        %3672 = vmatmul.f32.gmra.mxu0 %v3596
        %v3673 = vpop.f32.mrf.mxu0
        %v3674 = vadd.f32 0.0, %v3673
        %3675 = vmatmul.f32.gmra.mxu0 %v3597
        %v3676 = vpop.f32.mrf.mxu0
        %v3677 = vadd.f32 0.0, %v3676
        %3678 = vdwg.mxu0
        %v3679 = vadd.f32 %v3565, %v3632
        %v3680 = vadd.f32 %v3566, %v3635
        %v3681 = vadd.f32 %v3567, %v3638
        %v3682 = vadd.f32 %v3568, %v3641
        %v3683 = vadd.f32 %v3569, %v3644
        %v3684 = vadd.f32 %v3570, %v3647
        %v3685 = vadd.f32 %v3571, %v3650
        %v3686 = vadd.f32 %v3572, %v3653
        %v3687 = vadd.f32 %v3573, %v3656
        %v3688 = vadd.f32 %v3574, %v3659
        %v3689 = vadd.f32 %v3575, %v3662
        %v3690 = vadd.f32 %v3576, %v3665
        %v3691 = vadd.f32 %v3577, %v3668
        %v3692 = vadd.f32 %v3578, %v3671
        %v3693 = vadd.f32 %v3579, %v3674
        %v3694 = vadd.f32 %v3580, %v3677
        %s3695 = scalar_lea.vmem [#allocation2], 432
        %v3696 = vld [vmem:[%s3695] sm:$0xff]
        %v3697 = vld [vmem:[%s3695 + $0x8] sm:$0xff]
        %v3698 = vld [vmem:[%s3695 + $0x10] sm:$0xff]
        %v3699 = vld [vmem:[%s3695 + $0x18] sm:$0xff]
        %v3700 = vld [vmem:[%s3695 + $0x20] sm:$0xff]
        %v3701 = vld [vmem:[%s3695 + $0x28] sm:$0xff]
        %v3702 = vld [vmem:[%s3695 + $0x30] sm:$0xff]
        %v3703 = vld [vmem:[%s3695 + $0x38] sm:$0xff]
        %v3704 = vld [vmem:[%s3695 + $0x40] sm:$0xff]
        %v3705 = vld [vmem:[%s3695 + $0x48] sm:$0xff]
        %v3706 = vld [vmem:[%s3695 + $0x50] sm:$0xff]
        %v3707 = vld [vmem:[%s3695 + $0x58] sm:$0xff]
        %v3708 = vld [vmem:[%s3695 + $0x60] sm:$0xff]
        %v3709 = vld [vmem:[%s3695 + $0x68] sm:$0xff]
        %v3710 = vld [vmem:[%s3695 + $0x70] sm:$0xff]
        %v3711 = vld [vmem:[%s3695 + $0x78] sm:$0xff]
        %v3712 = vld [vmem:[%s2662] sm:$0xff]
        %v3713 = vld [vmem:[%s2662 + $0x8] sm:$0xff]
        %v3714 = vld [vmem:[%s2662 + $0x10] sm:$0xff]
        %v3715 = vld [vmem:[%s2662 + $0x18] sm:$0xff]
        %v3716 = vld [vmem:[%s2662 + $0x20] sm:$0xff]
        %v3717 = vld [vmem:[%s2662 + $0x28] sm:$0xff]
        %v3718 = vld [vmem:[%s2662 + $0x30] sm:$0xff]
        %v3719 = vld [vmem:[%s2662 + $0x38] sm:$0xff]
        %v3720 = vld [vmem:[%s2662 + $0x40] sm:$0xff]
        %v3721 = vld [vmem:[%s2662 + $0x48] sm:$0xff]
        %v3722 = vld [vmem:[%s2662 + $0x50] sm:$0xff]
        %v3723 = vld [vmem:[%s2662 + $0x58] sm:$0xff]
        %v3724 = vld [vmem:[%s2662 + $0x60] sm:$0xff]
        %v3725 = vld [vmem:[%s2662 + $0x68] sm:$0xff]
        %v3726 = vld [vmem:[%s2662 + $0x70] sm:$0xff]
        %v3727 = vld [vmem:[%s2662 + $0x78] sm:$0xff]
        %3728 = vmatpush.msra.mxu0 %v3727
        %3729 = vmatpush.msra.mxu0 %v3726
        %3730 = vmatpush.msra.mxu0 %v3725
        %3731 = vmatpush.msra.mxu0 %v3724
        %3732 = vmatpush.msra.mxu0 %v3723
        %3733 = vmatpush.msra.mxu0 %v3722
        %3734 = vmatpush.msra.mxu0 %v3721
        %3735 = vmatpush.msra.mxu0 %v3720
        %3736 = vmatpush.msra.mxu0 %v3719
        %3737 = vmatpush.msra.mxu0 %v3718
        %3738 = vmatpush.msra.mxu0 %v3717
        %3739 = vmatpush.msra.mxu0 %v3716
        %3740 = vmatpush.msra.mxu0 %v3715
        %3741 = vmatpush.msra.mxu0 %v3714
        %3742 = vmatpush.msra.mxu0 %v3713
        %3743 = vmatpush.msra.mxu0 %v3712
        %3744 = vmatmul.f32.gmra.mxu0 %v3696
        %v3745 = vpop.f32.mrf.mxu0
        %v3746 = vadd.f32 0.0, %v3745
        %3747 = vmatmul.f32.gmra.mxu0 %v3697
        %v3748 = vpop.f32.mrf.mxu0
        %v3749 = vadd.f32 0.0, %v3748
        %3750 = vmatmul.f32.gmra.mxu0 %v3698
        %v3751 = vpop.f32.mrf.mxu0
        %v3752 = vadd.f32 0.0, %v3751
        %3753 = vmatmul.f32.gmra.mxu0 %v3699
        %v3754 = vpop.f32.mrf.mxu0
        %v3755 = vadd.f32 0.0, %v3754
        %3756 = vmatmul.f32.gmra.mxu0 %v3700
        %v3757 = vpop.f32.mrf.mxu0
        %v3758 = vadd.f32 0.0, %v3757
        %3759 = vmatmul.f32.gmra.mxu0 %v3701
        %v3760 = vpop.f32.mrf.mxu0
        %v3761 = vadd.f32 0.0, %v3760
        %3762 = vmatmul.f32.gmra.mxu0 %v3702
        %v3763 = vpop.f32.mrf.mxu0
        %v3764 = vadd.f32 0.0, %v3763
        %3765 = vmatmul.f32.gmra.mxu0 %v3703
        %v3766 = vpop.f32.mrf.mxu0
        %v3767 = vadd.f32 0.0, %v3766
        %3768 = vmatmul.f32.gmra.mxu0 %v3704
        %v3769 = vpop.f32.mrf.mxu0
        %v3770 = vadd.f32 0.0, %v3769
        %3771 = vmatmul.f32.gmra.mxu0 %v3705
        %v3772 = vpop.f32.mrf.mxu0
        %v3773 = vadd.f32 0.0, %v3772
        %3774 = vmatmul.f32.gmra.mxu0 %v3706
        %v3775 = vpop.f32.mrf.mxu0
        %v3776 = vadd.f32 0.0, %v3775
        %3777 = vmatmul.f32.gmra.mxu0 %v3707
        %v3778 = vpop.f32.mrf.mxu0
        %v3779 = vadd.f32 0.0, %v3778
        %3780 = vmatmul.f32.gmra.mxu0 %v3708
        %v3781 = vpop.f32.mrf.mxu0
        %v3782 = vadd.f32 0.0, %v3781
        %3783 = vmatmul.f32.gmra.mxu0 %v3709
        %v3784 = vpop.f32.mrf.mxu0
        %v3785 = vadd.f32 0.0, %v3784
        %3786 = vmatmul.f32.gmra.mxu0 %v3710
        %v3787 = vpop.f32.mrf.mxu0
        %v3788 = vadd.f32 0.0, %v3787
        %3789 = vmatmul.f32.gmra.mxu0 %v3711
        %v3790 = vpop.f32.mrf.mxu0
        %v3791 = vadd.f32 0.0, %v3790
        %3792 = vdwg.mxu0
        %v3793 = vadd.f32 %v3679, %v3746
        %v3794 = vadd.f32 %v3680, %v3749
        %v3795 = vadd.f32 %v3681, %v3752
        %v3796 = vadd.f32 %v3682, %v3755
        %v3797 = vadd.f32 %v3683, %v3758
        %v3798 = vadd.f32 %v3684, %v3761
        %v3799 = vadd.f32 %v3685, %v3764
        %v3800 = vadd.f32 %v3686, %v3767
        %v3801 = vadd.f32 %v3687, %v3770
        %v3802 = vadd.f32 %v3688, %v3773
        %v3803 = vadd.f32 %v3689, %v3776
        %v3804 = vadd.f32 %v3690, %v3779
        %v3805 = vadd.f32 %v3691, %v3782
        %v3806 = vadd.f32 %v3692, %v3785
        %v3807 = vadd.f32 %v3693, %v3788
        %v3808 = vadd.f32 %v3694, %v3791
        %s3809 = scalar_lea.vmem [#allocation2], 720
        %v3810 = vld [vmem:[%s3809] sm:$0xff]
        %v3811 = vld [vmem:[%s3809 + $0x8] sm:$0xff]
        %v3812 = vld [vmem:[%s3809 + $0x10] sm:$0xff]
        %v3813 = vld [vmem:[%s3809 + $0x18] sm:$0xff]
        %v3814 = vld [vmem:[%s3809 + $0x20] sm:$0xff]
        %v3815 = vld [vmem:[%s3809 + $0x28] sm:$0xff]
        %v3816 = vld [vmem:[%s3809 + $0x30] sm:$0xff]
        %v3817 = vld [vmem:[%s3809 + $0x38] sm:$0xff]
        %v3818 = vld [vmem:[%s3809 + $0x40] sm:$0xff]
        %v3819 = vld [vmem:[%s3809 + $0x48] sm:$0xff]
        %v3820 = vld [vmem:[%s3809 + $0x50] sm:$0xff]
        %v3821 = vld [vmem:[%s3809 + $0x58] sm:$0xff]
        %v3822 = vld [vmem:[%s3809 + $0x60] sm:$0xff]
        %v3823 = vld [vmem:[%s3809 + $0x68] sm:$0xff]
        %v3824 = vld [vmem:[%s3809 + $0x70] sm:$0xff]
        %v3825 = vld [vmem:[%s3809 + $0x78] sm:$0xff]
        %v3826 = vld [vmem:[%s2776] sm:$0xff]
        %v3827 = vld [vmem:[%s2776 + $0x8] sm:$0xff]
        %v3828 = vld [vmem:[%s2776 + $0x10] sm:$0xff]
        %v3829 = vld [vmem:[%s2776 + $0x18] sm:$0xff]
        %v3830 = vld [vmem:[%s2776 + $0x20] sm:$0xff]
        %v3831 = vld [vmem:[%s2776 + $0x28] sm:$0xff]
        %v3832 = vld [vmem:[%s2776 + $0x30] sm:$0xff]
        %v3833 = vld [vmem:[%s2776 + $0x38] sm:$0xff]
        %v3834 = vld [vmem:[%s2776 + $0x40] sm:$0xff]
        %v3835 = vld [vmem:[%s2776 + $0x48] sm:$0xff]
        %v3836 = vld [vmem:[%s2776 + $0x50] sm:$0xff]
        %v3837 = vld [vmem:[%s2776 + $0x58] sm:$0xff]
        %v3838 = vld [vmem:[%s2776 + $0x60] sm:$0xff]
        %v3839 = vld [vmem:[%s2776 + $0x68] sm:$0xff]
        %v3840 = vld [vmem:[%s2776 + $0x70] sm:$0xff]
        %v3841 = vld [vmem:[%s2776 + $0x78] sm:$0xff]
        %3842 = vmatpush.msra.mxu0 %v3841
        %3843 = vmatpush.msra.mxu0 %v3840
        %3844 = vmatpush.msra.mxu0 %v3839
        %3845 = vmatpush.msra.mxu0 %v3838
        %3846 = vmatpush.msra.mxu0 %v3837
        %3847 = vmatpush.msra.mxu0 %v3836
        %3848 = vmatpush.msra.mxu0 %v3835
        %3849 = vmatpush.msra.mxu0 %v3834
        %3850 = vmatpush.msra.mxu0 %v3833
        %3851 = vmatpush.msra.mxu0 %v3832
        %3852 = vmatpush.msra.mxu0 %v3831
        %3853 = vmatpush.msra.mxu0 %v3830
        %3854 = vmatpush.msra.mxu0 %v3829
        %3855 = vmatpush.msra.mxu0 %v3828
        %3856 = vmatpush.msra.mxu0 %v3827
        %3857 = vmatpush.msra.mxu0 %v3826
        %3858 = vmatmul.f32.gmra.mxu0 %v3810
        %v3859 = vpop.f32.mrf.mxu0
        %v3860 = vadd.f32 0.0, %v3859
        %3861 = vmatmul.f32.gmra.mxu0 %v3811
        %v3862 = vpop.f32.mrf.mxu0
        %v3863 = vadd.f32 0.0, %v3862
        %3864 = vmatmul.f32.gmra.mxu0 %v3812
        %v3865 = vpop.f32.mrf.mxu0
        %v3866 = vadd.f32 0.0, %v3865
        %3867 = vmatmul.f32.gmra.mxu0 %v3813
        %v3868 = vpop.f32.mrf.mxu0
        %v3869 = vadd.f32 0.0, %v3868
        %3870 = vmatmul.f32.gmra.mxu0 %v3814
        %v3871 = vpop.f32.mrf.mxu0
        %v3872 = vadd.f32 0.0, %v3871
        %3873 = vmatmul.f32.gmra.mxu0 %v3815
        %v3874 = vpop.f32.mrf.mxu0
        %v3875 = vadd.f32 0.0, %v3874
        %3876 = vmatmul.f32.gmra.mxu0 %v3816
        %v3877 = vpop.f32.mrf.mxu0
        %v3878 = vadd.f32 0.0, %v3877
        %3879 = vmatmul.f32.gmra.mxu0 %v3817
        %v3880 = vpop.f32.mrf.mxu0
        %v3881 = vadd.f32 0.0, %v3880
        %3882 = vmatmul.f32.gmra.mxu0 %v3818
        %v3883 = vpop.f32.mrf.mxu0
        %v3884 = vadd.f32 0.0, %v3883
        %3885 = vmatmul.f32.gmra.mxu0 %v3819
        %v3886 = vpop.f32.mrf.mxu0
        %v3887 = vadd.f32 0.0, %v3886
        %3888 = vmatmul.f32.gmra.mxu0 %v3820
        %v3889 = vpop.f32.mrf.mxu0
        %v3890 = vadd.f32 0.0, %v3889
        %3891 = vmatmul.f32.gmra.mxu0 %v3821
        %v3892 = vpop.f32.mrf.mxu0
        %v3893 = vadd.f32 0.0, %v3892
        %3894 = vmatmul.f32.gmra.mxu0 %v3822
        %v3895 = vpop.f32.mrf.mxu0
        %v3896 = vadd.f32 0.0, %v3895
        %3897 = vmatmul.f32.gmra.mxu0 %v3823
        %v3898 = vpop.f32.mrf.mxu0
        %v3899 = vadd.f32 0.0, %v3898
        %3900 = vmatmul.f32.gmra.mxu0 %v3824
        %v3901 = vpop.f32.mrf.mxu0
        %v3902 = vadd.f32 0.0, %v3901
        %3903 = vmatmul.f32.gmra.mxu0 %v3825
        %v3904 = vpop.f32.mrf.mxu0
        %v3905 = vadd.f32 0.0, %v3904
        %3906 = vdwg.mxu0
        %v3907 = vadd.f32 %v3793, %v3860
        %v3908 = vadd.f32 %v3794, %v3863
        %v3909 = vadd.f32 %v3795, %v3866
        %v3910 = vadd.f32 %v3796, %v3869
        %v3911 = vadd.f32 %v3797, %v3872
        %v3912 = vadd.f32 %v3798, %v3875
        %v3913 = vadd.f32 %v3799, %v3878
        %v3914 = vadd.f32 %v3800, %v3881
        %v3915 = vadd.f32 %v3801, %v3884
        %v3916 = vadd.f32 %v3802, %v3887
        %v3917 = vadd.f32 %v3803, %v3890
        %v3918 = vadd.f32 %v3804, %v3893
        %v3919 = vadd.f32 %v3805, %v3896
        %v3920 = vadd.f32 %v3806, %v3899
        %v3921 = vadd.f32 %v3807, %v3902
        %v3922 = vadd.f32 %v3808, %v3905
        %s3923 = scalar_lea.vmem [#allocation2], 160
        %v3924 = vld [vmem:[%s3923] sm:$0xff]
        %v3925 = vld [vmem:[%s3923 + $0x8] sm:$0xff]
        %v3926 = vld [vmem:[%s3923 + $0x10] sm:$0xff]
        %v3927 = vld [vmem:[%s3923 + $0x18] sm:$0xff]
        %v3928 = vld [vmem:[%s3923 + $0x20] sm:$0xff]
        %v3929 = vld [vmem:[%s3923 + $0x28] sm:$0xff]
        %v3930 = vld [vmem:[%s3923 + $0x30] sm:$0xff]
        %v3931 = vld [vmem:[%s3923 + $0x38] sm:$0xff]
        %v3932 = vld [vmem:[%s3923 + $0x40] sm:$0xff]
        %v3933 = vld [vmem:[%s3923 + $0x48] sm:$0xff]
        %v3934 = vld [vmem:[%s3923 + $0x50] sm:$0xff]
        %v3935 = vld [vmem:[%s3923 + $0x58] sm:$0xff]
        %v3936 = vld [vmem:[%s3923 + $0x60] sm:$0xff]
        %v3937 = vld [vmem:[%s3923 + $0x68] sm:$0xff]
        %v3938 = vld [vmem:[%s3923 + $0x70] sm:$0xff]
        %v3939 = vld [vmem:[%s3923 + $0x78] sm:$0xff]
        %v3940 = vld [vmem:[%s2891] sm:$0xff]
        %v3941 = vld [vmem:[%s2891 + $0x8] sm:$0xff]
        %v3942 = vld [vmem:[%s2891 + $0x10] sm:$0xff]
        %v3943 = vld [vmem:[%s2891 + $0x18] sm:$0xff]
        %v3944 = vld [vmem:[%s2891 + $0x20] sm:$0xff]
        %v3945 = vld [vmem:[%s2891 + $0x28] sm:$0xff]
        %v3946 = vld [vmem:[%s2891 + $0x30] sm:$0xff]
        %v3947 = vld [vmem:[%s2891 + $0x38] sm:$0xff]
        %v3948 = vld [vmem:[%s2891 + $0x40] sm:$0xff]
        %v3949 = vld [vmem:[%s2891 + $0x48] sm:$0xff]
        %v3950 = vld [vmem:[%s2891 + $0x50] sm:$0xff]
        %v3951 = vld [vmem:[%s2891 + $0x58] sm:$0xff]
        %v3952 = vld [vmem:[%s2891 + $0x60] sm:$0xff]
        %v3953 = vld [vmem:[%s2891 + $0x68] sm:$0xff]
        %v3954 = vld [vmem:[%s2891 + $0x70] sm:$0xff]
        %v3955 = vld [vmem:[%s2891 + $0x78] sm:$0xff]
        %3956 = vmatpush.msra.mxu0 %v3955
        %3957 = vmatpush.msra.mxu0 %v3954
        %3958 = vmatpush.msra.mxu0 %v3953
        %3959 = vmatpush.msra.mxu0 %v3952
        %3960 = vmatpush.msra.mxu0 %v3951
        %3961 = vmatpush.msra.mxu0 %v3950
        %3962 = vmatpush.msra.mxu0 %v3949
        %3963 = vmatpush.msra.mxu0 %v3948
        %3964 = vmatpush.msra.mxu0 %v3947
        %3965 = vmatpush.msra.mxu0 %v3946
        %3966 = vmatpush.msra.mxu0 %v3945
        %3967 = vmatpush.msra.mxu0 %v3944
        %3968 = vmatpush.msra.mxu0 %v3943
        %3969 = vmatpush.msra.mxu0 %v3942
        %3970 = vmatpush.msra.mxu0 %v3941
        %3971 = vmatpush.msra.mxu0 %v3940
        %3972 = vmatmul.f32.gmra.mxu0 %v3924
        %v3973 = vpop.f32.mrf.mxu0
        %v3974 = vadd.f32 0.0, %v3973
        %3975 = vmatmul.f32.gmra.mxu0 %v3925
        %v3976 = vpop.f32.mrf.mxu0
        %v3977 = vadd.f32 0.0, %v3976
        %3978 = vmatmul.f32.gmra.mxu0 %v3926
        %v3979 = vpop.f32.mrf.mxu0
        %v3980 = vadd.f32 0.0, %v3979
        %3981 = vmatmul.f32.gmra.mxu0 %v3927
        %v3982 = vpop.f32.mrf.mxu0
        %v3983 = vadd.f32 0.0, %v3982
        %3984 = vmatmul.f32.gmra.mxu0 %v3928
        %v3985 = vpop.f32.mrf.mxu0
        %v3986 = vadd.f32 0.0, %v3985
        %3987 = vmatmul.f32.gmra.mxu0 %v3929
        %v3988 = vpop.f32.mrf.mxu0
        %v3989 = vadd.f32 0.0, %v3988
        %3990 = vmatmul.f32.gmra.mxu0 %v3930
        %v3991 = vpop.f32.mrf.mxu0
        %v3992 = vadd.f32 0.0, %v3991
        %3993 = vmatmul.f32.gmra.mxu0 %v3931
        %v3994 = vpop.f32.mrf.mxu0
        %v3995 = vadd.f32 0.0, %v3994
        %3996 = vmatmul.f32.gmra.mxu0 %v3932
        %v3997 = vpop.f32.mrf.mxu0
        %v3998 = vadd.f32 0.0, %v3997
        %3999 = vmatmul.f32.gmra.mxu0 %v3933
        %v4000 = vpop.f32.mrf.mxu0
        %v4001 = vadd.f32 0.0, %v4000
        %4002 = vmatmul.f32.gmra.mxu0 %v3934
        %v4003 = vpop.f32.mrf.mxu0
        %v4004 = vadd.f32 0.0, %v4003
        %4005 = vmatmul.f32.gmra.mxu0 %v3935
        %v4006 = vpop.f32.mrf.mxu0
        %v4007 = vadd.f32 0.0, %v4006
        %4008 = vmatmul.f32.gmra.mxu0 %v3936
        %v4009 = vpop.f32.mrf.mxu0
        %v4010 = vadd.f32 0.0, %v4009
        %4011 = vmatmul.f32.gmra.mxu0 %v3937
        %v4012 = vpop.f32.mrf.mxu0
        %v4013 = vadd.f32 0.0, %v4012
        %4014 = vmatmul.f32.gmra.mxu0 %v3938
        %v4015 = vpop.f32.mrf.mxu0
        %v4016 = vadd.f32 0.0, %v4015
        %4017 = vmatmul.f32.gmra.mxu0 %v3939
        %v4018 = vpop.f32.mrf.mxu0
        %v4019 = vadd.f32 0.0, %v4018
        %4020 = vdwg.mxu0
        %v4021 = vadd.f32 %v3907, %v3974
        %v4022 = vadd.f32 %v3908, %v3977
        %v4023 = vadd.f32 %v3909, %v3980
        %v4024 = vadd.f32 %v3910, %v3983
        %v4025 = vadd.f32 %v3911, %v3986
        %v4026 = vadd.f32 %v3912, %v3989
        %v4027 = vadd.f32 %v3913, %v3992
        %v4028 = vadd.f32 %v3914, %v3995
        %v4029 = vadd.f32 %v3915, %v3998
        %v4030 = vadd.f32 %v3916, %v4001
        %v4031 = vadd.f32 %v3917, %v4004
        %v4032 = vadd.f32 %v3918, %v4007
        %v4033 = vadd.f32 %v3919, %v4010
        %v4034 = vadd.f32 %v3920, %v4013
        %v4035 = vadd.f32 %v3921, %v4016
        %v4036 = vadd.f32 %v3922, %v4019
        %s4037 = scalar_lea.vmem [#allocation2], 448
        %v4038 = vld [vmem:[%s4037] sm:$0xff]
        %v4039 = vld [vmem:[%s4037 + $0x8] sm:$0xff]
        %v4040 = vld [vmem:[%s4037 + $0x10] sm:$0xff]
        %v4041 = vld [vmem:[%s4037 + $0x18] sm:$0xff]
        %v4042 = vld [vmem:[%s4037 + $0x20] sm:$0xff]
        %v4043 = vld [vmem:[%s4037 + $0x28] sm:$0xff]
        %v4044 = vld [vmem:[%s4037 + $0x30] sm:$0xff]
        %v4045 = vld [vmem:[%s4037 + $0x38] sm:$0xff]
        %v4046 = vld [vmem:[%s4037 + $0x40] sm:$0xff]
        %v4047 = vld [vmem:[%s4037 + $0x48] sm:$0xff]
        %v4048 = vld [vmem:[%s4037 + $0x50] sm:$0xff]
        %v4049 = vld [vmem:[%s4037 + $0x58] sm:$0xff]
        %v4050 = vld [vmem:[%s4037 + $0x60] sm:$0xff]
        %v4051 = vld [vmem:[%s4037 + $0x68] sm:$0xff]
        %v4052 = vld [vmem:[%s4037 + $0x70] sm:$0xff]
        %v4053 = vld [vmem:[%s4037 + $0x78] sm:$0xff]
        %v4054 = vld [vmem:[%s3006] sm:$0xff]
        %v4055 = vld [vmem:[%s3006 + $0x8] sm:$0xff]
        %v4056 = vld [vmem:[%s3006 + $0x10] sm:$0xff]
        %v4057 = vld [vmem:[%s3006 + $0x18] sm:$0xff]
        %v4058 = vld [vmem:[%s3006 + $0x20] sm:$0xff]
        %v4059 = vld [vmem:[%s3006 + $0x28] sm:$0xff]
        %v4060 = vld [vmem:[%s3006 + $0x30] sm:$0xff]
        %v4061 = vld [vmem:[%s3006 + $0x38] sm:$0xff]
        %v4062 = vld [vmem:[%s3006 + $0x40] sm:$0xff]
        %v4063 = vld [vmem:[%s3006 + $0x48] sm:$0xff]
        %v4064 = vld [vmem:[%s3006 + $0x50] sm:$0xff]
        %v4065 = vld [vmem:[%s3006 + $0x58] sm:$0xff]
        %v4066 = vld [vmem:[%s3006 + $0x60] sm:$0xff]
        %v4067 = vld [vmem:[%s3006 + $0x68] sm:$0xff]
        %v4068 = vld [vmem:[%s3006 + $0x70] sm:$0xff]
        %v4069 = vld [vmem:[%s3006 + $0x78] sm:$0xff]
        %4070 = vmatpush.msra.mxu0 %v4069
        %4071 = vmatpush.msra.mxu0 %v4068
        %4072 = vmatpush.msra.mxu0 %v4067
        %4073 = vmatpush.msra.mxu0 %v4066
        %4074 = vmatpush.msra.mxu0 %v4065
        %4075 = vmatpush.msra.mxu0 %v4064
        %4076 = vmatpush.msra.mxu0 %v4063
        %4077 = vmatpush.msra.mxu0 %v4062
        %4078 = vmatpush.msra.mxu0 %v4061
        %4079 = vmatpush.msra.mxu0 %v4060
        %4080 = vmatpush.msra.mxu0 %v4059
        %4081 = vmatpush.msra.mxu0 %v4058
        %4082 = vmatpush.msra.mxu0 %v4057
        %4083 = vmatpush.msra.mxu0 %v4056
        %4084 = vmatpush.msra.mxu0 %v4055
        %4085 = vmatpush.msra.mxu0 %v4054
        %4086 = vmatmul.f32.gmra.mxu0 %v4038
        %v4087 = vpop.f32.mrf.mxu0
        %v4088 = vadd.f32 0.0, %v4087
        %4089 = vmatmul.f32.gmra.mxu0 %v4039
        %v4090 = vpop.f32.mrf.mxu0
        %v4091 = vadd.f32 0.0, %v4090
        %4092 = vmatmul.f32.gmra.mxu0 %v4040
        %v4093 = vpop.f32.mrf.mxu0
        %v4094 = vadd.f32 0.0, %v4093
        %4095 = vmatmul.f32.gmra.mxu0 %v4041
        %v4096 = vpop.f32.mrf.mxu0
        %v4097 = vadd.f32 0.0, %v4096
        %4098 = vmatmul.f32.gmra.mxu0 %v4042
        %v4099 = vpop.f32.mrf.mxu0
        %v4100 = vadd.f32 0.0, %v4099
        %4101 = vmatmul.f32.gmra.mxu0 %v4043
        %v4102 = vpop.f32.mrf.mxu0
        %v4103 = vadd.f32 0.0, %v4102
        %4104 = vmatmul.f32.gmra.mxu0 %v4044
        %v4105 = vpop.f32.mrf.mxu0
        %v4106 = vadd.f32 0.0, %v4105
        %4107 = vmatmul.f32.gmra.mxu0 %v4045
        %v4108 = vpop.f32.mrf.mxu0
        %v4109 = vadd.f32 0.0, %v4108
        %4110 = vmatmul.f32.gmra.mxu0 %v4046
        %v4111 = vpop.f32.mrf.mxu0
        %v4112 = vadd.f32 0.0, %v4111
        %4113 = vmatmul.f32.gmra.mxu0 %v4047
        %v4114 = vpop.f32.mrf.mxu0
        %v4115 = vadd.f32 0.0, %v4114
        %4116 = vmatmul.f32.gmra.mxu0 %v4048
        %v4117 = vpop.f32.mrf.mxu0
        %v4118 = vadd.f32 0.0, %v4117
        %4119 = vmatmul.f32.gmra.mxu0 %v4049
        %v4120 = vpop.f32.mrf.mxu0
        %v4121 = vadd.f32 0.0, %v4120
        %4122 = vmatmul.f32.gmra.mxu0 %v4050
        %v4123 = vpop.f32.mrf.mxu0
        %v4124 = vadd.f32 0.0, %v4123
        %4125 = vmatmul.f32.gmra.mxu0 %v4051
        %v4126 = vpop.f32.mrf.mxu0
        %v4127 = vadd.f32 0.0, %v4126
        %4128 = vmatmul.f32.gmra.mxu0 %v4052
        %v4129 = vpop.f32.mrf.mxu0
        %v4130 = vadd.f32 0.0, %v4129
        %4131 = vmatmul.f32.gmra.mxu0 %v4053
        %v4132 = vpop.f32.mrf.mxu0
        %v4133 = vadd.f32 0.0, %v4132
        %4134 = vdwg.mxu0
        %v4135 = vadd.f32 %v4021, %v4088
        %v4136 = vadd.f32 %v4022, %v4091
        %v4137 = vadd.f32 %v4023, %v4094
        %v4138 = vadd.f32 %v4024, %v4097
        %v4139 = vadd.f32 %v4025, %v4100
        %v4140 = vadd.f32 %v4026, %v4103
        %v4141 = vadd.f32 %v4027, %v4106
        %v4142 = vadd.f32 %v4028, %v4109
        %v4143 = vadd.f32 %v4029, %v4112
        %v4144 = vadd.f32 %v4030, %v4115
        %v4145 = vadd.f32 %v4031, %v4118
        %v4146 = vadd.f32 %v4032, %v4121
        %v4147 = vadd.f32 %v4033, %v4124
        %v4148 = vadd.f32 %v4034, %v4127
        %v4149 = vadd.f32 %v4035, %v4130
        %v4150 = vadd.f32 %v4036, %v4133
        %s4151 = scalar_lea.vmem [#allocation2], 736
        %v4152 = vld [vmem:[%s4151] sm:$0xff]
        %v4153 = vld [vmem:[%s4151 + $0x8] sm:$0xff]
        %v4154 = vld [vmem:[%s4151 + $0x10] sm:$0xff]
        %v4155 = vld [vmem:[%s4151 + $0x18] sm:$0xff]
        %v4156 = vld [vmem:[%s4151 + $0x20] sm:$0xff]
        %v4157 = vld [vmem:[%s4151 + $0x28] sm:$0xff]
        %v4158 = vld [vmem:[%s4151 + $0x30] sm:$0xff]
        %v4159 = vld [vmem:[%s4151 + $0x38] sm:$0xff]
        %v4160 = vld [vmem:[%s4151 + $0x40] sm:$0xff]
        %v4161 = vld [vmem:[%s4151 + $0x48] sm:$0xff]
        %v4162 = vld [vmem:[%s4151 + $0x50] sm:$0xff]
        %v4163 = vld [vmem:[%s4151 + $0x58] sm:$0xff]
        %v4164 = vld [vmem:[%s4151 + $0x60] sm:$0xff]
        %v4165 = vld [vmem:[%s4151 + $0x68] sm:$0xff]
        %v4166 = vld [vmem:[%s4151 + $0x70] sm:$0xff]
        %v4167 = vld [vmem:[%s4151 + $0x78] sm:$0xff]
        %v4168 = vld [vmem:[%s3121] sm:$0xff]
        %v4169 = vld [vmem:[%s3121 + $0x8] sm:$0xff]
        %v4170 = vld [vmem:[%s3121 + $0x10] sm:$0xff]
        %v4171 = vld [vmem:[%s3121 + $0x18] sm:$0xff]
        %v4172 = vld [vmem:[%s3121 + $0x20] sm:$0xff]
        %v4173 = vld [vmem:[%s3121 + $0x28] sm:$0xff]
        %v4174 = vld [vmem:[%s3121 + $0x30] sm:$0xff]
        %v4175 = vld [vmem:[%s3121 + $0x38] sm:$0xff]
        %v4176 = vld [vmem:[%s3121 + $0x40] sm:$0xff]
        %v4177 = vld [vmem:[%s3121 + $0x48] sm:$0xff]
        %v4178 = vld [vmem:[%s3121 + $0x50] sm:$0xff]
        %v4179 = vld [vmem:[%s3121 + $0x58] sm:$0xff]
        %v4180 = vld [vmem:[%s3121 + $0x60] sm:$0xff]
        %v4181 = vld [vmem:[%s3121 + $0x68] sm:$0xff]
        %v4182 = vld [vmem:[%s3121 + $0x70] sm:$0xff]
        %v4183 = vld [vmem:[%s3121 + $0x78] sm:$0xff]
        %4184 = vmatpush.msra.mxu0 %v4183
        %4185 = vmatpush.msra.mxu0 %v4182
        %4186 = vmatpush.msra.mxu0 %v4181
        %4187 = vmatpush.msra.mxu0 %v4180
        %4188 = vmatpush.msra.mxu0 %v4179
        %4189 = vmatpush.msra.mxu0 %v4178
        %4190 = vmatpush.msra.mxu0 %v4177
        %4191 = vmatpush.msra.mxu0 %v4176
        %4192 = vmatpush.msra.mxu0 %v4175
        %4193 = vmatpush.msra.mxu0 %v4174
        %4194 = vmatpush.msra.mxu0 %v4173
        %4195 = vmatpush.msra.mxu0 %v4172
        %4196 = vmatpush.msra.mxu0 %v4171
        %4197 = vmatpush.msra.mxu0 %v4170
        %4198 = vmatpush.msra.mxu0 %v4169
        %4199 = vmatpush.msra.mxu0 %v4168
        %4200 = vmatmul.f32.gmra.mxu0 %v4152
        %v4201 = vpop.f32.mrf.mxu0
        %v4202 = vadd.f32 0.0, %v4201
        %4203 = vmatmul.f32.gmra.mxu0 %v4153
        %v4204 = vpop.f32.mrf.mxu0
        %v4205 = vadd.f32 0.0, %v4204
        %4206 = vmatmul.f32.gmra.mxu0 %v4154
        %v4207 = vpop.f32.mrf.mxu0
        %v4208 = vadd.f32 0.0, %v4207
        %4209 = vmatmul.f32.gmra.mxu0 %v4155
        %v4210 = vpop.f32.mrf.mxu0
        %v4211 = vadd.f32 0.0, %v4210
        %4212 = vmatmul.f32.gmra.mxu0 %v4156
        %v4213 = vpop.f32.mrf.mxu0
        %v4214 = vadd.f32 0.0, %v4213
        %4215 = vmatmul.f32.gmra.mxu0 %v4157
        %v4216 = vpop.f32.mrf.mxu0
        %v4217 = vadd.f32 0.0, %v4216
        %4218 = vmatmul.f32.gmra.mxu0 %v4158
        %v4219 = vpop.f32.mrf.mxu0
        %v4220 = vadd.f32 0.0, %v4219
        %4221 = vmatmul.f32.gmra.mxu0 %v4159
        %v4222 = vpop.f32.mrf.mxu0
        %v4223 = vadd.f32 0.0, %v4222
        %4224 = vmatmul.f32.gmra.mxu0 %v4160
        %v4225 = vpop.f32.mrf.mxu0
        %v4226 = vadd.f32 0.0, %v4225
        %4227 = vmatmul.f32.gmra.mxu0 %v4161
        %v4228 = vpop.f32.mrf.mxu0
        %v4229 = vadd.f32 0.0, %v4228
        %4230 = vmatmul.f32.gmra.mxu0 %v4162
        %v4231 = vpop.f32.mrf.mxu0
        %v4232 = vadd.f32 0.0, %v4231
        %4233 = vmatmul.f32.gmra.mxu0 %v4163
        %v4234 = vpop.f32.mrf.mxu0
        %v4235 = vadd.f32 0.0, %v4234
        %4236 = vmatmul.f32.gmra.mxu0 %v4164
        %v4237 = vpop.f32.mrf.mxu0
        %v4238 = vadd.f32 0.0, %v4237
        %4239 = vmatmul.f32.gmra.mxu0 %v4165
        %v4240 = vpop.f32.mrf.mxu0
        %v4241 = vadd.f32 0.0, %v4240
        %4242 = vmatmul.f32.gmra.mxu0 %v4166
        %v4243 = vpop.f32.mrf.mxu0
        %v4244 = vadd.f32 0.0, %v4243
        %4245 = vmatmul.f32.gmra.mxu0 %v4167
        %v4246 = vpop.f32.mrf.mxu0
        %v4247 = vadd.f32 0.0, %v4246
        %4248 = vdwg.mxu0
        %v4249 = vadd.f32 %v4135, %v4202
        %v4250 = vadd.f32 %v4136, %v4205
        %v4251 = vadd.f32 %v4137, %v4208
        %v4252 = vadd.f32 %v4138, %v4211
        %v4253 = vadd.f32 %v4139, %v4214
        %v4254 = vadd.f32 %v4140, %v4217
        %v4255 = vadd.f32 %v4141, %v4220
        %v4256 = vadd.f32 %v4142, %v4223
        %v4257 = vadd.f32 %v4143, %v4226
        %v4258 = vadd.f32 %v4144, %v4229
        %v4259 = vadd.f32 %v4145, %v4232
        %v4260 = vadd.f32 %v4146, %v4235
        %v4261 = vadd.f32 %v4147, %v4238
        %v4262 = vadd.f32 %v4148, %v4241
        %v4263 = vadd.f32 %v4149, %v4244
        %v4264 = vadd.f32 %v4150, %v4247
        %v4265 = vld [vmem:[%s4] sm:$0x1]
        %v4267 = vperm.slane %v4265, 0
        %v4269 = vadd.f32 %v4249, %v4267
        %v4270 = vadd.f32 %v4250, %v4267
        %v4271 = vadd.f32 %v4251, %v4267
        %v4272 = vadd.f32 %v4252, %v4267
        %v4273 = vadd.f32 %v4253, %v4267
        %v4274 = vadd.f32 %v4254, %v4267
        %v4275 = vadd.f32 %v4255, %v4267
        %v4276 = vadd.f32 %v4256, %v4267
        %v4277 = vadd.f32 %v4257, %v4267
        %v4278 = vadd.f32 %v4258, %v4267
        %v4279 = vadd.f32 %v4259, %v4267
        %v4280 = vadd.f32 %v4260, %v4267
        %v4281 = vadd.f32 %v4261, %v4267
        %v4282 = vadd.f32 %v4262, %v4267
        %v4283 = vadd.f32 %v4263, %v4267
        %v4284 = vadd.f32 %v4264, %v4267
        %v4285 = vmax.f32 %v4269, 0.0
        %v4286 = vmax.f32 %v4270, 0.0
        %v4287 = vmax.f32 %v4271, 0.0
        %v4288 = vmax.f32 %v4272, 0.0
        %v4289 = vmax.f32 %v4273, 0.0
        %v4290 = vmax.f32 %v4274, 0.0
        %v4291 = vmax.f32 %v4275, 0.0
        %v4292 = vmax.f32 %v4276, 0.0
        %v4293 = vmax.f32 %v4277, 0.0
        %v4294 = vmax.f32 %v4278, 0.0
        %v4295 = vmax.f32 %v4279, 0.0
        %v4296 = vmax.f32 %v4280, 0.0
        %v4297 = vmax.f32 %v4281, 0.0
        %v4298 = vmax.f32 %v4282, 0.0
        %v4299 = vmax.f32 %v4283, 0.0
        %v4300 = vmax.f32 %v4284, 0.0
        %s4301 = scalar_lea.vmem %s241, 128
        %4302 = vst.msk [vmem:[%s4301] sm:$0xff] %vm1589, %v4285
        %4303 = vst.msk [vmem:[%s4301 + $0x8] sm:$0xff] %vm1589, %v4286
        %4304 = vst.msk [vmem:[%s4301 + $0x10] sm:$0xff] %vm1589, %v4287
        %4305 = vst.msk [vmem:[%s4301 + $0x18] sm:$0xff] %vm1589, %v4288
        %4306 = vst.msk [vmem:[%s4301 + $0x20] sm:$0xff] %vm1589, %v4289
        %4307 = vst.msk [vmem:[%s4301 + $0x28] sm:$0xff] %vm1589, %v4290
        %4308 = vst.msk [vmem:[%s4301 + $0x30] sm:$0xff] %vm1589, %v4291
        %4309 = vst.msk [vmem:[%s4301 + $0x38] sm:$0xff] %vm1589, %v4292
        %4310 = vst.msk [vmem:[%s4301 + $0x40] sm:$0xff] %vm1589, %v4293
        %4311 = vst.msk [vmem:[%s4301 + $0x48] sm:$0xff] %vm1589, %v4294
        %4312 = vst.msk [vmem:[%s4301 + $0x50] sm:$0xff] %vm1589, %v4295
        %4313 = vst.msk [vmem:[%s4301 + $0x58] sm:$0xff] %vm1589, %v4296
        %4314 = vst.msk [vmem:[%s4301 + $0x60] sm:$0xff] %vm1589, %v4297
        %4315 = vst.msk [vmem:[%s4301 + $0x68] sm:$0xff] %vm1589, %v4298
        %4316 = vst.msk [vmem:[%s4301 + $0x70] sm:$0xff] %vm1589, %v4299
        %4317 = vst.msk [vmem:[%s4301 + $0x78] sm:$0xff] %vm1589, %v4300
        %p4318 = scmp.lt.s32.totalorder %s17, 1
        %s4319 = scalar_select %p4318, %s17, 1
        %s4320 = smul.addr %s4319, 32
        %s4321 = smul.addr %s4320, 8
        %s4322 = scalar_lea.vmem %s5, %s4321
        // Predicated region
        $region45: #{tpu_custom_call.1} parent=39 // pred_check
          %p4323 = pneg %p145
        $region46: #{tpu_custom_call.1} parent=39 // pred_check_branch
          %4325 = sbr.rel (%p4323) target = $region48
        $region47: #{tpu_custom_call.1} parent=39 // pred_region
          _
        $region48: #{tpu_custom_call.1} parent=39 // pred_fallthru
          _
      $region40: #{tpu_custom_call.1} parent=5 // pred_fallthru
        _
      %p4326 = scmp.le.s32.totalorder 2, %s12
      // Predicated region
      $region49: #{tpu_custom_call.1} parent=5 // pred_check
        %p4327 = pneg %p4326
      $region50: #{tpu_custom_call.1} parent=5 // pred_check_branch
        %4329 = sbr.rel (%p4327) target = $region52
      $region51: #{tpu_custom_call.1} parent=5 // pred_region
        %s4330 = ssub.s32 %s12, 2
        // Predicated region
        $region53: #{tpu_custom_call.1} parent=51 // pred_check
          %p4331 = pneg %p151
        $region54: #{tpu_custom_call.1} parent=51 // pred_check_branch
          %4333 = sbr.rel (%p4331) target = $region56
        $region55: #{tpu_custom_call.1} parent=51 // pred_region
          %p4334 = scmp.lt.s32.totalorder %s18, 1
          %s4335 = scalar_select %p4334, %s18, 1
          %s4336 = smul.addr %s4335, 32
          %s4337 = smul.addr %s4336, 8
          %s4338 = scalar_lea.vmem %s5, %s4337
        $region56: #{tpu_custom_call.1} parent=51 // pred_fallthru
          _
      $region52: #{tpu_custom_call.1} parent=5 // pred_fallthru
        _
    $region6: #{tpu_custom_call.1} parent=1 // loop_footer
      %s16 = sadd.s32 1, %s12
    $region7: #{tpu_custom_call.1} parent=1 // loop_footer_branch
      %11 = sbr.rel target = $region3
    $region8: #{tpu_custom_call.1} parent=1 // loop_exit
      _
    %4339 = vsyncpa [#allocation4], 1
    %s4340 = scalar_lea.sflag [#allocation4], 1
    %4341 = vsyncpa %s4340, 1

</llo_original>
